<compile_context>
chip_gen: v7x
topology: tpu7x:2x2x1
jax: 0.10.0
libtpu: 0.0.40
codegen_flags: <defaults>
</compile_context>

<pallas_src>
import math

import jax
import jax.numpy as jnp
from jax import lax
from jax.experimental import pallas as pl
from jax.experimental.pallas import tpu as pltpu


# Merged-gate layout inside the kernel: [i | f | o | g]
# (sigmoid block first, tanh block last).  PyTorch source order is [i, f, g, o].
_GATE_DST = (0, 1, 3, 2)  # destination slot for source gates [i, f, g, o]


# ----------------------------------------------------------------------------
# Fused kernel
# ----------------------------------------------------------------------------
def _make_selfmm_kernel(HA, HV, T_a, T_v, TB):
    """Fused SELF_MM kernel for static hidden sizes / seq lengths / batch block."""
    HH = HA + HV           # merged LSTM state width (audio lanes 0:HA, video HA:HH)
    G = 4 * HH             # merged gate width, [i | f | o | g]
    T = max(T_a, T_v)
    Tmin = min(T_a, T_v)

    def kernel(cls_ref, x_a_ref, x_v_ref, len_a_ref, len_v_ref,
               w_ih_a_ref, w_ih_v_ref, w_hh_ref, b_a_ref, b_v_ref,
               w_lin_ref, b_lin_ref,
               w_t1_ref, w_av1_ref, b1_ref, w2_ref, b2_ref,
               out_ref, zx_ref):
        D_a = x_a_ref.shape[2]
        D_v = x_v_ref.shape[2]

        # ---- hoisted input-to-hidden matmuls (one MXU pass per modality),
        #      bias folded in, staged time-major into the VMEM zx scratch so the
        #      recurrence reads one contiguous (TB, G) tile per step.
        xa = x_a_ref[...].astype(jnp.float32).reshape(T_a * TB, D_a)
        xv = x_v_ref[...].astype(jnp.float32).reshape(T_v * TB, D_v)
        za = (jnp.dot(xa, w_ih_a_ref[...], preferred_element_type=jnp.float32)
              + b_a_ref[...]).reshape(T_a, TB, G)
        zv = (jnp.dot(xv, w_ih_v_ref[...], preferred_element_type=jnp.float32)
              + b_v_ref[...]).reshape(T_v, TB, G)

        # pre-summed input term: z_t = h @ W_hh + zx[t]   (single add per step)
        zx_ref[0:Tmin] = (za[0:Tmin] + zv[0:Tmin]).astype(zx_ref.dtype)
        if T_a > Tmin:
            zx_ref[Tmin:T_a] = za[Tmin:].astype(zx_ref.dtype)
        if T_v > Tmin:
            zx_ref[Tmin:T_v] = zv[Tmin:].astype(zx_ref.dtype)

        # per-lane freeze threshold (computed once, outside the loop): the first
        # HA state lanes follow audio lengths, the rest follow video lengths.
        lane = lax.broadcasted_iota(jnp.int32, (TB, HH), 1)
        lens_wide = jnp.where(lane < HA,
                              jnp.broadcast_to(len_a_ref[...], (TB, HH)),
                              jnp.broadcast_to(len_v_ref[...], (TB, HH)))

        # ---- merged LSTM recurrence (audio + video block-diagonal, one loop)
        def step(t, carry):
            h, c = carry
            z = (jnp.dot(h, w_hh_ref[...], preferred_element_type=jnp.float32)
                 + zx_ref[t].astype(jnp.float32))               # (TB, G)
            sig = jax.nn.sigmoid(z[:, :3 * HH])                 # i | f | o only
            g = jnp.tanh(z[:, 3 * HH:])                         # g only
            i = sig[:, 0 * HH:1 * HH]
            f = sig[:, 1 * HH:2 * HH]
            o = sig[:, 2 * HH:3 * HH]
            c_new = f * c + i * g
            h_new = o * jnp.tanh(c_new)
            # pack_padded_sequence final-state semantics: freeze once t >= len
            valid = t < lens_wide
            return (jnp.where(valid, h_new, h), jnp.where(valid, c_new, c))

        h0 = jnp.zeros((TB, HH), jnp.float32)
        c0 = jnp.zeros((TB, HH), jnp.float32)
        h, _ = lax.fori_loop(0, T, step, (h0, c0), unroll=min(T, 8))

        # ---- AuViSubNet.linear_1 for audio & video (block-diagonal merged)
        y_av = (jnp.dot(h, w_lin_ref[...], preferred_element_type=jnp.float32)
                + b_lin_ref[...])

        # ---- post_{text,audio,video}_layer_1 (ReLU), merged lane-dense slab
        h1 = jnp.maximum(
            jnp.dot(cls_ref[...], w_t1_ref[...], preferred_element_type=jnp.float32)
            + jnp.dot(y_av, w_av1_ref[...], preferred_element_type=jnp.float32)
            + b1_ref[...], 0.0)
        # ---- post_{text,audio,video}_layer_2 (ReLU), merged lane-dense slab
        h2 = jnp.maximum(
            jnp.dot(h1, w2_ref[...], preferred_element_type=jnp.float32)
            + b2_ref[...], 0.0)

        out_ref[...] = h2  # (TB, OUT) lane-dense, unmasked lane store

    return kernel


# ----------------------------------------------------------------------------
# Wrapper
# ----------------------------------------------------------------------------
def self_mm_forward(fused, senti_modal_list,
                    text=None, audio=None, audio_lengths=None,
                    video=None, video_lengths=None, *, batch_block=8):
    """text: BERT sequence output (B, L, text_out); audio/video: (B, T, D) batch-first.

    Returns (text_h, audio_h, video_h); entries not in senti_modal_list are None.
    The fused kernel always consumes all three modality inputs.
    """
    HA, HV = fused["HA"], fused["HV"]
    OUT = fused["OUT"]
    HH = HA + HV
    G = 4 * HH

    cls = text[:, 0, :].astype(jnp.float32)          # text_model(text)[:, 0, :]
    B0 = cls.shape[0]
    T_a, D_a = audio.shape[1], audio.shape[2]
    T_v, D_v = video.shape[1], video.shape[2]
    T = max(T_a, T_v)

    # Clamp lengths to the padded seq length (pack_padded_sequence would reject
    # larger values anyway) so the in-kernel freeze mask is always well defined.
    # Note: length 0 yields h = 0 (PyTorch itself requires lengths >= 1).
    len_a = jnp.clip(audio_lengths.astype(jnp.int32), 0, T_a).reshape(B0, 1)
    len_v = jnp.clip(video_lengths.astype(jnp.int32), 0, T_v).reshape(B0, 1)

    # Pad batch to the sublane / batch-block granularity.  Padded rows get
    # length 0 (state stays frozen at zero) and are sliced off at the end.
    TB = batch_block
    B = ((B0 + TB - 1) // TB) * TB
    pad = B - B0
    if pad:
        cls = jnp.pad(cls, ((0, pad), (0, 0)))
        audio = jnp.pad(audio, ((0, pad), (0, 0), (0, 0)))
        video = jnp.pad(video, ((0, pad), (0, 0), (0, 0)))
        len_a = jnp.pad(len_a, ((0, pad), (0, 0)))
        len_v = jnp.pad(len_v, ((0, pad), (0, 0)))

    # Big activation inputs travel HBM->VMEM as bf16 (halved DMA) and are laid
    # out time-major so the in-kernel reshape to (T*TB, D) is tile-aligned.
    x_a = jnp.transpose(audio, (1, 0, 2)).astype(jnp.bfloat16)
    x_v = jnp.transpose(video, (1, 0, 2)).astype(jnp.bfloat16)

    kernel = _make_selfmm_kernel(HA, HV, T_a, T_v, TB)

    weights = [fused["w_ih_a"], fused["w_ih_v"], fused["w_hh"],
               fused["b_a"], fused["b_v"], fused["w_lin"], fused["b_lin"],
               fused["w_t1"], fused["w_av1"], fused["b1"],
               fused["w2"], fused["b2"]]

    in_specs = [
        pl.BlockSpec((TB, cls.shape[1]), lambda i: (i, 0)),     # cls
        pl.BlockSpec((T_a, TB, D_a), lambda i: (0, i, 0)),      # audio (time-major)
        pl.BlockSpec((T_v, TB, D_v), lambda i: (0, i, 0)),      # video (time-major)
        pl.BlockSpec((TB, 1), lambda i: (i, 0)),                # audio lengths
        pl.BlockSpec((TB, 1), lambda i: (i, 0)),                # video lengths
    ] + [pl.BlockSpec(w.shape, lambda i, _nd=w.ndim: (0,) * _nd) for w in weights]
    out_spec = pl.BlockSpec((TB, OUT), lambda i: (i, 0))

    # bf16 zx scratch: halves the largest VMEM resident at production T (v7x).
    zx_dtype = jnp.bfloat16
    scratch_shapes = [pltpu.VMEM((T, TB, G), zx_dtype)]

    # Generation-aware VMEM limit instead of a hard-coded 32 MiB.
    def nbytes(shape, dtype):
        return math.prod(shape) * jnp.dtype(dtype).itemsize
    blocked = (nbytes((TB, cls.shape[1]), jnp.float32)
               + nbytes((T_a, TB, D_a), jnp.bfloat16)
               + nbytes((T_v, TB, D_v), jnp.bfloat16)
               + 2 * nbytes((TB, 1), jnp.int32)
               + nbytes((TB, OUT), jnp.float32))
    resident = (sum(int(w.size) * w.dtype.itemsize for w in weights)
                + nbytes((T, TB, G), zx_dtype))
    try:
        vmem_cap = int(pltpu.get_tpu_info().vmem_capacity_bytes)
    except Exception:   # conservative fallback (v7x: 64 MiB per TensorCore)
        vmem_cap = 64 << 20
    vmem_limit = int(min(max(2 * (blocked + resident) + (4 << 20), 32 << 20),
                         vmem_cap * 3 // 4))

    out = pl.pallas_call(
        kernel,
        out_shape=jax.ShapeDtypeStruct((B, OUT), jnp.float32),
        grid=(B // TB,),
        in_specs=in_specs,
        out_specs=out_spec,
        scratch_shapes=scratch_shapes,
        compiler_params=pltpu.CompilerParams(
            dimension_semantics=("parallel",),
            vmem_limit_bytes=vmem_limit),
    )(cls, x_a, x_v, len_a, len_v, *weights)

    out = out[:B0]
    Pt, Pa, Pv = fused["Pt"], fused["Pa"], fused["Pv"]
    text_h = out[:, :Pt] if "text" in senti_modal_list else None
    audio_h = out[:, Pt:Pt + Pa] if "audio" in senti_modal_list else None
    video_h = out[:, Pt + Pa:Pt + Pa + Pv] if "video" in senti_modal_list else None
    return text_h, audio_h, video_h


# ----------------------------------------------------------------------------
# Parameter construction (per-module layout) and offline fusing
# ----------------------------------------------------------------------------
def _uniform(key, shape, scale=0.1):
    return jax.random.uniform(key, shape, jnp.float32, -scale, scale)


def init_auvi_params(key, in_size, hidden, out_size, post_dim):
    ks = jax.random.split(key, 10)
    return {
        # LSTM (PyTorch gate order i, f, g, o), stored (in, 4H)/(H, 4H); b = b_ih+b_hh
        "w_ih": _uniform(ks[0], (in_size, 4 * hidden)),
        "w_hh": _uniform(ks[1], (hidden, 4 * hidden)),
        "b": _uniform(ks[2], (1, 4 * hidden)),
        # AuViSubNet.linear_1
        "w_lin": _uniform(ks[3], (hidden, out_size)),
        "b_lin": _uniform(ks[4], (1, out_size)),
        # post_<modality>_layer_1/2
        "w_p1": _uniform(ks[5], (out_size, post_dim)),
        "b_p1": _uniform(ks[6], (1, post_dim)),
        "w_p2": _uniform(ks[7], (post_dim, post_dim)),
        "b_p2": _uniform(ks[8], (1, post_dim)),
    }


def init_text_params(key, text_out, post_dim):
    ks = jax.random.split(key, 4)
    return {
        "w_p1": _uniform(ks[0], (text_out, post_dim)),
        "b_p1": _uniform(ks[1], (1, post_dim)),
        "w_p2": _uniform(ks[2], (post_dim, post_dim)),
        "b_p2": _uniform(ks[3], (1, post_dim)),
    }


def build_fused_params(params, dims):
    """Merge per-module params into the fused block-diagonal / lane-dense layout.

    Done once offline (weights are static).  Gates are reordered to [i|f|o|g]
    so the kernel applies sigmoid to 3/4 of the width and tanh to 1/4 only.
    """
    HA, HV = dims["a_hidden"], dims["v_hidden"]
    OA, OV = dims["audio_out"], dims["video_out"]
    Pt, Pa, Pv = dims["post_text_dim"], dims["post_audio_dim"], dims["post_video_dim"]
    Tt = dims["text_out"]
    HH = HA + HV
    G = 4 * HH
    OUT = max(128, ((Pt + Pa + Pv + 127) // 128) * 128)   # lane-dense output slab

    def place_gates(w, H, col_off):
        # w: (rows, 4H) in PyTorch gate order [i|f|g|o] -> (rows, 4*HH) in the
        # merged kernel order [i|f|o|g]; each gate block lands at columns
        # [dst*HH + col_off : dst*HH + col_off + H].
        rows = w.shape[0]
        out = jnp.zeros((rows, G), jnp.float32)
        for src, dst in enumerate(_GATE_DST):
            out = out.at[:, dst * HH + col_off: dst * HH + col_off + H].set(
                w[:, src * H:(src + 1) * H])
        return out

    pa, pv, pt = params["audio"], params["video"], params["text"]

    w_ih_a = place_gates(pa["w_ih"], HA, 0)      # (D_a, G), zero in video columns
    w_ih_v = place_gates(pv["w_ih"], HV, HA)     # (D_v, G), zero in audio columns
    b_a = place_gates(pa["b"], HA, 0)            # (1, G)
    b_v = place_gates(pv["b"], HV, HA)           # (1, G)

    w_hh = jnp.zeros((HH, G), jnp.float32)
    w_hh = w_hh.at[:HA, :].set(place_gates(pa["w_hh"], HA, 0))
    w_hh = w_hh.at[HA:, :].set(place_gates(pv["w_hh"], HV, HA))

    # AuViSubNet.linear_1 (no activation): block-diag (HH, OA+OV)
    w_lin = jnp.zeros((HH, OA + OV), jnp.float32)
    w_lin = w_lin.at[:HA, :OA].set(pa["w_lin"])
    w_lin = w_lin.at[HA:, OA:].set(pv["w_lin"])
    b_lin = jnp.concatenate([pa["b_lin"], pv["b_lin"]], axis=1)

    # post layer 1: text cols [0:Pt], audio [Pt:Pt+Pa], video [Pt+Pa:Pt+Pa+Pv]
    w_t1 = jnp.zeros((Tt, OUT), jnp.float32).at[:, :Pt].set(pt["w_p1"])
    w_av1 = jnp.zeros((OA + OV, OUT), jnp.float32)
    w_av1 = w_av1.at[:OA, Pt:Pt + Pa].set(pa["w_p1"])
    w_av1 = w_av1.at[OA:, Pt + Pa:Pt + Pa + Pv].set(pv["w_p1"])
    b1 = jnp.zeros((1, OUT), jnp.float32)
    b1 = b1.at[:, :Pt].set(pt["b_p1"])
    b1 = b1.at[:, Pt:Pt + Pa].set(pa["b_p1"])
    b1 = b1.at[:, Pt + Pa:Pt + Pa + Pv].set(pv["b_p1"])

    # post layer 2: block-diag (OUT, OUT), padded region stays zero
    w2 = jnp.zeros((OUT, OUT), jnp.float32)
    w2 = w2.at[:Pt, :Pt].set(pt["w_p2"])
    w2 = w2.at[Pt:Pt + Pa, Pt:Pt + Pa].set(pa["w_p2"])
    w2 = w2.at[Pt + Pa:Pt + Pa + Pv, Pt + Pa:Pt + Pa + Pv].set(pv["w_p2"])
    b2 = jnp.zeros((1, OUT), jnp.float32)
    b2 = b2.at[:, :Pt].set(pt["b_p2"])
    b2 = b2.at[:, Pt:Pt + Pa].set(pa["b_p2"])
    b2 = b2.at[:, Pt + Pa:Pt + Pa + Pv].set(pv["b_p2"])

    return {
        "HA": HA, "HV": HV, "Pt": Pt, "Pa": Pa, "Pv": Pv, "OUT": OUT,
        "w_ih_a": w_ih_a, "w_ih_v": w_ih_v, "w_hh": w_hh, "b_a": b_a, "b_v": b_v,
        "w_lin": w_lin, "b_lin": b_lin,
        "w_t1": w_t1, "w_av1": w_av1, "b1": b1, "w2": w2, "b2": b2,
    }


# ----------------------------------------------------------------------------
# Pure-JAX reference (unfused, f32) for correctness checking
# ----------------------------------------------------------------------------
def reference_forward(params, text, audio, audio_lengths, video, video_lengths):
    pt, pa, pv = params["text"], params["audio"], params["video"]
    cls = text[:, 0, :]
    t_h = jnp.maximum(cls @ pt["w_p1"] + pt["b_p1"], 0.0)
    t_h = jnp.maximum(t_h @ pt["w_p2"] + pt["b_p2"], 0.0)

    def auvi(x, lengths, p):
        B, T, _ = x.shape
        H = p["w_hh"].shape[0]
        h = jnp.zeros((B, H), jnp.float32)
        c = jnp.zeros((B, H), jnp.float32)
        lens = lengths.reshape(B, 1)
        for t in range(T):
            z = x[:, t, :] @ p["w_ih"] + h @ p["w_hh"] + p["b"]
            i = jax.nn.sigmoid(z[:, :H])
            f = jax.nn.sigmoid(z[:, H:2 * H])
            g = jnp.tanh(z[:, 2 * H:3 * H])
            o = jax.nn.sigmoid(z[:, 3 * H:])
            c_new = f * c + i * g
            h_new = o * jnp.tanh(c_new)
            valid = t < lens
            h = jnp.where(valid, h_new, h)
            c = jnp.where(valid, c_new, c)
        y = h @ p["w_lin"] + p["b_lin"]
        y = jnp.maximum(y @ p["w_p1"] + p["b_p1"], 0.0)
        y = jnp.maximum(y @ p["w_p2"] + p["b_p2"], 0.0)
        return y

    return t_h, auvi(audio, audio_lengths, pa), auvi(video, video_lengths, pv)


# ----------------------------------------------------------------------------
if __name__ == "__main__":
    # Small synthetic config (SELFMMConfig stand-in).  B=10 exercises batch
    # padding (to 16) and a 2-program parallel batch grid.
    B = 10
    T_a, T_v, L_txt = 8, 6, 8
    dims = dict(audio_in=12, video_in=20, a_hidden=32, v_hidden=32,
                audio_out=16, video_out=16, text_out=32,
                post_text_dim=32, post_audio_dim=32, post_video_dim=32)

    root = jax.random.PRNGKey(0)
    k_pa, k_pv, k_pt, k_a, k_v, k_t = jax.random.split(root, 6)

    params = {
        "audio": init_auvi_params(k_pa, dims["audio_in"], dims["a_hidden"],
                                  dims["audio_out"], dims["post_audio_dim"]),
        "video": init_auvi_params(k_pv, dims["video_in"], dims["v_hidden"],
                                  dims["video_out"], dims["post_video_dim"]),
        "text": init_text_params(k_pt, dims["text_out"], dims["post_text_dim"]),
    }
    fused = build_fused_params(params, dims)

    audio = jax.random.normal(k_a, (B, T_a, dims["audio_in"]), jnp.float32)
    video = jax.random.normal(k_v, (B, T_v, dims["video_in"]), jnp.float32)
    # "text" = precomputed BERT sequence output (B, L, text_out).
    # TODO(synk): BertTextEncoder itself is not re-implemented.
    text = jax.random.normal(k_t, (B, L_txt, dims["text_out"]), jnp.float32)
    audio_lengths = jnp.array([8, 5, 3, 8, 1, 7, 2, 6, 4, 8], jnp.int32)
    video_lengths = jnp.array([6, 4, 6, 2, 5, 1, 3, 6, 2, 4], jnp.int32)

    senti_modal_list = ["text", "audio", "video"]
    text_h, audio_h, video_h = self_mm_forward(
        fused, senti_modal_list,
        text=text,
        audio=audio, audio_lengths=audio_lengths,
        video=video, video_lengths=video_lengths)
    jax.block_until_ready((text_h, audio_h, video_h))

    assert text_h.shape == (B, dims["post_text_dim"])
    assert audio_h.shape == (B, dims["post_audio_dim"])
    assert video_h.shape == (B, dims["post_video_dim"])

    # Correctness check against the unfused pure-JAX f32 reference.
    # Tolerance 2e-3: audio/video inputs and the zx scratch are bf16 in-kernel.
    ref_t, ref_a, ref_v = reference_forward(
        params, text, audio, audio_lengths, video, video_lengths)
    for got, ref in ((text_h, ref_t), (audio_h, ref_a), (video_h, ref_v)):
        assert float(jnp.max(jnp.abs(got - ref))) < 2e-3

    print("KERNEL_OK")
</pallas_src>

<mosaic_0001>
module attributes {stable_mosaic.version = 11 : i64} {
  func.func @kernel(%arg0: i32, %arg1: memref<8x32xf32, #tpu.memory_space<vmem>>, %arg2: memref<8x8x12xbf16, #tpu.memory_space<vmem>>, %arg3: memref<6x8x20xbf16, #tpu.memory_space<vmem>>, %arg4: memref<8x1xi32, #tpu.memory_space<vmem>>, %arg5: memref<8x1xi32, #tpu.memory_space<vmem>>, %arg6: memref<12x256xf32, #tpu.memory_space<vmem>>, %arg7: memref<20x256xf32, #tpu.memory_space<vmem>>, %arg8: memref<64x256xf32, #tpu.memory_space<vmem>>, %arg9: memref<1x256xf32, #tpu.memory_space<vmem>>, %arg10: memref<1x256xf32, #tpu.memory_space<vmem>>, %arg11: memref<64x32xf32, #tpu.memory_space<vmem>>, %arg12: memref<1x32xf32, #tpu.memory_space<vmem>>, %arg13: memref<32x128xf32, #tpu.memory_space<vmem>>, %arg14: memref<32x128xf32, #tpu.memory_space<vmem>>, %arg15: memref<1x128xf32, #tpu.memory_space<vmem>>, %arg16: memref<128x128xf32, #tpu.memory_space<vmem>>, %arg17: memref<1x128xf32, #tpu.memory_space<vmem>>, %arg18: memref<8x128xf32, #tpu.memory_space<vmem>>, %arg19: memref<8x8x256xbf16, #tpu.memory_space<vmem>>) attributes {dimension_semantics = [#tpu.dimension_semantics<parallel>], iteration_bounds = array<i64: 2>, scalar_prefetch = 0 : i64, scratch_operands = 1 : i64, tpu.core_type = #tpu.core_type<tc>, window_params = [{transform_indices = @transform_0, window_bounds = array<i64: 8, 32>}, {transform_indices = @transform_1, window_bounds = array<i64: 8, 8, 12>}, {transform_indices = @transform_2, window_bounds = array<i64: 6, 8, 20>}, {transform_indices = @transform_3, window_bounds = array<i64: 8, 1>}, {transform_indices = @transform_4, window_bounds = array<i64: 8, 1>}, {pipeline_mode = #tpu.pipeline_mode<synchronous>, transform_indices = @transform_5, window_bounds = array<i64: 12, 256>}, {pipeline_mode = #tpu.pipeline_mode<synchronous>, transform_indices = @transform_6, window_bounds = array<i64: 20, 256>}, {pipeline_mode = #tpu.pipeline_mode<synchronous>, transform_indices = @transform_7, window_bounds = array<i64: 64, 256>}, {pipeline_mode = #tpu.pipeline_mode<synchronous>, transform_indices = @transform_8, window_bounds = array<i64: 1, 256>}, {pipeline_mode = #tpu.pipeline_mode<synchronous>, transform_indices = @transform_9, window_bounds = array<i64: 1, 256>}, {pipeline_mode = #tpu.pipeline_mode<synchronous>, transform_indices = @transform_10, window_bounds = array<i64: 64, 32>}, {pipeline_mode = #tpu.pipeline_mode<synchronous>, transform_indices = @transform_11, window_bounds = array<i64: 1, 32>}, {pipeline_mode = #tpu.pipeline_mode<synchronous>, transform_indices = @transform_12, window_bounds = array<i64: 32, 128>}, {pipeline_mode = #tpu.pipeline_mode<synchronous>, transform_indices = @transform_13, window_bounds = array<i64: 32, 128>}, {pipeline_mode = #tpu.pipeline_mode<synchronous>, transform_indices = @transform_14, window_bounds = array<i64: 1, 128>}, {pipeline_mode = #tpu.pipeline_mode<synchronous>, transform_indices = @transform_15, window_bounds = array<i64: 128, 128>}, {pipeline_mode = #tpu.pipeline_mode<synchronous>, transform_indices = @transform_16, window_bounds = array<i64: 1, 128>}, {transform_indices = @transform_17, window_bounds = array<i64: 8, 128>}]} {
    %c0 = arith.constant 0 : index
    %c0_0 = arith.constant 0 : index
    %c0_1 = arith.constant 0 : index
    %0 = vector.load %arg2[%c0, %c0_0, %c0_1] : memref<8x8x12xbf16, #tpu.memory_space<vmem>>, vector<8x8x12xbf16>
    %1 = arith.extf %0 : vector<8x8x12xbf16> to vector<8x8x12xf32>
    %2 = vector.shape_cast %1 : vector<8x8x12xf32> to vector<64x12xf32>
    %c0_2 = arith.constant 0 : index
    %c0_3 = arith.constant 0 : index
    %c0_4 = arith.constant 0 : index
    %3 = vector.load %arg3[%c0_2, %c0_3, %c0_4] : memref<6x8x20xbf16, #tpu.memory_space<vmem>>, vector<6x8x20xbf16>
    %4 = arith.extf %3 : vector<6x8x20xbf16> to vector<6x8x20xf32>
    %5 = vector.shape_cast %4 : vector<6x8x20xf32> to vector<48x20xf32>
    %c0_5 = arith.constant 0 : index
    %c0_6 = arith.constant 0 : index
    %6 = vector.load %arg6[%c0_5, %c0_6] : memref<12x256xf32, #tpu.memory_space<vmem>>, vector<12x256xf32>
    %cst = arith.constant dense<0.000000e+00> : vector<64x256xf32>
    %7 = tpu.matmul %2, %6, %cst {dimension_numbers = #tpu.dot_dimension_numbers<[1], [0], [0], [1], [0, 0, 1, 1], [], []>} : vector<64x12xf32>, vector<12x256xf32>, vector<64x256xf32> -> vector<64x256xf32>
    %c0_7 = arith.constant 0 : index
    %c0_8 = arith.constant 0 : index
    %8 = vector.load %arg9[%c0_7, %c0_8] : memref<1x256xf32, #tpu.memory_space<vmem>>, vector<1x256xf32>
    %9 = vector.broadcast %8 : vector<1x256xf32> to vector<64x256xf32>
    %10 = arith.addf %7, %9 : vector<64x256xf32>
    %11 = vector.shape_cast %10 : vector<64x256xf32> to vector<8x8x256xf32>
    %c0_9 = arith.constant 0 : index
    %c0_10 = arith.constant 0 : index
    %12 = vector.load %arg7[%c0_9, %c0_10] : memref<20x256xf32, #tpu.memory_space<vmem>>, vector<20x256xf32>
    %cst_11 = arith.constant dense<0.000000e+00> : vector<48x256xf32>
    %13 = tpu.matmul %5, %12, %cst_11 {dimension_numbers = #tpu.dot_dimension_numbers<[1], [0], [0], [1], [0, 0, 1, 1], [], []>} : vector<48x20xf32>, vector<20x256xf32>, vector<48x256xf32> -> vector<48x256xf32>
    %c0_12 = arith.constant 0 : index
    %c0_13 = arith.constant 0 : index
    %14 = vector.load %arg10[%c0_12, %c0_13] : memref<1x256xf32, #tpu.memory_space<vmem>>, vector<1x256xf32>
    %15 = vector.broadcast %14 : vector<1x256xf32> to vector<48x256xf32>
    %16 = arith.addf %13, %15 : vector<48x256xf32>
    %17 = vector.shape_cast %16 : vector<48x256xf32> to vector<6x8x256xf32>
    %18 = vector.extract_strided_slice %11 {offsets = [0, 0, 0], sizes = [6, 8, 256], strides = [1, 1, 1]} : vector<8x8x256xf32> to vector<6x8x256xf32>
    %19 = arith.addf %18, %17 : vector<6x8x256xf32>
    %20 = arith.truncf %19 : vector<6x8x256xf32> to vector<6x8x256xbf16>
    %c0_14 = arith.constant 0 : index
    %c0_15 = arith.constant 0 : index
    %c0_16 = arith.constant 0 : index
    %21 = vector.load %arg19[%c0_14, %c0_15, %c0_16] : memref<8x8x256xbf16, #tpu.memory_space<vmem>>, vector<6x8x256xbf16>
    tpu.vector_store %arg19[%c0_14, %c0_15, %c0_16], %20 {strides = array<i32>} : memref<8x8x256xbf16, #tpu.memory_space<vmem>>, vector<6x8x256xbf16>,
    %22 = vector.extract_strided_slice %11 {offsets = [6, 0, 0], sizes = [2, 8, 256], strides = [1, 1, 1]} : vector<8x8x256xf32> to vector<2x8x256xf32>
    %23 = arith.truncf %22 : vector<2x8x256xf32> to vector<2x8x256xbf16>
    %c6 = arith.constant 6 : index
    %c0_17 = arith.constant 0 : index
    %c0_18 = arith.constant 0 : index
    %24 = vector.load %arg19[%c6, %c0_17, %c0_18] : memref<8x8x256xbf16, #tpu.memory_space<vmem>>, vector<2x8x256xbf16>
    tpu.vector_store %arg19[%c6, %c0_17, %c0_18], %23 {strides = array<i32>} : memref<8x8x256xbf16, #tpu.memory_space<vmem>>, vector<2x8x256xbf16>,
    %25 = tpu.iota {dimensions = array<i32: 1>} : vector<8x64xi32>
    %c32_i32 = arith.constant 32 : i32
    %26 = vector.broadcast %c32_i32 : i32 to vector<8x64xi32>
    %27 = arith.cmpi slt, %25, %26 : vector<8x64xi32>
    %c0_19 = arith.constant 0 : index
    %c0_20 = arith.constant 0 : index
    %28 = vector.load %arg4[%c0_19, %c0_20] : memref<8x1xi32, #tpu.memory_space<vmem>>, vector<8x1xi32>
    %29 = vector.shape_cast %28 : vector<8x1xi32> to vector<8x1xi32>
    %30 = vector.broadcast %29 : vector<8x1xi32> to vector<8x64xi32>
    %c0_21 = arith.constant 0 : index
    %c0_22 = arith.constant 0 : index
    %31 = vector.load %arg5[%c0_21, %c0_22] : memref<8x1xi32, #tpu.memory_space<vmem>>, vector<8x1xi32>
    %32 = vector.shape_cast %31 : vector<8x1xi32> to vector<8x1xi32>
    %33 = vector.broadcast %32 : vector<8x1xi32> to vector<8x64xi32>
    %34 = arith.select %27, %30, %33 : vector<8x64xi1>, vector<8x64xi32>
    %cst_23 = arith.constant 0.000000e+00 : f32
    %35 = vector.broadcast %cst_23 : f32 to vector<8x64xf32>
    %cst_24 = arith.constant 0.000000e+00 : f32
    %36 = vector.broadcast %cst_24 : f32 to vector<8x64xf32>
    %c0_i32 = arith.constant 0 : i32
    %c0_25 = arith.constant 0 : index
    %c0_26 = arith.constant 0 : index
    %37 = vector.load %arg8[%c0_25, %c0_26] : memref<64x256xf32, #tpu.memory_space<vmem>>, vector<64x256xf32>
    %cst_27 = arith.constant dense<0.000000e+00> : vector<8x256xf32>
    %38 = tpu.matmul %35, %37, %cst_27 {dimension_numbers = #tpu.dot_dimension_numbers<[1], [0], [0], [1], [0, 0, 1, 1], [], []>} : vector<8x64xf32>, vector<64x256xf32>, vector<8x256xf32> -> vector<8x256xf32>
    %39 = arith.index_cast %c0_i32 : i32 to index
    %c0_28 = arith.constant 0 : index
    %c0_29 = arith.constant 0 : index
    %40 = vector.load %arg19[%39, %c0_28, %c0_29] : memref<8x8x256xbf16, #tpu.memory_space<vmem>>, vector<1x8x256xbf16>
    %41 = vector.shape_cast %40 : vector<1x8x256xbf16> to vector<8x256xbf16>
    %42 = arith.extf %41 : vector<8x256xbf16> to vector<8x256xf32>
    %43 = arith.addf %38, %42 : vector<8x256xf32>
    %44 = vector.extract_strided_slice %43 {offsets = [0, 0], sizes = [8, 192], strides = [1, 1]} : vector<8x256xf32> to vector<8x192xf32>
    %45 = arith.negf %44 : vector<8x192xf32>
    %46 = math.exp %45 : vector<8x192xf32>
    %cst_30 = arith.constant 1.000000e+00 : f32
    %47 = vector.broadcast %cst_30 : f32 to vector<8x192xf32>
    %48 = arith.addf %47, %46 : vector<8x192xf32>
    %49 = arith.divf %47, %48 : vector<8x192xf32>
    %50 = vector.extract_strided_slice %43 {offsets = [0, 192], sizes = [8, 64], strides = [1, 1]} : vector<8x256xf32> to vector<8x64xf32>
    %51 = math.tanh %50 : vector<8x64xf32>
    %52 = vector.extract_strided_slice %49 {offsets = [0, 0], sizes = [8, 64], strides = [1, 1]} : vector<8x192xf32> to vector<8x64xf32>
    %53 = vector.extract_strided_slice %49 {offsets = [0, 64], sizes = [8, 64], strides = [1, 1]} : vector<8x192xf32> to vector<8x64xf32>
    %54 = vector.extract_strided_slice %49 {offsets = [0, 128], sizes = [8, 64], strides = [1, 1]} : vector<8x192xf32> to vector<8x64xf32>
    %55 = arith.mulf %53, %36 : vector<8x64xf32>
    %56 = arith.mulf %52, %51 : vector<8x64xf32>
    %57 = arith.addf %55, %56 : vector<8x64xf32>
    %58 = math.tanh %57 : vector<8x64xf32>
    %59 = arith.mulf %54, %58 : vector<8x64xf32>
    %60 = vector.broadcast %c0_i32 : i32 to vector<8x64xi32>
    %61 = arith.cmpi slt, %60, %34 : vector<8x64xi32>
    %62 = arith.select %61, %59, %35 : vector<8x64xi1>, vector<8x64xf32>
    %63 = arith.select %61, %57, %36 : vector<8x64xi1>, vector<8x64xf32>
    %c1_i32 = arith.constant 1 : i32
    %c0_31 = arith.constant 0 : index
    %c0_32 = arith.constant 0 : index
    %64 = vector.load %arg8[%c0_31, %c0_32] : memref<64x256xf32, #tpu.memory_space<vmem>>, vector<64x256xf32>
    %cst_33 = arith.constant dense<0.000000e+00> : vector<8x256xf32>
    %65 = tpu.matmul %62, %64, %cst_33 {dimension_numbers = #tpu.dot_dimension_numbers<[1], [0], [0], [1], [0, 0, 1, 1], [], []>} : vector<8x64xf32>, vector<64x256xf32>, vector<8x256xf32> -> vector<8x256xf32>
    %66 = arith.index_cast %c1_i32 : i32 to index
    %c0_34 = arith.constant 0 : index
    %c0_35 = arith.constant 0 : index
    %67 = vector.load %arg19[%66, %c0_34, %c0_35] : memref<8x8x256xbf16, #tpu.memory_space<vmem>>, vector<1x8x256xbf16>
    %68 = vector.shape_cast %67 : vector<1x8x256xbf16> to vector<8x256xbf16>
    %69 = arith.extf %68 : vector<8x256xbf16> to vector<8x256xf32>
    %70 = arith.addf %65, %69 : vector<8x256xf32>
    %71 = vector.extract_strided_slice %70 {offsets = [0, 0], sizes = [8, 192], strides = [1, 1]} : vector<8x256xf32> to vector<8x192xf32>
    %72 = arith.negf %71 : vector<8x192xf32>
    %73 = math.exp %72 : vector<8x192xf32>
    %cst_36 = arith.constant 1.000000e+00 : f32
    %74 = vector.broadcast %cst_36 : f32 to vector<8x192xf32>
    %75 = arith.addf %74, %73 : vector<8x192xf32>
    %76 = arith.divf %74, %75 : vector<8x192xf32>
    %77 = vector.extract_strided_slice %70 {offsets = [0, 192], sizes = [8, 64], strides = [1, 1]} : vector<8x256xf32> to vector<8x64xf32>
    %78 = math.tanh %77 : vector<8x64xf32>
    %79 = vector.extract_strided_slice %76 {offsets = [0, 0], sizes = [8, 64], strides = [1, 1]} : vector<8x192xf32> to vector<8x64xf32>
    %80 = vector.extract_strided_slice %76 {offsets = [0, 64], sizes = [8, 64], strides = [1, 1]} : vector<8x192xf32> to vector<8x64xf32>
    %81 = vector.extract_strided_slice %76 {offsets = [0, 128], sizes = [8, 64], strides = [1, 1]} : vector<8x192xf32> to vector<8x64xf32>
    %82 = arith.mulf %80, %63 : vector<8x64xf32>
    %83 = arith.mulf %79, %78 : vector<8x64xf32>
    %84 = arith.addf %82, %83 : vector<8x64xf32>
    %85 = math.tanh %84 : vector<8x64xf32>
    %86 = arith.mulf %81, %85 : vector<8x64xf32>
    %87 = vector.broadcast %c1_i32 : i32 to vector<8x64xi32>
    %88 = arith.cmpi slt, %87, %34 : vector<8x64xi32>
    %89 = arith.select %88, %86, %62 : vector<8x64xi1>, vector<8x64xf32>
    %90 = arith.select %88, %84, %63 : vector<8x64xi1>, vector<8x64xf32>
    %c2_i32 = arith.constant 2 : i32
    %c0_37 = arith.constant 0 : index
    %c0_38 = arith.constant 0 : index
    %91 = vector.load %arg8[%c0_37, %c0_38] : memref<64x256xf32, #tpu.memory_space<vmem>>, vector<64x256xf32>
    %cst_39 = arith.constant dense<0.000000e+00> : vector<8x256xf32>
    %92 = tpu.matmul %89, %91, %cst_39 {dimension_numbers = #tpu.dot_dimension_numbers<[1], [0], [0], [1], [0, 0, 1, 1], [], []>} : vector<8x64xf32>, vector<64x256xf32>, vector<8x256xf32> -> vector<8x256xf32>
    %93 = arith.index_cast %c2_i32 : i32 to index
    %c0_40 = arith.constant 0 : index
    %c0_41 = arith.constant 0 : index
    %94 = vector.load %arg19[%93, %c0_40, %c0_41] : memref<8x8x256xbf16, #tpu.memory_space<vmem>>, vector<1x8x256xbf16>
    %95 = vector.shape_cast %94 : vector<1x8x256xbf16> to vector<8x256xbf16>
    %96 = arith.extf %95 : vector<8x256xbf16> to vector<8x256xf32>
    %97 = arith.addf %92, %96 : vector<8x256xf32>
    %98 = vector.extract_strided_slice %97 {offsets = [0, 0], sizes = [8, 192], strides = [1, 1]} : vector<8x256xf32> to vector<8x192xf32>
    %99 = arith.negf %98 : vector<8x192xf32>
    %100 = math.exp %99 : vector<8x192xf32>
    %cst_42 = arith.constant 1.000000e+00 : f32
    %101 = vector.broadcast %cst_42 : f32 to vector<8x192xf32>
    %102 = arith.addf %101, %100 : vector<8x192xf32>
    %103 = arith.divf %101, %102 : vector<8x192xf32>
    %104 = vector.extract_strided_slice %97 {offsets = [0, 192], sizes = [8, 64], strides = [1, 1]} : vector<8x256xf32> to vector<8x64xf32>
    %105 = math.tanh %104 : vector<8x64xf32>
    %106 = vector.extract_strided_slice %103 {offsets = [0, 0], sizes = [8, 64], strides = [1, 1]} : vector<8x192xf32> to vector<8x64xf32>
    %107 = vector.extract_strided_slice %103 {offsets = [0, 64], sizes = [8, 64], strides = [1, 1]} : vector<8x192xf32> to vector<8x64xf32>
    %108 = vector.extract_strided_slice %103 {offsets = [0, 128], sizes = [8, 64], strides = [1, 1]} : vector<8x192xf32> to vector<8x64xf32>
    %109 = arith.mulf %107, %90 : vector<8x64xf32>
    %110 = arith.mulf %106, %105 : vector<8x64xf32>
    %111 = arith.addf %109, %110 : vector<8x64xf32>
    %112 = math.tanh %111 : vector<8x64xf32>
    %113 = arith.mulf %108, %112 : vector<8x64xf32>
    %114 = vector.broadcast %c2_i32 : i32 to vector<8x64xi32>
    %115 = arith.cmpi slt, %114, %34 : vector<8x64xi32>
    %116 = arith.select %115, %113, %89 : vector<8x64xi1>, vector<8x64xf32>
    %117 = arith.select %115, %111, %90 : vector<8x64xi1>, vector<8x64xf32>
    %c3_i32 = arith.constant 3 : i32
    %c0_43 = arith.constant 0 : index
    %c0_44 = arith.constant 0 : index
    %118 = vector.load %arg8[%c0_43, %c0_44] : memref<64x256xf32, #tpu.memory_space<vmem>>, vector<64x256xf32>
    %cst_45 = arith.constant dense<0.000000e+00> : vector<8x256xf32>
    %119 = tpu.matmul %116, %118, %cst_45 {dimension_numbers = #tpu.dot_dimension_numbers<[1], [0], [0], [1], [0, 0, 1, 1], [], []>} : vector<8x64xf32>, vector<64x256xf32>, vector<8x256xf32> -> vector<8x256xf32>
    %120 = arith.index_cast %c3_i32 : i32 to index
    %c0_46 = arith.constant 0 : index
    %c0_47 = arith.constant 0 : index
    %121 = vector.load %arg19[%120, %c0_46, %c0_47] : memref<8x8x256xbf16, #tpu.memory_space<vmem>>, vector<1x8x256xbf16>
    %122 = vector.shape_cast %121 : vector<1x8x256xbf16> to vector<8x256xbf16>
    %123 = arith.extf %122 : vector<8x256xbf16> to vector<8x256xf32>
    %124 = arith.addf %119, %123 : vector<8x256xf32>
    %125 = vector.extract_strided_slice %124 {offsets = [0, 0], sizes = [8, 192], strides = [1, 1]} : vector<8x256xf32> to vector<8x192xf32>
    %126 = arith.negf %125 : vector<8x192xf32>
    %127 = math.exp %126 : vector<8x192xf32>
    %cst_48 = arith.constant 1.000000e+00 : f32
    %128 = vector.broadcast %cst_48 : f32 to vector<8x192xf32>
    %129 = arith.addf %128, %127 : vector<8x192xf32>
    %130 = arith.divf %128, %129 : vector<8x192xf32>
    %131 = vector.extract_strided_slice %124 {offsets = [0, 192], sizes = [8, 64], strides = [1, 1]} : vector<8x256xf32> to vector<8x64xf32>
    %132 = math.tanh %131 : vector<8x64xf32>
    %133 = vector.extract_strided_slice %130 {offsets = [0, 0], sizes = [8, 64], strides = [1, 1]} : vector<8x192xf32> to vector<8x64xf32>
    %134 = vector.extract_strided_slice %130 {offsets = [0, 64], sizes = [8, 64], strides = [1, 1]} : vector<8x192xf32> to vector<8x64xf32>
    %135 = vector.extract_strided_slice %130 {offsets = [0, 128], sizes = [8, 64], strides = [1, 1]} : vector<8x192xf32> to vector<8x64xf32>
    %136 = arith.mulf %134, %117 : vector<8x64xf32>
    %137 = arith.mulf %133, %132 : vector<8x64xf32>
    %138 = arith.addf %136, %137 : vector<8x64xf32>
    %139 = math.tanh %138 : vector<8x64xf32>
    %140 = arith.mulf %135, %139 : vector<8x64xf32>
    %141 = vector.broadcast %c3_i32 : i32 to vector<8x64xi32>
    %142 = arith.cmpi slt, %141, %34 : vector<8x64xi32>
    %143 = arith.select %142, %140, %116 : vector<8x64xi1>, vector<8x64xf32>
    %144 = arith.select %142, %138, %117 : vector<8x64xi1>, vector<8x64xf32>
    %c4_i32 = arith.constant 4 : i32
    %c0_49 = arith.constant 0 : index
    %c0_50 = arith.constant 0 : index
    %145 = vector.load %arg8[%c0_49, %c0_50] : memref<64x256xf32, #tpu.memory_space<vmem>>, vector<64x256xf32>
    %cst_51 = arith.constant dense<0.000000e+00> : vector<8x256xf32>
    %146 = tpu.matmul %143, %145, %cst_51 {dimension_numbers = #tpu.dot_dimension_numbers<[1], [0], [0], [1], [0, 0, 1, 1], [], []>} : vector<8x64xf32>, vector<64x256xf32>, vector<8x256xf32> -> vector<8x256xf32>
    %147 = arith.index_cast %c4_i32 : i32 to index
    %c0_52 = arith.constant 0 : index
    %c0_53 = arith.constant 0 : index
    %148 = vector.load %arg19[%147, %c0_52, %c0_53] : memref<8x8x256xbf16, #tpu.memory_space<vmem>>, vector<1x8x256xbf16>
    %149 = vector.shape_cast %148 : vector<1x8x256xbf16> to vector<8x256xbf16>
    %150 = arith.extf %149 : vector<8x256xbf16> to vector<8x256xf32>
    %151 = arith.addf %146, %150 : vector<8x256xf32>
    %152 = vector.extract_strided_slice %151 {offsets = [0, 0], sizes = [8, 192], strides = [1, 1]} : vector<8x256xf32> to vector<8x192xf32>
    %153 = arith.negf %152 : vector<8x192xf32>
    %154 = math.exp %153 : vector<8x192xf32>
    %cst_54 = arith.constant 1.000000e+00 : f32
    %155 = vector.broadcast %cst_54 : f32 to vector<8x192xf32>
    %156 = arith.addf %155, %154 : vector<8x192xf32>
    %157 = arith.divf %155, %156 : vector<8x192xf32>
    %158 = vector.extract_strided_slice %151 {offsets = [0, 192], sizes = [8, 64], strides = [1, 1]} : vector<8x256xf32> to vector<8x64xf32>
    %159 = math.tanh %158 : vector<8x64xf32>
    %160 = vector.extract_strided_slice %157 {offsets = [0, 0], sizes = [8, 64], strides = [1, 1]} : vector<8x192xf32> to vector<8x64xf32>
    %161 = vector.extract_strided_slice %157 {offsets = [0, 64], sizes = [8, 64], strides = [1, 1]} : vector<8x192xf32> to vector<8x64xf32>
    %162 = vector.extract_strided_slice %157 {offsets = [0, 128], sizes = [8, 64], strides = [1, 1]} : vector<8x192xf32> to vector<8x64xf32>
    %163 = arith.mulf %161, %144 : vector<8x64xf32>
    %164 = arith.mulf %160, %159 : vector<8x64xf32>
    %165 = arith.addf %163, %164 : vector<8x64xf32>
    %166 = math.tanh %165 : vector<8x64xf32>
    %167 = arith.mulf %162, %166 : vector<8x64xf32>
    %168 = vector.broadcast %c4_i32 : i32 to vector<8x64xi32>
    %169 = arith.cmpi slt, %168, %34 : vector<8x64xi32>
    %170 = arith.select %169, %167, %143 : vector<8x64xi1>, vector<8x64xf32>
    %171 = arith.select %169, %165, %144 : vector<8x64xi1>, vector<8x64xf32>
    %c5_i32 = arith.constant 5 : i32
    %c0_55 = arith.constant 0 : index
    %c0_56 = arith.constant 0 : index
    %172 = vector.load %arg8[%c0_55, %c0_56] : memref<64x256xf32, #tpu.memory_space<vmem>>, vector<64x256xf32>
    %cst_57 = arith.constant dense<0.000000e+00> : vector<8x256xf32>
    %173 = tpu.matmul %170, %172, %cst_57 {dimension_numbers = #tpu.dot_dimension_numbers<[1], [0], [0], [1], [0, 0, 1, 1], [], []>} : vector<8x64xf32>, vector<64x256xf32>, vector<8x256xf32> -> vector<8x256xf32>
    %174 = arith.index_cast %c5_i32 : i32 to index
    %c0_58 = arith.constant 0 : index
    %c0_59 = arith.constant 0 : index
    %175 = vector.load %arg19[%174, %c0_58, %c0_59] : memref<8x8x256xbf16, #tpu.memory_space<vmem>>, vector<1x8x256xbf16>
    %176 = vector.shape_cast %175 : vector<1x8x256xbf16> to vector<8x256xbf16>
    %177 = arith.extf %176 : vector<8x256xbf16> to vector<8x256xf32>
    %178 = arith.addf %173, %177 : vector<8x256xf32>
    %179 = vector.extract_strided_slice %178 {offsets = [0, 0], sizes = [8, 192], strides = [1, 1]} : vector<8x256xf32> to vector<8x192xf32>
    %180 = arith.negf %179 : vector<8x192xf32>
    %181 = math.exp %180 : vector<8x192xf32>
    %cst_60 = arith.constant 1.000000e+00 : f32
    %182 = vector.broadcast %cst_60 : f32 to vector<8x192xf32>
    %183 = arith.addf %182, %181 : vector<8x192xf32>
    %184 = arith.divf %182, %183 : vector<8x192xf32>
    %185 = vector.extract_strided_slice %178 {offsets = [0, 192], sizes = [8, 64], strides = [1, 1]} : vector<8x256xf32> to vector<8x64xf32>
    %186 = math.tanh %185 : vector<8x64xf32>
    %187 = vector.extract_strided_slice %184 {offsets = [0, 0], sizes = [8, 64], strides = [1, 1]} : vector<8x192xf32> to vector<8x64xf32>
    %188 = vector.extract_strided_slice %184 {offsets = [0, 64], sizes = [8, 64], strides = [1, 1]} : vector<8x192xf32> to vector<8x64xf32>
    %189 = vector.extract_strided_slice %184 {offsets = [0, 128], sizes = [8, 64], strides = [1, 1]} : vector<8x192xf32> to vector<8x64xf32>
    %190 = arith.mulf %188, %171 : vector<8x64xf32>
    %191 = arith.mulf %187, %186 : vector<8x64xf32>
    %192 = arith.addf %190, %191 : vector<8x64xf32>
    %193 = math.tanh %192 : vector<8x64xf32>
    %194 = arith.mulf %189, %193 : vector<8x64xf32>
    %195 = vector.broadcast %c5_i32 : i32 to vector<8x64xi32>
    %196 = arith.cmpi slt, %195, %34 : vector<8x64xi32>
    %197 = arith.select %196, %194, %170 : vector<8x64xi1>, vector<8x64xf32>
    %198 = arith.select %196, %192, %171 : vector<8x64xi1>, vector<8x64xf32>
    %c6_i32 = arith.constant 6 : i32
    %c0_61 = arith.constant 0 : index
    %c0_62 = arith.constant 0 : index
    %199 = vector.load %arg8[%c0_61, %c0_62] : memref<64x256xf32, #tpu.memory_space<vmem>>, vector<64x256xf32>
    %cst_63 = arith.constant dense<0.000000e+00> : vector<8x256xf32>
    %200 = tpu.matmul %197, %199, %cst_63 {dimension_numbers = #tpu.dot_dimension_numbers<[1], [0], [0], [1], [0, 0, 1, 1], [], []>} : vector<8x64xf32>, vector<64x256xf32>, vector<8x256xf32> -> vector<8x256xf32>
    %201 = arith.index_cast %c6_i32 : i32 to index
    %c0_64 = arith.constant 0 : index
    %c0_65 = arith.constant 0 : index
    %202 = vector.load %arg19[%201, %c0_64, %c0_65] : memref<8x8x256xbf16, #tpu.memory_space<vmem>>, vector<1x8x256xbf16>
    %203 = vector.shape_cast %202 : vector<1x8x256xbf16> to vector<8x256xbf16>
    %204 = arith.extf %203 : vector<8x256xbf16> to vector<8x256xf32>
    %205 = arith.addf %200, %204 : vector<8x256xf32>
    %206 = vector.extract_strided_slice %205 {offsets = [0, 0], sizes = [8, 192], strides = [1, 1]} : vector<8x256xf32> to vector<8x192xf32>
    %207 = arith.negf %206 : vector<8x192xf32>
    %208 = math.exp %207 : vector<8x192xf32>
    %cst_66 = arith.constant 1.000000e+00 : f32
    %209 = vector.broadcast %cst_66 : f32 to vector<8x192xf32>
    %210 = arith.addf %209, %208 : vector<8x192xf32>
    %211 = arith.divf %209, %210 : vector<8x192xf32>
    %212 = vector.extract_strided_slice %205 {offsets = [0, 192], sizes = [8, 64], strides = [1, 1]} : vector<8x256xf32> to vector<8x64xf32>
    %213 = math.tanh %212 : vector<8x64xf32>
    %214 = vector.extract_strided_slice %211 {offsets = [0, 0], sizes = [8, 64], strides = [1, 1]} : vector<8x192xf32> to vector<8x64xf32>
    %215 = vector.extract_strided_slice %211 {offsets = [0, 64], sizes = [8, 64], strides = [1, 1]} : vector<8x192xf32> to vector<8x64xf32>
    %216 = vector.extract_strided_slice %211 {offsets = [0, 128], sizes = [8, 64], strides = [1, 1]} : vector<8x192xf32> to vector<8x64xf32>
    %217 = arith.mulf %215, %198 : vector<8x64xf32>
    %218 = arith.mulf %214, %213 : vector<8x64xf32>
    %219 = arith.addf %217, %218 : vector<8x64xf32>
    %220 = math.tanh %219 : vector<8x64xf32>
    %221 = arith.mulf %216, %220 : vector<8x64xf32>
    %222 = vector.broadcast %c6_i32 : i32 to vector<8x64xi32>
    %223 = arith.cmpi slt, %222, %34 : vector<8x64xi32>
    %224 = arith.select %223, %221, %197 : vector<8x64xi1>, vector<8x64xf32>
    %225 = arith.select %223, %219, %198 : vector<8x64xi1>, vector<8x64xf32>
    %c7_i32 = arith.constant 7 : i32
    %c0_67 = arith.constant 0 : index
    %c0_68 = arith.constant 0 : index
    %226 = vector.load %arg8[%c0_67, %c0_68] : memref<64x256xf32, #tpu.memory_space<vmem>>, vector<64x256xf32>
    %cst_69 = arith.constant dense<0.000000e+00> : vector<8x256xf32>
    %227 = tpu.matmul %224, %226, %cst_69 {dimension_numbers = #tpu.dot_dimension_numbers<[1], [0], [0], [1], [0, 0, 1, 1], [], []>} : vector<8x64xf32>, vector<64x256xf32>, vector<8x256xf32> -> vector<8x256xf32>
    %228 = arith.index_cast %c7_i32 : i32 to index
    %c0_70 = arith.constant 0 : index
    %c0_71 = arith.constant 0 : index
    %229 = vector.load %arg19[%228, %c0_70, %c0_71] : memref<8x8x256xbf16, #tpu.memory_space<vmem>>, vector<1x8x256xbf16>
    %230 = vector.shape_cast %229 : vector<1x8x256xbf16> to vector<8x256xbf16>
    %231 = arith.extf %230 : vector<8x256xbf16> to vector<8x256xf32>
    %232 = arith.addf %227, %231 : vector<8x256xf32>
    %233 = vector.extract_strided_slice %232 {offsets = [0, 0], sizes = [8, 192], strides = [1, 1]} : vector<8x256xf32> to vector<8x192xf32>
    %234 = arith.negf %233 : vector<8x192xf32>
    %235 = math.exp %234 : vector<8x192xf32>
    %cst_72 = arith.constant 1.000000e+00 : f32
    %236 = vector.broadcast %cst_72 : f32 to vector<8x192xf32>
    %237 = arith.addf %236, %235 : vector<8x192xf32>
    %238 = arith.divf %236, %237 : vector<8x192xf32>
    %239 = vector.extract_strided_slice %232 {offsets = [0, 192], sizes = [8, 64], strides = [1, 1]} : vector<8x256xf32> to vector<8x64xf32>
    %240 = math.tanh %239 : vector<8x64xf32>
    %241 = vector.extract_strided_slice %238 {offsets = [0, 0], sizes = [8, 64], strides = [1, 1]} : vector<8x192xf32> to vector<8x64xf32>
    %242 = vector.extract_strided_slice %238 {offsets = [0, 64], sizes = [8, 64], strides = [1, 1]} : vector<8x192xf32> to vector<8x64xf32>
    %243 = vector.extract_strided_slice %238 {offsets = [0, 128], sizes = [8, 64], strides = [1, 1]} : vector<8x192xf32> to vector<8x64xf32>
    %244 = arith.mulf %242, %225 : vector<8x64xf32>
    %245 = arith.mulf %241, %240 : vector<8x64xf32>
    %246 = arith.addf %244, %245 : vector<8x64xf32>
    %247 = math.tanh %246 : vector<8x64xf32>
    %248 = arith.mulf %243, %247 : vector<8x64xf32>
    %249 = vector.broadcast %c7_i32 : i32 to vector<8x64xi32>
    %250 = arith.cmpi slt, %249, %34 : vector<8x64xi32>
    %251 = arith.select %250, %248, %224 : vector<8x64xi1>, vector<8x64xf32>
    %252 = arith.select %250, %246, %225 : vector<8x64xi1>, vector<8x64xf32>
    %c8_i32 = arith.constant 8 : i32
    %c0_73 = arith.constant 0 : index
    %c0_74 = arith.constant 0 : index
    %253 = vector.load %arg11[%c0_73, %c0_74] : memref<64x32xf32, #tpu.memory_space<vmem>>, vector<64x32xf32>
    %cst_75 = arith.constant dense<0.000000e+00> : vector<8x32xf32>
    %254 = tpu.matmul %251, %253, %cst_75 {dimension_numbers = #tpu.dot_dimension_numbers<[1], [0], [0], [1], [0, 0, 1, 1], [], []>} : vector<8x64xf32>, vector<64x32xf32>, vector<8x32xf32> -> vector<8x32xf32>
    %c0_76 = arith.constant 0 : index
    %c0_77 = arith.constant 0 : index
    %255 = vector.load %arg12[%c0_76, %c0_77] : memref<1x32xf32, #tpu.memory_space<vmem>>, vector<1x32xf32>
    %256 = vector.broadcast %255 : vector<1x32xf32> to vector<8x32xf32>
    %257 = arith.addf %254, %256 : vector<8x32xf32>
    %c0_78 = arith.constant 0 : index
    %c0_79 = arith.constant 0 : index
    %258 = vector.load %arg1[%c0_78, %c0_79] : memref<8x32xf32, #tpu.memory_space<vmem>>, vector<8x32xf32>
    %c0_80 = arith.constant 0 : index
    %c0_81 = arith.constant 0 : index
    %259 = vector.load %arg13[%c0_80, %c0_81] : memref<32x128xf32, #tpu.memory_space<vmem>>, vector<32x128xf32>
    %cst_82 = arith.constant dense<0.000000e+00> : vector<8x128xf32>
    %260 = tpu.matmul %258, %259, %cst_82 {dimension_numbers = #tpu.dot_dimension_numbers<[1], [0], [0], [1], [0, 0, 1, 1], [], []>} : vector<8x32xf32>, vector<32x128xf32>, vector<8x128xf32> -> vector<8x128xf32>
    %c0_83 = arith.constant 0 : index
    %c0_84 = arith.constant 0 : index
    %261 = vector.load %arg14[%c0_83, %c0_84] : memref<32x128xf32, #tpu.memory_space<vmem>>, vector<32x128xf32>
    %cst_85 = arith.constant dense<0.000000e+00> : vector<8x128xf32>
    %262 = tpu.matmul %257, %261, %cst_85 {dimension_numbers = #tpu.dot_dimension_numbers<[1], [0], [0], [1], [0, 0, 1, 1], [], []>} : vector<8x32xf32>, vector<32x128xf32>, vector<8x128xf32> -> vector<8x128xf32>
    %263 = arith.addf %260, %262 : vector<8x128xf32>
    %c0_86 = arith.constant 0 : index
    %c0_87 = arith.constant 0 : index
    %264 = vector.load %arg15[%c0_86, %c0_87] : memref<1x128xf32, #tpu.memory_space<vmem>>, vector<1x128xf32>
    %265 = vector.broadcast %264 : vector<1x128xf32> to vector<8x128xf32>
    %266 = arith.addf %263, %265 : vector<8x128xf32>
    %cst_88 = arith.constant 0.000000e+00 : f32
    %267 = vector.broadcast %cst_88 : f32 to vector<8x128xf32>
    %268 = arith.maximumf %266, %267 : vector<8x128xf32>
    %c0_89 = arith.constant 0 : index
    %c0_90 = arith.constant 0 : index
    %269 = vector.load %arg16[%c0_89, %c0_90] : memref<128x128xf32, #tpu.memory_space<vmem>>, vector<128x128xf32>
    %cst_91 = arith.constant dense<0.000000e+00> : vector<8x128xf32>
    %270 = tpu.matmul %268, %269, %cst_91 {dimension_numbers = #tpu.dot_dimension_numbers<[1], [0], [0], [1], [0, 0, 1, 1], [], []>} : vector<8x128xf32>, vector<128x128xf32>, vector<8x128xf32> -> vector<8x128xf32>
    %c0_92 = arith.constant 0 : index
    %c0_93 = arith.constant 0 : index
    %271 = vector.load %arg17[%c0_92, %c0_93] : memref<1x128xf32, #tpu.memory_space<vmem>>, vector<1x128xf32>
    %272 = vector.broadcast %271 : vector<1x128xf32> to vector<8x128xf32>
    %273 = arith.addf %270, %272 : vector<8x128xf32>
    %cst_94 = arith.constant 0.000000e+00 : f32
    %274 = vector.broadcast %cst_94 : f32 to vector<8x128xf32>
    %275 = arith.maximumf %273, %274 : vector<8x128xf32>
    %c0_95 = arith.constant 0 : index
    %c0_96 = arith.constant 0 : index
    %276 = vector.load %arg18[%c0_95, %c0_96] : memref<8x128xf32, #tpu.memory_space<vmem>>, vector<8x128xf32>
    tpu.vector_store %arg18[%c0_95, %c0_96], %275 {strides = array<i32>} : memref<8x128xf32, #tpu.memory_space<vmem>>, vector<8x128xf32>,
    return
  }
  func.func @transform_0(%arg0: i32) -> (i32, i32) {
    %c0_i32 = arith.constant 0 : i32
    %c0_i32_0 = arith.constant 0 : i32
    return %arg0, %c0_i32 : i32, i32
  }
  func.func @transform_1(%arg0: i32) -> (i32, i32, i32) {
    %c0_i32 = arith.constant 0 : i32
    %c0_i32_0 = arith.constant 0 : i32
    %c0_i32_1 = arith.constant 0 : i32
    return %c0_i32, %arg0, %c0_i32_0 : i32, i32, i32
  }
  func.func @transform_2(%arg0: i32) -> (i32, i32, i32) {
    %c0_i32 = arith.constant 0 : i32
    %c0_i32_0 = arith.constant 0 : i32
    %c0_i32_1 = arith.constant 0 : i32
    return %c0_i32, %arg0, %c0_i32_0 : i32, i32, i32
  }
  func.func @transform_3(%arg0: i32) -> (i32, i32) {
    %c0_i32 = arith.constant 0 : i32
    %c0_i32_0 = arith.constant 0 : i32
    return %arg0, %c0_i32 : i32, i32
  }
  func.func @transform_4(%arg0: i32) -> (i32, i32) {
    %c0_i32 = arith.constant 0 : i32
    %c0_i32_0 = arith.constant 0 : i32
    return %arg0, %c0_i32 : i32, i32
  }
  func.func @transform_5(%arg0: i32) -> (i32, i32) {
    %c0_i32 = arith.constant 0 : i32
    %c0_i32_0 = arith.constant 0 : i32
    %c0_i32_1 = arith.constant 0 : i32
    return %c0_i32, %c0_i32_0 : i32, i32
  }
  func.func @transform_6(%arg0: i32) -> (i32, i32) {
    %c0_i32 = arith.constant 0 : i32
    %c0_i32_0 = arith.constant 0 : i32
    %c0_i32_1 = arith.constant 0 : i32
    return %c0_i32, %c0_i32_0 : i32, i32
  }
  func.func @transform_7(%arg0: i32) -> (i32, i32) {
    %c0_i32 = arith.constant 0 : i32
    %c0_i32_0 = arith.constant 0 : i32
    %c0_i32_1 = arith.constant 0 : i32
    return %c0_i32, %c0_i32_0 : i32, i32
  }
  func.func @transform_8(%arg0: i32) -> (i32, i32) {
    %c0_i32 = arith.constant 0 : i32
    %c0_i32_0 = arith.constant 0 : i32
    %c0_i32_1 = arith.constant 0 : i32
    return %c0_i32, %c0_i32_0 : i32, i32
  }
  func.func @transform_9(%arg0: i32) -> (i32, i32) {
    %c0_i32 = arith.constant 0 : i32
    %c0_i32_0 = arith.constant 0 : i32
    %c0_i32_1 = arith.constant 0 : i32
    return %c0_i32, %c0_i32_0 : i32, i32
  }
  func.func @transform_10(%arg0: i32) -> (i32, i32) {
    %c0_i32 = arith.constant 0 : i32
    %c0_i32_0 = arith.constant 0 : i32
    %c0_i32_1 = arith.constant 0 : i32
    return %c0_i32, %c0_i32_0 : i32, i32
  }
  func.func @transform_11(%arg0: i32) -> (i32, i32) {
    %c0_i32 = arith.constant 0 : i32
    %c0_i32_0 = arith.constant 0 : i32
    %c0_i32_1 = arith.constant 0 : i32
    return %c0_i32, %c0_i32_0 : i32, i32
  }
  func.func @transform_12(%arg0: i32) -> (i32, i32) {
    %c0_i32 = arith.constant 0 : i32
    %c0_i32_0 = arith.constant 0 : i32
    %c0_i32_1 = arith.constant 0 : i32
    return %c0_i32, %c0_i32_0 : i32, i32
  }
  func.func @transform_13(%arg0: i32) -> (i32, i32) {
    %c0_i32 = arith.constant 0 : i32
    %c0_i32_0 = arith.constant 0 : i32
    %c0_i32_1 = arith.constant 0 : i32
    return %c0_i32, %c0_i32_0 : i32, i32
  }
  func.func @transform_14(%arg0: i32) -> (i32, i32) {
    %c0_i32 = arith.constant 0 : i32
    %c0_i32_0 = arith.constant 0 : i32
    %c0_i32_1 = arith.constant 0 : i32
    return %c0_i32, %c0_i32_0 : i32, i32
  }
  func.func @transform_15(%arg0: i32) -> (i32, i32) {
    %c0_i32 = arith.constant 0 : i32
    %c0_i32_0 = arith.constant 0 : i32
    %c0_i32_1 = arith.constant 0 : i32
    return %c0_i32, %c0_i32_0 : i32, i32
  }
  func.func @transform_16(%arg0: i32) -> (i32, i32) {
    %c0_i32 = arith.constant 0 : i32
    %c0_i32_0 = arith.constant 0 : i32
    %c0_i32_1 = arith.constant 0 : i32
    return %c0_i32, %c0_i32_0 : i32, i32
  }
  func.func @transform_17(%arg0: i32) -> (i32, i32) {
    %c0_i32 = arith.constant 0 : i32
    %c0_i32_0 = arith.constant 0 : i32
    return %arg0, %c0_i32 : i32, i32
  }
}

</mosaic_0001>

<llo_original>
// kernel: tpu_custom_call.1
$region0: #{tpu_custom_call.1}
  #allocation0 [shape = 'u32[]', space=smem, size = 0x4, offset = 0x4, fixed_abs, tag = 'smem constant byte address 0x4 - core index']
  #allocation1 [shape = 'u32[144,128]{1,0:T(1,128)}', space=vmem, size = 0x12000, scoped, tag = 'internal scratch']
  #allocation2 [shape = 'bf16[8,8,256]{2,1,0:T(8,128)(2,1)}', space=vmem, size = 0x8000, scoped, tag = 'scratch operand']
  %s0 = inlined_call_operand.hbm [shape: f32[16,32], index: 0, kind: input, shape index: {}]
  %s1 = inlined_call_operand.vmem [shape: bf16[8,16,12], index: 1, kind: input, shape index: {}]
  %s2 = inlined_call_operand.hbm [shape: bf16[6,16,20], index: 2, kind: input, shape index: {}]
  %s3 = inlined_call_operand.vmem [shape: s32[16,1], index: 3, kind: input, shape index: {}]
  %s4 = inlined_call_operand.vmem [shape: s32[16,1], index: 4, kind: input, shape index: {}]
  %s5 = inlined_call_operand.hbm [shape: f32[12,256], index: 5, kind: input, shape index: {}]
  %s6 = inlined_call_operand.hbm [shape: f32[20,256], index: 6, kind: input, shape index: {}]
  %s7 = inlined_call_operand.vmem [shape: f32[64,256], index: 7, kind: input, shape index: {}]
  %s8 = inlined_call_operand.vmem [shape: f32[1,256], index: 8, kind: input, shape index: {}]
  %s9 = inlined_call_operand.hbm [shape: f32[1,256], index: 9, kind: input, shape index: {}]
  %s10 = inlined_call_operand.vmem [shape: f32[64,32], index: 10, kind: input, shape index: {}]
  %s11 = inlined_call_operand.vmem [shape: f32[1,32], index: 11, kind: input, shape index: {}]
  %s12 = inlined_call_operand.hbm [shape: f32[32,128], index: 12, kind: input, shape index: {}]
  %s13 = inlined_call_operand.vmem [shape: f32[32,128], index: 13, kind: input, shape index: {}]
  %s14 = inlined_call_operand.vmem [shape: f32[1,128], index: 14, kind: input, shape index: {}]
  %s15 = inlined_call_operand.vmem [shape: f32[128,128], index: 15, kind: input, shape index: {}]
  %s16 = inlined_call_operand.vmem [shape: f32[1,128], index: 16, kind: input, shape index: {}]
  %s17 = inlined_call_operand.hbm [shape: f32[16,128], index: 17, kind: output, shape index: {}]
  %s18 = sld [smem:[#allocation0]]
  $region166: #{tpu_custom_call.1} parent=0
    _
  %s20 = ssub.s32 1, %s18
  %s21 = scalar_select 0, %s20, %s18
  $region1: #{tpu_custom_call.1} parent=0
    #allocation3 [shape = 'u8[8192]{0}', space=vmem, size = 0x2000, scoped, tag = 'input window, operand 0']
    #allocation4 [shape = 's32[2]{0}', space=sflag, size = 0x8, scoped, tag = 'scoped memory for tpu_custom_call.1']
    #allocation5 [shape = 's32[2]{0}', space=sflag, size = 0x8, scoped, tag = 'scoped memory for tpu_custom_call.1']
    #allocation6 [shape = 'u8[32768]{0}', space=vmem, size = 0x8000, scoped, tag = 'input window, operand 1']
    #allocation7 [shape = 'u8[24576]{0}', space=vmem, size = 0x6000, scoped, tag = 'input window, operand 2']
    #allocation8 [shape = 's32[2]{0}', space=sflag, size = 0x8, scoped, tag = 'scoped memory for tpu_custom_call.1']
    #allocation9 [shape = 'u8[16384]{0}', space=vmem, size = 0x4000, scoped, tag = 'input window, operand 5, single buffered']
    #allocation10 [shape = 'u8[24576]{0}', space=vmem, size = 0x6000, scoped, tag = 'input window, operand 6, single buffered']
    #allocation11 [shape = 's32[1]{0}', space=sflag, size = 0x4, scoped, tag = 'scoped memory for tpu_custom_call.1']
    #allocation12 [shape = 'u8[1024]{0}', space=vmem, size = 0x400, scoped, tag = 'input window, operand 9, single buffered']
    #allocation13 [shape = 'u8[16384]{0}', space=vmem, size = 0x4000, scoped, tag = 'input window, operand 12, single buffered']
    #allocation14 [shape = 's32[1]{0}', space=sflag, size = 0x4, scoped, tag = 'scoped memory for tpu_custom_call.1']
    #allocation15 [shape = 'u8[8192]{0}', space=vmem, size = 0x2000, scoped, tag = 'output window, operand 0']
    %22 = vsyncpa [#allocation4], 0
    %s23 = scalar_lea.sflag [#allocation4], 1
    %24 = vsyncpa %s23, 0
    %25 = vsyncpa [#allocation8], 0
    %s26 = scalar_lea.sflag [#allocation8], 1
    %27 = vsyncpa %s26, 0
    %28 = vsyncpa [#allocation11], 0
    %29 = vsyncpa [#allocation14], 0
    %30 = vsyncpa [#allocation5], 0
    %s31 = scalar_lea.sflag [#allocation5], 1
    %32 = vsyncpa %s31, 0
    loop: start=0, step=1, limit=4
    $region2: #{tpu_custom_call.1} parent=1 // loop_pre_header
      _
    $region3: #{tpu_custom_call.1} parent=1 // loop_header
      %s34 = sphi 0, %s38
      %p35 = scmp.ge.s32.totalorder %s34, 4
      %s44 = sphi 0, %s46
      %s47 = sphi 0, %s44
      %s48 = sphi 0, %s47
      %s64 = sphi 0, %s48
      %s70 = sphi 0, %s72
      %s73 = sphi 0, %s70
      %s74 = sphi 0, %s73
      %s90 = sphi 0, %s74
      %s96 = sphi 0, %s98
      %s99 = sphi 0, %s96
      %s100 = sphi 0, %s99
      %s116 = sphi 0, %s100
      %s122 = sphi 0, %s124
      %s125 = sphi 0, %s122
      %s126 = sphi 0, %s125
      %s142 = sphi 0, %s126
      %s148 = sphi 0, %s150
      %s151 = sphi 0, %s148
      %s152 = sphi 0, %s151
      %s168 = sphi 0, %s152
      %s172 = sphi 0, %s172
      %s174 = sphi 0, %s172
      %s175 = sphi 0, %s174
      %s189 = sphi 0, %s175
      %s193 = sphi 0, %s193
      %s195 = sphi 0, %s193
      %s196 = sphi 0, %s195
      %s210 = sphi 0, %s196
      %s214 = sphi 0, %s214
      %s216 = sphi 0, %s214
      %s217 = sphi 0, %s216
      %s231 = sphi 0, %s217
      %s235 = sphi 0, %s235
      %s237 = sphi 0, %s235
      %s238 = sphi 0, %s237
      %s252 = sphi 0, %s238
      %s256 = sphi 0, %s256
      %s258 = sphi 0, %s256
      %s259 = sphi 0, %s258
      %s273 = sphi 0, %s259
      %s277 = sphi 0, %s277
      %s279 = sphi 0, %s277
      %s280 = sphi 0, %s279
      %s294 = sphi 0, %s280
      %s298 = sphi 0, %s298
      %s300 = sphi 0, %s298
      %s301 = sphi 0, %s300
      %s315 = sphi 0, %s301
      %s319 = sphi 0, %s319
      %s321 = sphi 0, %s319
      %s322 = sphi 0, %s321
      %s336 = sphi 0, %s322
      %s340 = sphi 0, %s340
      %s342 = sphi 0, %s340
      %s343 = sphi 0, %s342
      %s357 = sphi 0, %s343
      %s361 = sphi 0, %s361
      %s363 = sphi 0, %s361
      %s364 = sphi 0, %s363
      %s378 = sphi 0, %s364
      %s382 = sphi 0, %s382
      %s384 = sphi 0, %s382
      %s385 = sphi 0, %s384
      %s399 = sphi 0, %s385
      %s403 = sphi 0, %s403
      %s405 = sphi 0, %s403
      %s406 = sphi 0, %s405
      %s420 = sphi 0, %s406
      %s426 = sphi 0, %s428
      %s429 = sphi 0, %s426
      %s430 = sphi 0, %s429
      %s446 = sphi 0, %s430
    $region4: #{tpu_custom_call.1} parent=1 // loop_header_branch
      %37 = sbr.rel (%p35) target = $region8
    $region5: #{tpu_custom_call.1} parent=1 // loop_body
      %s39 = ssub.s32 %s34, 1
      %s40 = ssub.s32 %s34, 2
      %s41 = sadd.s32 %s34, 1
      %s42 = ssub.s32 %s34, %s41
      %p43 = scmp.eq.s32.totalorder %s42, 0
      %s45 = sadd.s32 %s44, 1
      %s46 = scalar_select %p43, %s44, %s45
      %p49 = pneg %p43
      %p50 = scmp.eq.s32.totalorder %s34, 1
      %p51 = por %p49, %p50
      %p52 = scmp.ne.s32.totalorder %s44, %s47
      %p53 = scmp.eq.s32.totalorder %s34, 0
      %p54 = por %p52, %p53
      %p55 = scmp.ne.s32.totalorder %s44, %s47
      %p56 = scmp.eq.s32.totalorder %s39, 1
      %p57 = por %p55, %p56
      %p58 = scmp.ne.s32.totalorder %s47, %s48
      %p59 = scmp.eq.s32.totalorder %s39, 0
      %p60 = por %p58, %p59
      %p61 = scmp.ne.s32.totalorder %s47, %s48
      %p62 = scmp.eq.s32.totalorder %s40, 1
      %p63 = por %p61, %p62
      %p65 = scmp.ne.s32.totalorder %s48, %s64
      %p66 = scmp.eq.s32.totalorder %s40, 0
      %p67 = por %p65, %p66
      %s68 = ssub.s32 %s34, %s41
      %p69 = scmp.eq.s32.totalorder %s68, 0
      %s71 = sadd.s32 %s70, 1
      %s72 = scalar_select %p69, %s70, %s71
      %p75 = pneg %p69
      %p76 = scmp.eq.s32.totalorder %s34, 1
      %p77 = por %p75, %p76
      %p78 = scmp.ne.s32.totalorder %s70, %s73
      %p79 = scmp.eq.s32.totalorder %s34, 0
      %p80 = por %p78, %p79
      %p81 = scmp.ne.s32.totalorder %s70, %s73
      %p82 = scmp.eq.s32.totalorder %s39, 1
      %p83 = por %p81, %p82
      %p84 = scmp.ne.s32.totalorder %s73, %s74
      %p85 = scmp.eq.s32.totalorder %s39, 0
      %p86 = por %p84, %p85
      %p87 = scmp.ne.s32.totalorder %s73, %s74
      %p88 = scmp.eq.s32.totalorder %s40, 1
      %p89 = por %p87, %p88
      %p91 = scmp.ne.s32.totalorder %s74, %s90
      %p92 = scmp.eq.s32.totalorder %s40, 0
      %p93 = por %p91, %p92
      %s94 = ssub.s32 %s34, %s41
      %p95 = scmp.eq.s32.totalorder %s94, 0
      %s97 = sadd.s32 %s96, 1
      %s98 = scalar_select %p95, %s96, %s97
      %p101 = pneg %p95
      %p102 = scmp.eq.s32.totalorder %s34, 1
      %p103 = por %p101, %p102
      %p104 = scmp.ne.s32.totalorder %s96, %s99
      %p105 = scmp.eq.s32.totalorder %s34, 0
      %p106 = por %p104, %p105
      %p107 = scmp.ne.s32.totalorder %s96, %s99
      %p108 = scmp.eq.s32.totalorder %s39, 1
      %p109 = por %p107, %p108
      %p110 = scmp.ne.s32.totalorder %s99, %s100
      %p111 = scmp.eq.s32.totalorder %s39, 0
      %p112 = por %p110, %p111
      %p113 = scmp.ne.s32.totalorder %s99, %s100
      %p114 = scmp.eq.s32.totalorder %s40, 1
      %p115 = por %p113, %p114
      %p117 = scmp.ne.s32.totalorder %s100, %s116
      %p118 = scmp.eq.s32.totalorder %s40, 0
      %p119 = por %p117, %p118
      %s120 = ssub.s32 %s34, %s41
      %p121 = scmp.eq.s32.totalorder %s120, 0
      %s123 = sadd.s32 %s122, 1
      %s124 = scalar_select %p121, %s122, %s123
      %p127 = pneg %p121
      %p128 = scmp.eq.s32.totalorder %s34, 1
      %p129 = por %p127, %p128
      %p130 = scmp.ne.s32.totalorder %s122, %s125
      %p131 = scmp.eq.s32.totalorder %s34, 0
      %p132 = por %p130, %p131
      %p133 = scmp.ne.s32.totalorder %s122, %s125
      %p134 = scmp.eq.s32.totalorder %s39, 1
      %p135 = por %p133, %p134
      %p136 = scmp.ne.s32.totalorder %s125, %s126
      %p137 = scmp.eq.s32.totalorder %s39, 0
      %p138 = por %p136, %p137
      %p139 = scmp.ne.s32.totalorder %s125, %s126
      %p140 = scmp.eq.s32.totalorder %s40, 1
      %p141 = por %p139, %p140
      %p143 = scmp.ne.s32.totalorder %s126, %s142
      %p144 = scmp.eq.s32.totalorder %s40, 0
      %p145 = por %p143, %p144
      %s146 = ssub.s32 %s34, %s41
      %p147 = scmp.eq.s32.totalorder %s146, 0
      %s149 = sadd.s32 %s148, 1
      %s150 = scalar_select %p147, %s148, %s149
      %p153 = pneg %p147
      %p154 = scmp.eq.s32.totalorder %s34, 1
      %p155 = por %p153, %p154
      %p156 = scmp.ne.s32.totalorder %s148, %s151
      %p157 = scmp.eq.s32.totalorder %s34, 0
      %p158 = por %p156, %p157
      %p159 = scmp.ne.s32.totalorder %s148, %s151
      %p160 = scmp.eq.s32.totalorder %s39, 1
      %p161 = por %p159, %p160
      %p162 = scmp.ne.s32.totalorder %s151, %s152
      %p163 = scmp.eq.s32.totalorder %s39, 0
      %p164 = por %p162, %p163
      %p165 = scmp.ne.s32.totalorder %s151, %s152
      %p166 = scmp.eq.s32.totalorder %s40, 1
      %p167 = por %p165, %p166
      %p169 = scmp.ne.s32.totalorder %s152, %s168
      %p170 = scmp.eq.s32.totalorder %s40, 0
      %p171 = por %p169, %p170
      %s173 = sadd.s32 %s172, 1
      %p176 = scmp.eq.s32.totalorder %s34, 1
      %p177 = scmp.ne.s32.totalorder %s172, %s174
      %p178 = scmp.eq.s32.totalorder %s34, 0
      %p179 = por %p177, %p178
      %p180 = scmp.ne.s32.totalorder %s172, %s174
      %p181 = scmp.eq.s32.totalorder %s39, 1
      %p182 = por %p180, %p181
      %p183 = scmp.ne.s32.totalorder %s174, %s175
      %p184 = scmp.eq.s32.totalorder %s39, 0
      %p185 = por %p183, %p184
      %p186 = scmp.ne.s32.totalorder %s174, %s175
      %p187 = scmp.eq.s32.totalorder %s40, 1
      %p188 = por %p186, %p187
      %p190 = scmp.ne.s32.totalorder %s175, %s189
      %p191 = scmp.eq.s32.totalorder %s40, 0
      %p192 = por %p190, %p191
      %s194 = sadd.s32 %s193, 1
      %p197 = scmp.eq.s32.totalorder %s34, 1
      %p198 = scmp.ne.s32.totalorder %s193, %s195
      %p199 = scmp.eq.s32.totalorder %s34, 0
      %p200 = por %p198, %p199
      %p201 = scmp.ne.s32.totalorder %s193, %s195
      %p202 = scmp.eq.s32.totalorder %s39, 1
      %p203 = por %p201, %p202
      %p204 = scmp.ne.s32.totalorder %s195, %s196
      %p205 = scmp.eq.s32.totalorder %s39, 0
      %p206 = por %p204, %p205
      %p207 = scmp.ne.s32.totalorder %s195, %s196
      %p208 = scmp.eq.s32.totalorder %s40, 1
      %p209 = por %p207, %p208
      %p211 = scmp.ne.s32.totalorder %s196, %s210
      %p212 = scmp.eq.s32.totalorder %s40, 0
      %p213 = por %p211, %p212
      %s215 = sadd.s32 %s214, 1
      %p218 = scmp.eq.s32.totalorder %s34, 1
      %p219 = scmp.ne.s32.totalorder %s214, %s216
      %p220 = scmp.eq.s32.totalorder %s34, 0
      %p221 = por %p219, %p220
      %p222 = scmp.ne.s32.totalorder %s214, %s216
      %p223 = scmp.eq.s32.totalorder %s39, 1
      %p224 = por %p222, %p223
      %p225 = scmp.ne.s32.totalorder %s216, %s217
      %p226 = scmp.eq.s32.totalorder %s39, 0
      %p227 = por %p225, %p226
      %p228 = scmp.ne.s32.totalorder %s216, %s217
      %p229 = scmp.eq.s32.totalorder %s40, 1
      %p230 = por %p228, %p229
      %p232 = scmp.ne.s32.totalorder %s217, %s231
      %p233 = scmp.eq.s32.totalorder %s40, 0
      %p234 = por %p232, %p233
      %s236 = sadd.s32 %s235, 1
      %p239 = scmp.eq.s32.totalorder %s34, 1
      %p240 = scmp.ne.s32.totalorder %s235, %s237
      %p241 = scmp.eq.s32.totalorder %s34, 0
      %p242 = por %p240, %p241
      %p243 = scmp.ne.s32.totalorder %s235, %s237
      %p244 = scmp.eq.s32.totalorder %s39, 1
      %p245 = por %p243, %p244
      %p246 = scmp.ne.s32.totalorder %s237, %s238
      %p247 = scmp.eq.s32.totalorder %s39, 0
      %p248 = por %p246, %p247
      %p249 = scmp.ne.s32.totalorder %s237, %s238
      %p250 = scmp.eq.s32.totalorder %s40, 1
      %p251 = por %p249, %p250
      %p253 = scmp.ne.s32.totalorder %s238, %s252
      %p254 = scmp.eq.s32.totalorder %s40, 0
      %p255 = por %p253, %p254
      %s257 = sadd.s32 %s256, 1
      %p260 = scmp.eq.s32.totalorder %s34, 1
      %p261 = scmp.ne.s32.totalorder %s256, %s258
      %p262 = scmp.eq.s32.totalorder %s34, 0
      %p263 = por %p261, %p262
      %p264 = scmp.ne.s32.totalorder %s256, %s258
      %p265 = scmp.eq.s32.totalorder %s39, 1
      %p266 = por %p264, %p265
      %p267 = scmp.ne.s32.totalorder %s258, %s259
      %p268 = scmp.eq.s32.totalorder %s39, 0
      %p269 = por %p267, %p268
      %p270 = scmp.ne.s32.totalorder %s258, %s259
      %p271 = scmp.eq.s32.totalorder %s40, 1
      %p272 = por %p270, %p271
      %p274 = scmp.ne.s32.totalorder %s259, %s273
      %p275 = scmp.eq.s32.totalorder %s40, 0
      %p276 = por %p274, %p275
      %s278 = sadd.s32 %s277, 1
      %p281 = scmp.eq.s32.totalorder %s34, 1
      %p282 = scmp.ne.s32.totalorder %s277, %s279
      %p283 = scmp.eq.s32.totalorder %s34, 0
      %p284 = por %p282, %p283
      %p285 = scmp.ne.s32.totalorder %s277, %s279
      %p286 = scmp.eq.s32.totalorder %s39, 1
      %p287 = por %p285, %p286
      %p288 = scmp.ne.s32.totalorder %s279, %s280
      %p289 = scmp.eq.s32.totalorder %s39, 0
      %p290 = por %p288, %p289
      %p291 = scmp.ne.s32.totalorder %s279, %s280
      %p292 = scmp.eq.s32.totalorder %s40, 1
      %p293 = por %p291, %p292
      %p295 = scmp.ne.s32.totalorder %s280, %s294
      %p296 = scmp.eq.s32.totalorder %s40, 0
      %p297 = por %p295, %p296
      %s299 = sadd.s32 %s298, 1
      %p302 = scmp.eq.s32.totalorder %s34, 1
      %p303 = scmp.ne.s32.totalorder %s298, %s300
      %p304 = scmp.eq.s32.totalorder %s34, 0
      %p305 = por %p303, %p304
      %p306 = scmp.ne.s32.totalorder %s298, %s300
      %p307 = scmp.eq.s32.totalorder %s39, 1
      %p308 = por %p306, %p307
      %p309 = scmp.ne.s32.totalorder %s300, %s301
      %p310 = scmp.eq.s32.totalorder %s39, 0
      %p311 = por %p309, %p310
      %p312 = scmp.ne.s32.totalorder %s300, %s301
      %p313 = scmp.eq.s32.totalorder %s40, 1
      %p314 = por %p312, %p313
      %p316 = scmp.ne.s32.totalorder %s301, %s315
      %p317 = scmp.eq.s32.totalorder %s40, 0
      %p318 = por %p316, %p317
      %s320 = sadd.s32 %s319, 1
      %p323 = scmp.eq.s32.totalorder %s34, 1
      %p324 = scmp.ne.s32.totalorder %s319, %s321
      %p325 = scmp.eq.s32.totalorder %s34, 0
      %p326 = por %p324, %p325
      %p327 = scmp.ne.s32.totalorder %s319, %s321
      %p328 = scmp.eq.s32.totalorder %s39, 1
      %p329 = por %p327, %p328
      %p330 = scmp.ne.s32.totalorder %s321, %s322
      %p331 = scmp.eq.s32.totalorder %s39, 0
      %p332 = por %p330, %p331
      %p333 = scmp.ne.s32.totalorder %s321, %s322
      %p334 = scmp.eq.s32.totalorder %s40, 1
      %p335 = por %p333, %p334
      %p337 = scmp.ne.s32.totalorder %s322, %s336
      %p338 = scmp.eq.s32.totalorder %s40, 0
      %p339 = por %p337, %p338
      %s341 = sadd.s32 %s340, 1
      %p344 = scmp.eq.s32.totalorder %s34, 1
      %p345 = scmp.ne.s32.totalorder %s340, %s342
      %p346 = scmp.eq.s32.totalorder %s34, 0
      %p347 = por %p345, %p346
      %p348 = scmp.ne.s32.totalorder %s340, %s342
      %p349 = scmp.eq.s32.totalorder %s39, 1
      %p350 = por %p348, %p349
      %p351 = scmp.ne.s32.totalorder %s342, %s343
      %p352 = scmp.eq.s32.totalorder %s39, 0
      %p353 = por %p351, %p352
      %p354 = scmp.ne.s32.totalorder %s342, %s343
      %p355 = scmp.eq.s32.totalorder %s40, 1
      %p356 = por %p354, %p355
      %p358 = scmp.ne.s32.totalorder %s343, %s357
      %p359 = scmp.eq.s32.totalorder %s40, 0
      %p360 = por %p358, %p359
      %s362 = sadd.s32 %s361, 1
      %p365 = scmp.eq.s32.totalorder %s34, 1
      %p366 = scmp.ne.s32.totalorder %s361, %s363
      %p367 = scmp.eq.s32.totalorder %s34, 0
      %p368 = por %p366, %p367
      %p369 = scmp.ne.s32.totalorder %s361, %s363
      %p370 = scmp.eq.s32.totalorder %s39, 1
      %p371 = por %p369, %p370
      %p372 = scmp.ne.s32.totalorder %s363, %s364
      %p373 = scmp.eq.s32.totalorder %s39, 0
      %p374 = por %p372, %p373
      %p375 = scmp.ne.s32.totalorder %s363, %s364
      %p376 = scmp.eq.s32.totalorder %s40, 1
      %p377 = por %p375, %p376
      %p379 = scmp.ne.s32.totalorder %s364, %s378
      %p380 = scmp.eq.s32.totalorder %s40, 0
      %p381 = por %p379, %p380
      %s383 = sadd.s32 %s382, 1
      %p386 = scmp.eq.s32.totalorder %s34, 1
      %p387 = scmp.ne.s32.totalorder %s382, %s384
      %p388 = scmp.eq.s32.totalorder %s34, 0
      %p389 = por %p387, %p388
      %p390 = scmp.ne.s32.totalorder %s382, %s384
      %p391 = scmp.eq.s32.totalorder %s39, 1
      %p392 = por %p390, %p391
      %p393 = scmp.ne.s32.totalorder %s384, %s385
      %p394 = scmp.eq.s32.totalorder %s39, 0
      %p395 = por %p393, %p394
      %p396 = scmp.ne.s32.totalorder %s384, %s385
      %p397 = scmp.eq.s32.totalorder %s40, 1
      %p398 = por %p396, %p397
      %p400 = scmp.ne.s32.totalorder %s385, %s399
      %p401 = scmp.eq.s32.totalorder %s40, 0
      %p402 = por %p400, %p401
      %s404 = sadd.s32 %s403, 1
      %p407 = scmp.eq.s32.totalorder %s34, 1
      %p408 = scmp.ne.s32.totalorder %s403, %s405
      %p409 = scmp.eq.s32.totalorder %s34, 0
      %p410 = por %p408, %p409
      %p411 = scmp.ne.s32.totalorder %s403, %s405
      %p412 = scmp.eq.s32.totalorder %s39, 1
      %p413 = por %p411, %p412
      %p414 = scmp.ne.s32.totalorder %s405, %s406
      %p415 = scmp.eq.s32.totalorder %s39, 0
      %p416 = por %p414, %p415
      %p417 = scmp.ne.s32.totalorder %s405, %s406
      %p418 = scmp.eq.s32.totalorder %s40, 1
      %p419 = por %p417, %p418
      %p421 = scmp.ne.s32.totalorder %s406, %s420
      %p422 = scmp.eq.s32.totalorder %s40, 0
      %p423 = por %p421, %p422
      %s424 = ssub.s32 %s34, %s41
      %p425 = scmp.eq.s32.totalorder %s424, 0
      %s427 = sadd.s32 %s426, 1
      %s428 = scalar_select %p425, %s426, %s427
      %p431 = pneg %p425
      %p432 = scmp.eq.s32.totalorder %s34, 1
      %p433 = por %p431, %p432
      %p434 = scmp.ne.s32.totalorder %s426, %s429
      %p435 = scmp.eq.s32.totalorder %s34, 0
      %p436 = por %p434, %p435
      %p437 = scmp.ne.s32.totalorder %s426, %s429
      %p438 = scmp.eq.s32.totalorder %s39, 1
      %p439 = por %p437, %p438
      %p440 = scmp.ne.s32.totalorder %s429, %s430
      %p441 = scmp.eq.s32.totalorder %s39, 0
      %p442 = por %p440, %p441
      %p443 = scmp.ne.s32.totalorder %s429, %s430
      %p444 = scmp.eq.s32.totalorder %s40, 1
      %p445 = por %p443, %p444
      %p447 = scmp.ne.s32.totalorder %s430, %s446
      %p448 = scmp.eq.s32.totalorder %s40, 0
      %p449 = por %p447, %p448
      %p450 = scmp.le.s32.totalorder 1, %s34
      %p451 = scmp.lt.s32.totalorder %s34, 3
      %p452 = pnand %p450, %p451
      %p453 = pneg %p452
      // Predicated region
      $region9: #{tpu_custom_call.1} parent=5 // pred_check
        _
      $region10: #{tpu_custom_call.1} parent=5 // pred_check_branch
        %455 = sbr.rel (%p452) target = $region12
      $region11: #{tpu_custom_call.1} parent=5 // pred_region
        %s456 = ssub.s32 %s34, 1
        // Predicated region
        $region13: #{tpu_custom_call.1} parent=11 // pred_check
          %p457 = pneg %p185
        $region14: #{tpu_custom_call.1} parent=11 // pred_check_branch
          %459 = sbr.rel (%p457) target = $region16
        $region15: #{tpu_custom_call.1} parent=11 // pred_region
          %s461 = ssub.s32 512, 512
          %462 = vsyncadd [#allocation8], %s461
          %s463 = sshll.u32 [#allocation9], 4
          %s464 = int_to_ptr.vmem [resolvable:$true] %s463
          %469 = dma.hbm_to_vmem [thread:$0]  %s5, 512, %s464, [#allocation8], 256, 256, 16
        $region16: #{tpu_custom_call.1} parent=11 // pred_fallthru
          _
        // Predicated region
        $region17: #{tpu_custom_call.1} parent=11 // pred_check
          %p470 = pneg %p206
        $region18: #{tpu_custom_call.1} parent=11 // pred_check_branch
          %472 = sbr.rel (%p470) target = $region20
        $region19: #{tpu_custom_call.1} parent=11 // pred_region
          %s474 = ssub.s32 768, 768
          %475 = vsyncadd [#allocation11], %s474
          %s476 = sshll.u32 [#allocation10], 4
          %s477 = int_to_ptr.vmem [resolvable:$true] %s476
          %482 = dma.hbm_to_vmem [thread:$0]  %s6, 768, %s477, [#allocation11], 256, 256, 16
        $region20: #{tpu_custom_call.1} parent=11 // pred_fallthru
          _
        // Predicated region
        $region21: #{tpu_custom_call.1} parent=11 // pred_check
          %p483 = pneg %p227
        $region22: #{tpu_custom_call.1} parent=11 // pred_check_branch
          %485 = sbr.rel (%p483) target = $region24
        $region23: #{tpu_custom_call.1} parent=11 // pred_region
          _
        $region24: #{tpu_custom_call.1} parent=11 // pred_fallthru
          _
        // Predicated region
        $region25: #{tpu_custom_call.1} parent=11 // pred_check
          %p486 = pneg %p248
        $region26: #{tpu_custom_call.1} parent=11 // pred_check_branch
          %488 = sbr.rel (%p486) target = $region28
        $region27: #{tpu_custom_call.1} parent=11 // pred_region
          _
        $region28: #{tpu_custom_call.1} parent=11 // pred_fallthru
          _
        // Predicated region
        $region29: #{tpu_custom_call.1} parent=11 // pred_check
          %p489 = pneg %p269
        $region30: #{tpu_custom_call.1} parent=11 // pred_check_branch
          %491 = sbr.rel (%p489) target = $region32
        $region31: #{tpu_custom_call.1} parent=11 // pred_region
          %s493 = ssub.s32 32, 32
          %494 = vsyncadd [#allocation11], %s493
          %s496 = sshll.u32 [#allocation12], 4
          %s497 = int_to_ptr.vmem [resolvable:$true] %s496
          %499 = dma.hbm_to_vmem [thread:$0]  %s9, 32, %s497, [#allocation11]
        $region32: #{tpu_custom_call.1} parent=11 // pred_fallthru
          _
        // Predicated region
        $region33: #{tpu_custom_call.1} parent=11 // pred_check
          %p500 = pneg %p290
        $region34: #{tpu_custom_call.1} parent=11 // pred_check_branch
          %502 = sbr.rel (%p500) target = $region36
        $region35: #{tpu_custom_call.1} parent=11 // pred_region
          _
        $region36: #{tpu_custom_call.1} parent=11 // pred_fallthru
          _
        // Predicated region
        $region37: #{tpu_custom_call.1} parent=11 // pred_check
          %p503 = pneg %p311
        $region38: #{tpu_custom_call.1} parent=11 // pred_check_branch
          %505 = sbr.rel (%p503) target = $region40
        $region39: #{tpu_custom_call.1} parent=11 // pred_region
          _
        $region40: #{tpu_custom_call.1} parent=11 // pred_fallthru
          _
        // Predicated region
        $region41: #{tpu_custom_call.1} parent=11 // pred_check
          %p506 = pneg %p332
        $region42: #{tpu_custom_call.1} parent=11 // pred_check_branch
          %508 = sbr.rel (%p506) target = $region44
        $region43: #{tpu_custom_call.1} parent=11 // pred_region
          %s510 = ssub.s32 512, 512
          %511 = vsyncadd [#allocation14], %s510
          %s512 = sshll.u32 [#allocation13], 4
          %s513 = int_to_ptr.vmem [resolvable:$true] %s512
          %518 = dma.hbm_to_vmem [thread:$0]  %s12, 512, %s513, [#allocation14], 128, 128, 8
        $region44: #{tpu_custom_call.1} parent=11 // pred_fallthru
          _
        // Predicated region
        $region45: #{tpu_custom_call.1} parent=11 // pred_check
          %p519 = pneg %p353
        $region46: #{tpu_custom_call.1} parent=11 // pred_check_branch
          %521 = sbr.rel (%p519) target = $region48
        $region47: #{tpu_custom_call.1} parent=11 // pred_region
          _
        $region48: #{tpu_custom_call.1} parent=11 // pred_fallthru
          _
        // Predicated region
        $region49: #{tpu_custom_call.1} parent=11 // pred_check
          %p522 = pneg %p374
        $region50: #{tpu_custom_call.1} parent=11 // pred_check_branch
          %524 = sbr.rel (%p522) target = $region52
        $region51: #{tpu_custom_call.1} parent=11 // pred_region
          _
        $region52: #{tpu_custom_call.1} parent=11 // pred_fallthru
          _
        // Predicated region
        $region53: #{tpu_custom_call.1} parent=11 // pred_check
          %p525 = pneg %p395
        $region54: #{tpu_custom_call.1} parent=11 // pred_check_branch
          %527 = sbr.rel (%p525) target = $region56
        $region55: #{tpu_custom_call.1} parent=11 // pred_region
          _
        $region56: #{tpu_custom_call.1} parent=11 // pred_fallthru
          _
        // Predicated region
        $region57: #{tpu_custom_call.1} parent=11 // pred_check
          %p528 = pneg %p416
        $region58: #{tpu_custom_call.1} parent=11 // pred_check_branch
          %530 = sbr.rel (%p528) target = $region60
        $region59: #{tpu_custom_call.1} parent=11 // pred_region
          _
        $region60: #{tpu_custom_call.1} parent=11 // pred_fallthru
          _
      $region12: #{tpu_custom_call.1} parent=5 // pred_fallthru
        _
      %p531 = scmp.lt.s32.totalorder %s34, 2
      // Predicated region
      $region61: #{tpu_custom_call.1} parent=5 // pred_check
        %p532 = pneg %p531
      $region62: #{tpu_custom_call.1} parent=5 // pred_check_branch
        %534 = sbr.rel (%p532) target = $region64
      $region63: #{tpu_custom_call.1} parent=5 // pred_region
        // Predicated region
        $region65: #{tpu_custom_call.1} parent=63 // pred_check
          %p535 = pneg %p54
        $region66: #{tpu_custom_call.1} parent=63 // pred_check_branch
          %537 = sbr.rel (%p535) target = $region68
        $region67: #{tpu_custom_call.1} parent=63 // pred_region
          %s538 = sand.u32 %s44, 1
          %s539 = scalar_lea.sflag [#allocation4], %s538
          %s540 = sand.u32 %s44, 1
          %s541 = smul.addr %s540, 8
          %s542 = scalar_lea.vmem [#allocation3], %s541
          %s544 = ssub.s32 128, 128
          %545 = vsyncadd %s539, %s544
          %s546 = smul.addr %s34, 128
          %s547 = scalar_lea.hbm %s0, %s546
          %s549 = sshll.u32 %s542, 4
          %s550 = int_to_ptr.vmem [resolvable:$true] %s549
          %552 = dma.hbm_to_vmem [thread:$0]  %s547, 128, %s550, %s539
        $region68: #{tpu_custom_call.1} parent=63 // pred_fallthru
          _
        // Predicated region
        $region69: #{tpu_custom_call.1} parent=63 // pred_check
          %p553 = pneg %p80
        $region70: #{tpu_custom_call.1} parent=63 // pred_check_branch
          %555 = sbr.rel (%p553) target = $region72
        $region71: #{tpu_custom_call.1} parent=63 // pred_region
          %s556 = sand.u32 %s70, 1
          %s557 = sand.u32 %s70, 1
          %s558 = smul.addr %s557, 32
          %s559 = scalar_lea.vmem [#allocation6], %s558
          %s560 = smul.addr %s34, 4
          %s561 = scalar_lea.vmem %s1, %s560
          // Predicated region
          $region73: #{tpu_custom_call.1} parent=71 // pred_check
            _
          $region74: #{tpu_custom_call.1} parent=71 // pred_check_branch
            %563 = sbr.rel (0) target = $region76
          $region75: #{tpu_custom_call.1} parent=71 // pred_region
            // Predicated region
            $region77: #{tpu_custom_call.1} parent=75 // pred_check
              _
            $region78: #{tpu_custom_call.1} parent=75 // pred_check_branch
              %565 = sbr.rel target = $region80
            $region79: #{tpu_custom_call.1} parent=75 // pred_region
              // Predicated region
              $region92: #{tpu_custom_call.1} parent=79 // pred_check
                _
              $region93: #{tpu_custom_call.1} parent=79 // pred_check_branch
                %594 = sbr.rel (0) target = $region95
              $region94: #{tpu_custom_call.1} parent=79 // pred_region
                loop: start=0, step=1, limit=1
                $region96: #{tpu_custom_call.1} parent=94 // loop_pre_header
                  _
                $region97: #{tpu_custom_call.1} parent=94 // loop_header
                  %s596 = sphi 0, %s600
                  %p597 = scmp.ge.s32.totalorder %s596, 1
                  %s601 = sphi %s561, %s561
                  %s602 = sphi %s559, %s559
                $region98: #{tpu_custom_call.1} parent=94 // loop_header_branch
                  %599 = sbr.rel (%p597) target = $region102
                $region99: #{tpu_custom_call.1} parent=94 // loop_body
                  _
                $region100: #{tpu_custom_call.1} parent=94 // loop_footer
                  %s600 = sadd.s32 1, %s596
                $region101: #{tpu_custom_call.1} parent=94 // loop_footer_branch
                  %595 = sbr.rel target = $region97
                $region102: #{tpu_custom_call.1} parent=94 // loop_exit
                  _
                loop: start=0, step=1, limit=1
                $region103: #{tpu_custom_call.1} parent=94 // loop_pre_header
                  _
                $region104: #{tpu_custom_call.1} parent=94 // loop_header
                  %s605 = sphi 0, %s609
                  %p606 = scmp.ge.s32.totalorder %s605, 1
                  %s610 = sphi %s561, %s561
                  %s611 = sphi %s559, %s559
                $region105: #{tpu_custom_call.1} parent=94 // loop_header_branch
                  %608 = sbr.rel (%p606) target = $region109
                $region106: #{tpu_custom_call.1} parent=94 // loop_body
                  %v612 = vld [vmem:[%s610] sm:$0xf]
                  %613 = vst [vmem:[%s611] sm:$0xf] %v612
                  %v614 = vld [vmem:[%s610 + $0x8] sm:$0xf]
                  %615 = vst [vmem:[%s611 + $0x4] sm:$0xf] %v614
                  %v616 = vld [vmem:[%s610 + $0x10] sm:$0xf]
                  %617 = vst [vmem:[%s611 + $0x8] sm:$0xf] %v616
                  %v618 = vld [vmem:[%s610 + $0x18] sm:$0xf]
                  %619 = vst [vmem:[%s611 + $0xc] sm:$0xf] %v618
                  %v620 = vld [vmem:[%s610 + $0x20] sm:$0xf]
                  %621 = vst [vmem:[%s611 + $0x10] sm:$0xf] %v620
                  %v622 = vld [vmem:[%s610 + $0x28] sm:$0xf]
                  %623 = vst [vmem:[%s611 + $0x14] sm:$0xf] %v622
                  %v624 = vld [vmem:[%s610 + $0x30] sm:$0xf]
                  %625 = vst [vmem:[%s611 + $0x18] sm:$0xf] %v624
                  %v626 = vld [vmem:[%s610 + $0x38] sm:$0xf]
                  %627 = vst [vmem:[%s611 + $0x1c] sm:$0xf] %v626
                $region107: #{tpu_custom_call.1} parent=94 // loop_footer
                  %s609 = sadd.s32 1, %s605
                $region108: #{tpu_custom_call.1} parent=94 // loop_footer_branch
                  %604 = sbr.rel target = $region104
                $region109: #{tpu_custom_call.1} parent=94 // loop_exit
                  _
              $region95: #{tpu_custom_call.1} parent=79 // pred_fallthru
                _
            $region80: #{tpu_custom_call.1} parent=75 // pred_fallthru
              _
            // Predicated region
            $region81: #{tpu_custom_call.1} parent=75 // pred_check
              _
            $region82: #{tpu_custom_call.1} parent=75 // pred_check_branch
              %567 = sbr.rel (0) target = $region84
            $region83: #{tpu_custom_call.1} parent=75 // pred_region
              loop: start=0, step=1, limit=1
              $region85: #{tpu_custom_call.1} parent=83 // loop_pre_header
                _
              $region86: #{tpu_custom_call.1} parent=83 // loop_header
                %s570 = sphi 0, %s574
                %p571 = scmp.ge.s32.totalorder %s570, 1
                %s575 = sphi %s561, %s561
                %s576 = sphi %s559, %s559
              $region87: #{tpu_custom_call.1} parent=83 // loop_header_branch
                %573 = sbr.rel (%p571) target = $region91
              $region88: #{tpu_custom_call.1} parent=83 // loop_body
                %v577 = vld [vmem:[%s575] sm:$0xf]
                %578 = vst [vmem:[%s576] sm:$0xf] %v577
                %v579 = vld [vmem:[%s575 + $0x8] sm:$0xf]
                %580 = vst [vmem:[%s576 + $0x4] sm:$0xf] %v579
                %v581 = vld [vmem:[%s575 + $0x10] sm:$0xf]
                %582 = vst [vmem:[%s576 + $0x8] sm:$0xf] %v581
                %v583 = vld [vmem:[%s575 + $0x18] sm:$0xf]
                %584 = vst [vmem:[%s576 + $0xc] sm:$0xf] %v583
                %v585 = vld [vmem:[%s575 + $0x20] sm:$0xf]
                %586 = vst [vmem:[%s576 + $0x10] sm:$0xf] %v585
                %v587 = vld [vmem:[%s575 + $0x28] sm:$0xf]
                %588 = vst [vmem:[%s576 + $0x14] sm:$0xf] %v587
                %v589 = vld [vmem:[%s575 + $0x30] sm:$0xf]
                %590 = vst [vmem:[%s576 + $0x18] sm:$0xf] %v589
                %v591 = vld [vmem:[%s575 + $0x38] sm:$0xf]
                %592 = vst [vmem:[%s576 + $0x1c] sm:$0xf] %v591
              $region89: #{tpu_custom_call.1} parent=83 // loop_footer
                %s574 = sadd.s32 1, %s570
              $region90: #{tpu_custom_call.1} parent=83 // loop_footer_branch
                %569 = sbr.rel target = $region86
              $region91: #{tpu_custom_call.1} parent=83 // loop_exit
                _
            $region84: #{tpu_custom_call.1} parent=75 // pred_fallthru
              _
          $region76: #{tpu_custom_call.1} parent=71 // pred_fallthru
            _
          %628 = vnop
        $region72: #{tpu_custom_call.1} parent=63 // pred_fallthru
          _
        // Predicated region
        $region110: #{tpu_custom_call.1} parent=63 // pred_check
          %p629 = pneg %p106
        $region111: #{tpu_custom_call.1} parent=63 // pred_check_branch
          %631 = sbr.rel (%p629) target = $region113
        $region112: #{tpu_custom_call.1} parent=63 // pred_region
          %s632 = sand.u32 %s34, 1
          %s633 = scalar_lea.sflag [#allocation8], %s632
          %s634 = sand.u32 %s96, 1
          %s635 = smul.addr %s634, 24
          %s636 = scalar_lea.vmem [#allocation7], %s635
          %s638 = ssub.s32 384, 384
          %639 = vsyncadd %s633, %s638
          %s640 = smul.addr %s34, 64
          %s641 = scalar_lea.hbm %s2, %s640
          %s642 = sshll.u32 %s636, 4
          %s643 = int_to_ptr.vmem [resolvable:$true] %s642
          %648 = dma.hbm_to_vmem [thread:$0]  %s641, 384, %s643, %s633, 128, 64, 4
        $region113: #{tpu_custom_call.1} parent=63 // pred_fallthru
          _
        // Predicated region
        $region114: #{tpu_custom_call.1} parent=63 // pred_check
          %p649 = pneg %p132
        $region115: #{tpu_custom_call.1} parent=63 // pred_check_branch
          %651 = sbr.rel (%p649) target = $region117
        $region116: #{tpu_custom_call.1} parent=63 // pred_region
          %p652 = scmp.lt.s32.totalorder %s34, 1
          %s653 = scalar_select %p652, %s34, 1
          %s654 = smul.addr %s653, 8
          %s655 = scalar_lea.vmem %s3, %s654
        $region117: #{tpu_custom_call.1} parent=63 // pred_fallthru
          _
        // Predicated region
        $region118: #{tpu_custom_call.1} parent=63 // pred_check
          %p656 = pneg %p158
        $region119: #{tpu_custom_call.1} parent=63 // pred_check_branch
          %658 = sbr.rel (%p656) target = $region121
        $region120: #{tpu_custom_call.1} parent=63 // pred_region
          %p659 = scmp.lt.s32.totalorder %s34, 1
          %s660 = scalar_select %p659, %s34, 1
          %s661 = smul.addr %s660, 8
          %s662 = scalar_lea.vmem %s4, %s661
        $region121: #{tpu_custom_call.1} parent=63 // pred_fallthru
          _
      $region64: #{tpu_custom_call.1} parent=5 // pred_fallthru
        _
      %p663 = scmp.le.s32.totalorder 1, %s34
      %p664 = scmp.lt.s32.totalorder %s34, 3
      %p665 = pnand %p663, %p664
      %p666 = pneg %p665
      // Predicated region
      $region122: #{tpu_custom_call.1} parent=5 // pred_check
        _
      $region123: #{tpu_custom_call.1} parent=5 // pred_check_branch
        %668 = sbr.rel (%p665) target = $region125
      $region124: #{tpu_custom_call.1} parent=5 // pred_region
        %s669 = ssub.s32 %s34, 1
        %s670 = sand.u32 %s47, 1
        %s671 = scalar_lea.sflag [#allocation4], %s670
        %s672 = sand.u32 %s47, 1
        %s673 = smul.addr %s672, 8
        %s674 = scalar_lea.vmem [#allocation3], %s673
        // Predicated region
        $region126: #{tpu_custom_call.1} parent=124 // pred_check
          %p675 = pneg %p60
        $region127: #{tpu_custom_call.1} parent=124 // pred_check_branch
          %677 = sbr.rel (%p675) target = $region129
        $region128: #{tpu_custom_call.1} parent=124 // pred_region
          %678 = dma.done %s671, 128
        $region129: #{tpu_custom_call.1} parent=124 // pred_fallthru
          _
        %s679 = sand.u32 %s73, 1
        %s680 = sand.u32 %s73, 1
        %s681 = smul.addr %s680, 32
        %s682 = scalar_lea.vmem [#allocation6], %s681
        // Predicated region
        $region130: #{tpu_custom_call.1} parent=124 // pred_check
          %p683 = pneg %p86
        $region131: #{tpu_custom_call.1} parent=124 // pred_check_branch
          %685 = sbr.rel (%p683) target = $region133
        $region132: #{tpu_custom_call.1} parent=124 // pred_region
          _
        $region133: #{tpu_custom_call.1} parent=124 // pred_fallthru
          _
        %s686 = sand.u32 %s39, 1
        %s687 = scalar_lea.sflag [#allocation8], %s686
        %s688 = sand.u32 %s99, 1
        %s689 = smul.addr %s688, 24
        %s690 = scalar_lea.vmem [#allocation7], %s689
        // Predicated region
        $region134: #{tpu_custom_call.1} parent=124 // pred_check
          %p691 = pneg %p112
        $region135: #{tpu_custom_call.1} parent=124 // pred_check_branch
          %693 = sbr.rel (%p691) target = $region137
        $region136: #{tpu_custom_call.1} parent=124 // pred_region
          %694 = dma.done %s687, 384
        $region137: #{tpu_custom_call.1} parent=124 // pred_fallthru
          _
        // Predicated region
        $region138: #{tpu_custom_call.1} parent=124 // pred_check
          %p695 = pneg %p185
        $region139: #{tpu_custom_call.1} parent=124 // pred_check_branch
          %697 = sbr.rel (%p695) target = $region141
        $region140: #{tpu_custom_call.1} parent=124 // pred_region
          %698 = dma.done [#allocation8], 512
        $region141: #{tpu_custom_call.1} parent=124 // pred_fallthru
          _
        // Predicated region
        $region142: #{tpu_custom_call.1} parent=124 // pred_check
          %p699 = pneg %p206
        $region143: #{tpu_custom_call.1} parent=124 // pred_check_branch
          %701 = sbr.rel (%p699) target = $region145
        $region144: #{tpu_custom_call.1} parent=124 // pred_region
          %702 = dma.done [#allocation11], 768
        $region145: #{tpu_custom_call.1} parent=124 // pred_fallthru
          _
        // Predicated region
        $region146: #{tpu_custom_call.1} parent=124 // pred_check
          %p703 = pneg %p269
        $region147: #{tpu_custom_call.1} parent=124 // pred_check_branch
          %705 = sbr.rel (%p703) target = $region149
        $region148: #{tpu_custom_call.1} parent=124 // pred_region
          %706 = dma.done [#allocation11], 32
        $region149: #{tpu_custom_call.1} parent=124 // pred_fallthru
          _
        // Predicated region
        $region150: #{tpu_custom_call.1} parent=124 // pred_check
          %p707 = pneg %p332
        $region151: #{tpu_custom_call.1} parent=124 // pred_check_branch
          %709 = sbr.rel (%p707) target = $region153
        $region152: #{tpu_custom_call.1} parent=124 // pred_region
          %710 = dma.done [#allocation14], 512
        $region153: #{tpu_custom_call.1} parent=124 // pred_fallthru
          _
        %s711 = sand.u32 %s47, 1
        %s712 = scalar_lea.sflag [#allocation4], %s711
        %s713 = sand.u32 %s47, 1
        %s714 = smul.addr %s713, 8
        %s715 = scalar_lea.vmem [#allocation3], %s714
        %p716 = pneg %p60
        %p717 = pneg %p57
        %s718 = sand.u32 %s73, 1
        %s719 = sand.u32 %s73, 1
        %s720 = smul.addr %s719, 32
        %s721 = scalar_lea.vmem [#allocation6], %s720
        %p722 = pneg %p86
        %p723 = pneg %p83
        %s724 = sand.u32 %s39, 1
        %s725 = scalar_lea.sflag [#allocation8], %s724
        %s726 = sand.u32 %s99, 1
        %s727 = smul.addr %s726, 24
        %s728 = scalar_lea.vmem [#allocation7], %s727
        %p729 = pneg %p112
        %p730 = pneg %p109
        %p731 = scmp.lt.s32.totalorder %s39, 1
        %s732 = scalar_select %p731, %s39, 1
        %s733 = smul.addr %s732, 8
        %s734 = scalar_lea.vmem %s3, %s733
        %p735 = pneg %p138
        %p736 = pneg %p135
        %p737 = scmp.lt.s32.totalorder %s39, 1
        %s738 = scalar_select %p737, %s39, 1
        %s739 = smul.addr %s738, 8
        %s740 = scalar_lea.vmem %s4, %s739
        %p741 = pneg %p164
        %p742 = pneg %p161
        %p743 = pneg %p185
        %p744 = pneg %p182
        %p745 = pneg %p206
        %p746 = pneg %p203
        %p747 = pneg %p227
        %p748 = pneg %p224
        %p749 = pneg %p248
        %p750 = pneg %p245
        %p751 = pneg %p269
        %p752 = pneg %p266
        %p753 = pneg %p290
        %p754 = pneg %p287
        %p755 = pneg %p311
        %p756 = pneg %p308
        %p757 = pneg %p332
        %p758 = pneg %p329
        %p759 = pneg %p353
        %p760 = pneg %p350
        %p761 = pneg %p374
        %p762 = pneg %p371
        %p763 = pneg %p395
        %p764 = pneg %p392
        %p765 = pneg %p416
        %p766 = pneg %p413
        %p767 = pneg %p442
        %p768 = pneg %p439
        %s769 = sand.u32 %s429, 1
        %s770 = scalar_lea.sflag [#allocation5], %s769
        %s771 = sand.u32 %s429, 1
        %s772 = smul.addr %s771, 8
        %s773 = scalar_lea.vmem [#allocation15], %s772
        %p774 = scmp.lt.s32.totalorder %s39, 1
        %s775 = scalar_select %p774, %s39, 1
        %s776 = smul.addr %s775, 8
        %s777 = scalar_lea.vmem %s3, %s776
        %p778 = scmp.lt.s32.totalorder %s39, 1
        %s779 = scalar_select %p778, %s39, 1
        %s780 = smul.addr %s779, 8
        %s781 = scalar_lea.vmem %s4, %s780
        %v782 = vld [vmem:[%s682] sm:$0xf]
        %v783 = vld [vmem:[%s682 + $0x4] sm:$0xf]
        %v784 = vld [vmem:[%s682 + $0x8] sm:$0xf]
        %v785 = vld [vmem:[%s682 + $0xc] sm:$0xf]
        %v786 = vld [vmem:[%s682 + $0x10] sm:$0xf]
        %v787 = vld [vmem:[%s682 + $0x14] sm:$0xf]
        %v788 = vld [vmem:[%s682 + $0x18] sm:$0xf]
        %v789 = vld [vmem:[%s682 + $0x1c] sm:$0xf]
        %v790 = vunpack.c.l.bf16 %v782
        %v791 = vunpack.c.l.bf16 %v783
        %v792 = vunpack.c.l.bf16 %v784
        %v793 = vunpack.c.l.bf16 %v785
        %v794 = vunpack.c.l.bf16 %v786
        %v795 = vunpack.c.l.bf16 %v787
        %v796 = vunpack.c.l.bf16 %v788
        %v797 = vunpack.c.l.bf16 %v789
        %v798 = vld [vmem:[%s690] sm:$0xf]
        %v799 = vld [vmem:[%s690 + $0x4] sm:$0xf]
        %v800 = vld [vmem:[%s690 + $0x8] sm:$0xf]
        %v801 = vld [vmem:[%s690 + $0xc] sm:$0xf]
        %v802 = vld [vmem:[%s690 + $0x10] sm:$0xf]
        %v803 = vld [vmem:[%s690 + $0x14] sm:$0xf]
        %v804 = vunpack.c.l.bf16 %v798
        %v805 = vunpack.c.l.bf16 %v799
        %v806 = vunpack.c.l.bf16 %v800
        %v807 = vunpack.c.l.bf16 %v801
        %v808 = vunpack.c.l.bf16 %v802
        %v809 = vunpack.c.l.bf16 %v803
        %v810 = vld [vmem:[#allocation9] sm:$0xff]
        %v811 = vld [vmem:[#allocation9 + $0x8] sm:$0xff]
        %v812 = vld [vmem:[#allocation9 + $0x10] sm:$0xf]
        %v813 = vld [vmem:[#allocation9 + $0x18] sm:$0xf]
        %v814 = vld [vmem:[%s8] sm:$0x3]
        %v816 = vlaneseq
        %v817 = vshrl.u32 %v816, 7
        %v818 = vsub.s32 0, %v817
        %v819 = vrot.slane %v814, %v818
        %v820 = vlaneseq
        %v821 = vshrl.u32 %v820, 7
        %v822 = vsub.s32 1, %v821
        %v823 = vrot.slane %v814, %v822
        %vm826 = vcmask 97280
        %v828 = vsel %vm826, %v790, 0
        %v831 = vsel %vm826, %v791, 0
        %v834 = vsel %vm826, %v792, 0
        %v837 = vsel %vm826, %v793, 0
        %v840 = vsel %vm826, %v794, 0
        %v843 = vsel %vm826, %v795, 0
        %v846 = vsel %vm826, %v796, 0
        %v849 = vsel %vm826, %v797, 0
        %vm851 = vcmask 1043456
        %v853 = vsel %vm851, %v812, 0
        %v856 = vsel %vm851, %v813, 0
        %858 = vmatprep.subr.mxu0 %v811
        %859 = vmatpush1.msra.mxu0 %v810
        %860 = vmatprep.subr.mxu0 %v856
        %861 = vmatpush1.msra.mxu0 %v853
        %862 = vmatprep.subr.mxu0 0.0
        %863 = vmatpush1.msra.mxu0 0.0
        %864 = vmatprep.subr.mxu0 0.0
        %865 = vmatpush1.msra.mxu0 0.0
        %866 = vmatprep.subr.mxu0 0.0
        %867 = vmatpush1.msra.mxu0 0.0
        %868 = vmatprep.subr.mxu0 0.0
        %869 = vmatpush1.msra.mxu0 0.0
        %870 = vmatprep.subr.mxu0 0.0
        %871 = vmatpush1.msra.mxu0 0.0
        %872 = vmatprep.subr.mxu0 0.0
        %873 = vmatpush1.msra.mxu0 0.0
        %874 = vmatprep.subr.mxu0 0.0
        %875 = vmatpush1.msra.mxu0 0.0
        %876 = vmatprep.subr.mxu0 0.0
        %877 = vmatpush1.msra.mxu0 0.0
        %878 = vmatprep.subr.mxu0 0.0
        %879 = vmatpush1.msra.mxu0 0.0
        %880 = vmatprep.subr.mxu0 0.0
        %881 = vmatpush1.msra.mxu0 0.0
        %882 = vmatprep.subr.mxu0 0.0
        %883 = vmatpush1.msra.mxu0 0.0
        %884 = vmatprep.subr.mxu0 0.0
        %885 = vmatpush1.msra.mxu0 0.0
        %886 = vmatprep.subr.mxu0 0.0
        %887 = vmatpush1.msra.mxu0 0.0
        %888 = vmatprep.subr.mxu0 0.0
        %889 = vmatpush1.msra.mxu0 0.0
        %890 = vmatprep.subr.mxu0 0.0
        %891 = vmatpush1.msra.mxu0 0.0
        %892 = vmatprep.subr.mxu0 0.0
        %893 = vmatpush1.msra.mxu0 0.0
        %894 = vmatprep.subr.mxu0 0.0
        %895 = vmatpush1.msra.mxu0 0.0
        %896 = vmatprep.subr.mxu0 0.0
        %897 = vmatpush1.msra.mxu0 0.0
        %898 = vmatprep.subr.mxu0 0.0
        %899 = vmatpush1.msra.mxu0 0.0
        %900 = vmatprep.subr.mxu0 0.0
        %901 = vmatpush1.msra.mxu0 0.0
        %902 = vmatprep.subr.mxu0 0.0
        %903 = vmatpush1.msra.mxu0 0.0
        %904 = vmatprep.subr.mxu0 0.0
        %905 = vmatpush1.msra.mxu0 0.0
        %906 = vmatprep.subr.mxu0 0.0
        %907 = vmatpush1.msra.mxu0 0.0
        %908 = vmatprep.subr.mxu0 0.0
        %909 = vmatpush1.msra.mxu0 0.0
        %910 = vmatprep.subr.mxu0 0.0
        %911 = vmatpush1.msra.mxu0 0.0
        %912 = vmatprep.subr.mxu0 0.0
        %913 = vmatpush1.msra.mxu0 0.0
        %914 = vmatprep.subr.mxu0 0.0
        %915 = vmatpush1.msra.mxu0 0.0
        %916 = vmatprep.subr.mxu0 0.0
        %917 = vmatpush1.msra.mxu0 0.0
        %918 = vmatprep.subr.mxu0 0.0
        %919 = vmatpush1.msra.mxu0 0.0
        %920 = vmatprep.subr.mxu0 0.0
        %921 = vmatpush1.msra.mxu0 0.0
        %922 = vmatprep.mubr.f32.mxu0 0.0
        %923 = vmatmul.mubr.f32.gmra.mrb[0].mxu0 %v828
        %v924 = vpop.f32.mrb[0].mxu0
        %v925 = vadd.f32 %v819, %v924
        %v926 = vpop.f32.mrb[0].mxu0
        %v927 = vadd.f32 %v823, %v926
        %928 = vmatprep.mubr.f32.mxu0 0.0
        %929 = vmatmul.mubr.f32.gmra.mrb[0].mxu0 %v831
        %v930 = vpop.f32.mrb[0].mxu0
        %v931 = vadd.f32 %v819, %v930
        %v932 = vpop.f32.mrb[0].mxu0
        %v933 = vadd.f32 %v823, %v932
        %934 = vmatprep.mubr.f32.mxu0 0.0
        %935 = vmatmul.mubr.f32.gmra.mrb[0].mxu0 %v834
        %v936 = vpop.f32.mrb[0].mxu0
        %v937 = vadd.f32 %v819, %v936
        %v938 = vpop.f32.mrb[0].mxu0
        %v939 = vadd.f32 %v823, %v938
        %940 = vmatprep.mubr.f32.mxu0 0.0
        %941 = vmatmul.mubr.f32.gmra.mrb[0].mxu0 %v837
        %v942 = vpop.f32.mrb[0].mxu0
        %v943 = vadd.f32 %v819, %v942
        %v944 = vpop.f32.mrb[0].mxu0
        %v945 = vadd.f32 %v823, %v944
        %946 = vmatprep.mubr.f32.mxu0 0.0
        %947 = vmatmul.mubr.f32.gmra.mrb[0].mxu0 %v840
        %v948 = vpop.f32.mrb[0].mxu0
        %v949 = vadd.f32 %v819, %v948
        %v950 = vpop.f32.mrb[0].mxu0
        %v951 = vadd.f32 %v823, %v950
        %952 = vmatprep.mubr.f32.mxu0 0.0
        %953 = vmatmul.mubr.f32.gmra.mrb[0].mxu0 %v843
        %v954 = vpop.f32.mrb[0].mxu0
        %v955 = vadd.f32 %v819, %v954
        %v956 = vpop.f32.mrb[0].mxu0
        %v957 = vadd.f32 %v823, %v956
        %958 = vmatprep.mubr.f32.mxu0 0.0
        %959 = vmatmul.mubr.f32.gmra.mrb[0].mxu0 %v846
        %v960 = vpop.f32.mrb[0].mxu0
        %v961 = vadd.f32 %v819, %v960
        %v962 = vpop.f32.mrb[0].mxu0
        %v963 = vadd.f32 %v823, %v962
        %964 = vmatprep.mubr.f32.mxu0 0.0
        %965 = vmatmul.mubr.f32.gmra.mrb[0].mxu0 %v849
        %v966 = vpop.f32.mrb[0].mxu0
        %v967 = vadd.f32 %v819, %v966
        %v968 = vpop.f32.mrb[0].mxu0
        %v969 = vadd.f32 %v823, %v968
        %970 = vdwg.mxu0
        %v971 = vld [vmem:[#allocation10] sm:$0xff]
        %v972 = vld [vmem:[#allocation10 + $0x8] sm:$0xff]
        %v973 = vld [vmem:[#allocation10 + $0x10] sm:$0xff]
        %v974 = vld [vmem:[#allocation10 + $0x18] sm:$0xff]
        %v975 = vld [vmem:[#allocation10 + $0x20] sm:$0xf]
        %v976 = vld [vmem:[#allocation10 + $0x28] sm:$0xf]
        %v977 = vld [vmem:[#allocation12] sm:$0x3]
        %v979 = vlaneseq
        %v980 = vshrl.u32 %v979, 7
        %v981 = vsub.s32 0, %v980
        %v982 = vrot.slane %v977, %v981
        %v983 = vlaneseq
        %v984 = vshrl.u32 %v983, 7
        %v985 = vsub.s32 1, %v984
        %v986 = vrot.slane %v977, %v985
        %vm989 = vcmask 162816
        %v991 = vsel %vm989, %v804, 0
        %v994 = vsel %vm989, %v805, 0
        %v997 = vsel %vm989, %v806, 0
        %v1000 = vsel %vm989, %v807, 0
        %v1003 = vsel %vm989, %v808, 0
        %v1006 = vsel %vm989, %v809, 0
        %v1009 = vsel %vm851, %v975, 0
        %v1012 = vsel %vm851, %v976, 0
        %1014 = vmatprep.subr.mxu0 %v972
        %1015 = vmatpush1.msra.mxu0 %v971
        %1016 = vmatprep.subr.mxu0 %v974
        %1017 = vmatpush1.msra.mxu0 %v973
        %1018 = vmatprep.subr.mxu0 %v1012
        %1019 = vmatpush1.msra.mxu0 %v1009
        %1020 = vmatprep.subr.mxu0 0.0
        %1021 = vmatpush1.msra.mxu0 0.0
        %1022 = vmatprep.subr.mxu0 0.0
        %1023 = vmatpush1.msra.mxu0 0.0
        %1024 = vmatprep.subr.mxu0 0.0
        %1025 = vmatpush1.msra.mxu0 0.0
        %1026 = vmatprep.subr.mxu0 0.0
        %1027 = vmatpush1.msra.mxu0 0.0
        %1028 = vmatprep.subr.mxu0 0.0
        %1029 = vmatpush1.msra.mxu0 0.0
        %1030 = vmatprep.subr.mxu0 0.0
        %1031 = vmatpush1.msra.mxu0 0.0
        %1032 = vmatprep.subr.mxu0 0.0
        %1033 = vmatpush1.msra.mxu0 0.0
        %1034 = vmatprep.subr.mxu0 0.0
        %1035 = vmatpush1.msra.mxu0 0.0
        %1036 = vmatprep.subr.mxu0 0.0
        %1037 = vmatpush1.msra.mxu0 0.0
        %1038 = vmatprep.subr.mxu0 0.0
        %1039 = vmatpush1.msra.mxu0 0.0
        %1040 = vmatprep.subr.mxu0 0.0
        %1041 = vmatpush1.msra.mxu0 0.0
        %1042 = vmatprep.subr.mxu0 0.0
        %1043 = vmatpush1.msra.mxu0 0.0
        %1044 = vmatprep.subr.mxu0 0.0
        %1045 = vmatpush1.msra.mxu0 0.0
        %1046 = vmatprep.subr.mxu0 0.0
        %1047 = vmatpush1.msra.mxu0 0.0
        %1048 = vmatprep.subr.mxu0 0.0
        %1049 = vmatpush1.msra.mxu0 0.0
        %1050 = vmatprep.subr.mxu0 0.0
        %1051 = vmatpush1.msra.mxu0 0.0
        %1052 = vmatprep.subr.mxu0 0.0
        %1053 = vmatpush1.msra.mxu0 0.0
        %1054 = vmatprep.subr.mxu0 0.0
        %1055 = vmatpush1.msra.mxu0 0.0
        %1056 = vmatprep.subr.mxu0 0.0
        %1057 = vmatpush1.msra.mxu0 0.0
        %1058 = vmatprep.subr.mxu0 0.0
        %1059 = vmatpush1.msra.mxu0 0.0
        %1060 = vmatprep.subr.mxu0 0.0
        %1061 = vmatpush1.msra.mxu0 0.0
        %1062 = vmatprep.subr.mxu0 0.0
        %1063 = vmatpush1.msra.mxu0 0.0
        %1064 = vmatprep.subr.mxu0 0.0
        %1065 = vmatpush1.msra.mxu0 0.0
        %1066 = vmatprep.subr.mxu0 0.0
        %1067 = vmatpush1.msra.mxu0 0.0
        %1068 = vmatprep.subr.mxu0 0.0
        %1069 = vmatpush1.msra.mxu0 0.0
        %1070 = vmatprep.subr.mxu0 0.0
        %1071 = vmatpush1.msra.mxu0 0.0
        %1072 = vmatprep.subr.mxu0 0.0
        %1073 = vmatpush1.msra.mxu0 0.0
        %1074 = vmatprep.subr.mxu0 0.0
        %1075 = vmatpush1.msra.mxu0 0.0
        %1076 = vmatprep.subr.mxu0 0.0
        %1077 = vmatpush1.msra.mxu0 0.0
        %1078 = vmatprep.mubr.f32.mxu0 0.0
        %1079 = vmatmul.mubr.f32.gmra.mrb[0].mxu0 %v991
        %v1080 = vpop.f32.mrb[0].mxu0
        %v1081 = vadd.f32 %v982, %v1080
        %v1082 = vpop.f32.mrb[0].mxu0
        %v1083 = vadd.f32 %v986, %v1082
        %1084 = vmatprep.mubr.f32.mxu0 0.0
        %1085 = vmatmul.mubr.f32.gmra.mrb[0].mxu0 %v994
        %v1086 = vpop.f32.mrb[0].mxu0
        %v1087 = vadd.f32 %v982, %v1086
        %v1088 = vpop.f32.mrb[0].mxu0
        %v1089 = vadd.f32 %v986, %v1088
        %1090 = vmatprep.mubr.f32.mxu0 0.0
        %1091 = vmatmul.mubr.f32.gmra.mrb[0].mxu0 %v997
        %v1092 = vpop.f32.mrb[0].mxu0
        %v1093 = vadd.f32 %v982, %v1092
        %v1094 = vpop.f32.mrb[0].mxu0
        %v1095 = vadd.f32 %v986, %v1094
        %1096 = vmatprep.mubr.f32.mxu0 0.0
        %1097 = vmatmul.mubr.f32.gmra.mrb[0].mxu0 %v1000
        %v1098 = vpop.f32.mrb[0].mxu0
        %v1099 = vadd.f32 %v982, %v1098
        %v1100 = vpop.f32.mrb[0].mxu0
        %v1101 = vadd.f32 %v986, %v1100
        %1102 = vmatprep.mubr.f32.mxu0 0.0
        %1103 = vmatmul.mubr.f32.gmra.mrb[0].mxu0 %v1003
        %v1104 = vpop.f32.mrb[0].mxu0
        %v1105 = vadd.f32 %v982, %v1104
        %v1106 = vpop.f32.mrb[0].mxu0
        %v1107 = vadd.f32 %v986, %v1106
        %1108 = vmatprep.mubr.f32.mxu0 0.0
        %1109 = vmatmul.mubr.f32.gmra.mrb[0].mxu0 %v1006
        %v1110 = vpop.f32.mrb[0].mxu0
        %v1111 = vadd.f32 %v982, %v1110
        %v1112 = vpop.f32.mrb[0].mxu0
        %v1113 = vadd.f32 %v986, %v1112
        %1114 = vdwg.mxu0
        %v1115 = vadd.f32 %v925, %v1081
        %v1116 = vadd.f32 %v927, %v1083
        %v1117 = vadd.f32 %v931, %v1087
        %v1118 = vadd.f32 %v933, %v1089
        %v1119 = vadd.f32 %v937, %v1093
        %v1120 = vadd.f32 %v939, %v1095
        %v1121 = vadd.f32 %v943, %v1099
        %v1122 = vadd.f32 %v945, %v1101
        %v1123 = vadd.f32 %v949, %v1105
        %v1124 = vadd.f32 %v951, %v1107
        %v1125 = vadd.f32 %v955, %v1111
        %v1126 = vadd.f32 %v957, %v1113
        %v1127 = vpack.c.bf16 %v1115, %v1115
        %v1128 = vpack.c.bf16 %v1116, %v1116
        %v1129 = vpack.c.bf16 %v1117, %v1117
        %v1130 = vpack.c.bf16 %v1118, %v1118
        %v1131 = vpack.c.bf16 %v1119, %v1119
        %v1132 = vpack.c.bf16 %v1120, %v1120
        %v1133 = vpack.c.bf16 %v1121, %v1121
        %v1134 = vpack.c.bf16 %v1122, %v1122
        %v1135 = vpack.c.bf16 %v1123, %v1123
        %v1136 = vpack.c.bf16 %v1124, %v1124
        %v1137 = vpack.c.bf16 %v1125, %v1125
        %v1138 = vpack.c.bf16 %v1126, %v1126
        %v1151 = vunpack.c.l.b16 %v1127
        %v1152 = vunpack.c.l.b16 %v1128
        %v1153 = vunpack.c.l.b16 %v1129
        %v1154 = vunpack.c.l.b16 %v1130
        %v1155 = vunpack.c.l.b16 %v1131
        %v1156 = vunpack.c.l.b16 %v1132
        %v1157 = vunpack.c.l.b16 %v1133
        %v1158 = vunpack.c.l.b16 %v1134
        %v1159 = vunpack.c.l.b16 %v1135
        %v1160 = vunpack.c.l.b16 %v1136
        %v1161 = vunpack.c.l.b16 %v1137
        %v1162 = vunpack.c.l.b16 %v1138
        %v1163 = vpack.c.b16 %v1152, %v1151
        %v1164 = vpack.c.b16 %v1154, %v1153
        %v1165 = vpack.c.b16 %v1156, %v1155
        %v1166 = vpack.c.b16 %v1158, %v1157
        %v1167 = vpack.c.b16 %v1160, %v1159
        %v1168 = vpack.c.b16 %v1162, %v1161
        %1175 = vst [vmem:[#allocation2] sm:$0xff] %v1163
        %1176 = vst [vmem:[#allocation2 + $0x8] sm:$0xff] %v1164
        %1177 = vst [vmem:[#allocation2 + $0x10] sm:$0xff] %v1165
        %1178 = vst [vmem:[#allocation2 + $0x18] sm:$0xff] %v1166
        %1179 = vst [vmem:[#allocation2 + $0x20] sm:$0xff] %v1167
        %1180 = vst [vmem:[#allocation2 + $0x28] sm:$0xff] %v1168
        %v1181 = vpack.c.bf16 %v961, %v961
        %v1182 = vpack.c.bf16 %v963, %v963
        %v1183 = vpack.c.bf16 %v967, %v967
        %v1184 = vpack.c.bf16 %v969, %v969
        %v1189 = vunpack.c.l.b16 %v1181
        %v1190 = vunpack.c.l.b16 %v1182
        %v1191 = vunpack.c.l.b16 %v1183
        %v1192 = vunpack.c.l.b16 %v1184
        %v1193 = vpack.c.b16 %v1190, %v1189
        %v1194 = vpack.c.b16 %v1192, %v1191
        %s1197 = scalar_lea.vmem [#allocation2], 48
        %1198 = vst [vmem:[%s1197] sm:$0xff] %v1193
        %1199 = vst [vmem:[%s1197 + $0x8] sm:$0xff] %v1194
        %v1200 = vlaneseq
        %v1201 = vand.u32 %v1200, 127
        %vm1202 = vcmp.lt.s32.totalorder %v1201, 32
        %v1203 = vld [vmem:[%s777] sm:$0xff]
        %1204 = vset.pattern.permute.xlu0 0
        %1205 = vperm.xlu0 %1204, %v1203
        %v1206 = vpop.permute.xlu0 %1205
        %v1207 = vld [vmem:[%s781] sm:$0xff]
        %1208 = vset.pattern.permute.xlu0 0
        %1209 = vperm.xlu0 %1208, %v1207
        %v1210 = vpop.permute.xlu0 %1209
        %v1211 = vsel %vm1202, %v1206, %v1210
        %v1212 = vld [vmem:[%s7] sm:$0xff]
        %v1213 = vld [vmem:[%s7 + $0x8] sm:$0xff]
        %v1214 = vld [vmem:[%s7 + $0x10] sm:$0xff]
        %v1215 = vld [vmem:[%s7 + $0x18] sm:$0xff]
        %v1216 = vld [vmem:[%s7 + $0x20] sm:$0xff]
        %v1217 = vld [vmem:[%s7 + $0x28] sm:$0xff]
        %v1218 = vld [vmem:[%s7 + $0x30] sm:$0xff]
        %v1219 = vld [vmem:[%s7 + $0x38] sm:$0xff]
        %v1220 = vld [vmem:[%s7 + $0x40] sm:$0xff]
        %v1221 = vld [vmem:[%s7 + $0x48] sm:$0xff]
        %v1222 = vld [vmem:[%s7 + $0x50] sm:$0xff]
        %v1223 = vld [vmem:[%s7 + $0x58] sm:$0xff]
        %v1224 = vld [vmem:[%s7 + $0x60] sm:$0xff]
        %v1225 = vld [vmem:[%s7 + $0x68] sm:$0xff]
        %v1226 = vld [vmem:[%s7 + $0x70] sm:$0xff]
        %v1227 = vld [vmem:[%s7 + $0x78] sm:$0xff]
        %v1228 = vld [vmem:[#allocation2] sm:$0xff]
        %v1229 = vunpack.c.l.bf16 %v1228
        %v1230 = vunpack.c.h.bf16 %v1228
        %vm1231 = vcmask 523264
        %v1233 = vsel %vm1231, 0.0, 0
        %1235 = vmatprep.subr.mxu0 %v1213
        %1236 = vmatpush1.msra.mxu0 %v1212
        %1237 = vmatprep.subr.mxu0 %v1215
        %1238 = vmatpush1.msra.mxu0 %v1214
        %1239 = vmatprep.subr.mxu0 %v1217
        %1240 = vmatpush1.msra.mxu0 %v1216
        %1241 = vmatprep.subr.mxu0 %v1219
        %1242 = vmatpush1.msra.mxu0 %v1218
        %1243 = vmatprep.subr.mxu0 %v1221
        %1244 = vmatpush1.msra.mxu0 %v1220
        %1245 = vmatprep.subr.mxu0 %v1223
        %1246 = vmatpush1.msra.mxu0 %v1222
        %1247 = vmatprep.subr.mxu0 %v1225
        %1248 = vmatpush1.msra.mxu0 %v1224
        %1249 = vmatprep.subr.mxu0 %v1227
        %1250 = vmatpush1.msra.mxu0 %v1226
        %1251 = vmatprep.subr.mxu0 0.0
        %1252 = vmatpush1.msra.mxu0 0.0
        %1253 = vmatprep.subr.mxu0 0.0
        %1254 = vmatpush1.msra.mxu0 0.0
        %1255 = vmatprep.subr.mxu0 0.0
        %1256 = vmatpush1.msra.mxu0 0.0
        %1257 = vmatprep.subr.mxu0 0.0
        %1258 = vmatpush1.msra.mxu0 0.0
        %1259 = vmatprep.subr.mxu0 0.0
        %1260 = vmatpush1.msra.mxu0 0.0
        %1261 = vmatprep.subr.mxu0 0.0
        %1262 = vmatpush1.msra.mxu0 0.0
        %1263 = vmatprep.subr.mxu0 0.0
        %1264 = vmatpush1.msra.mxu0 0.0
        %1265 = vmatprep.subr.mxu0 0.0
        %1266 = vmatpush1.msra.mxu0 0.0
        %1267 = vmatprep.subr.mxu0 0.0
        %1268 = vmatpush1.msra.mxu0 0.0
        %1269 = vmatprep.subr.mxu0 0.0
        %1270 = vmatpush1.msra.mxu0 0.0
        %1271 = vmatprep.subr.mxu0 0.0
        %1272 = vmatpush1.msra.mxu0 0.0
        %1273 = vmatprep.subr.mxu0 0.0
        %1274 = vmatpush1.msra.mxu0 0.0
        %1275 = vmatprep.subr.mxu0 0.0
        %1276 = vmatpush1.msra.mxu0 0.0
        %1277 = vmatprep.subr.mxu0 0.0
        %1278 = vmatpush1.msra.mxu0 0.0
        %1279 = vmatprep.subr.mxu0 0.0
        %1280 = vmatpush1.msra.mxu0 0.0
        %1281 = vmatprep.subr.mxu0 0.0
        %1282 = vmatpush1.msra.mxu0 0.0
        %1283 = vmatprep.subr.mxu0 0.0
        %1284 = vmatpush1.msra.mxu0 0.0
        %1285 = vmatprep.subr.mxu0 0.0
        %1286 = vmatpush1.msra.mxu0 0.0
        %1287 = vmatprep.subr.mxu0 0.0
        %1288 = vmatpush1.msra.mxu0 0.0
        %1289 = vmatprep.subr.mxu0 0.0
        %1290 = vmatpush1.msra.mxu0 0.0
        %1291 = vmatprep.subr.mxu0 0.0
        %1292 = vmatpush1.msra.mxu0 0.0
        %1293 = vmatprep.subr.mxu0 0.0
        %1294 = vmatpush1.msra.mxu0 0.0
        %1295 = vmatprep.subr.mxu0 0.0
        %1296 = vmatpush1.msra.mxu0 0.0
        %1297 = vmatprep.subr.mxu0 0.0
        %1298 = vmatpush1.msra.mxu0 0.0
        %1299 = vmatprep.mubr.f32.mxu0 0.0
        %1300 = vmatmul.mubr.f32.gmra.mrb[0].mxu0 %v1233
        %v1301 = vpop.f32.mrb[0].mxu0
        %v1302 = vadd.f32 %v1229, %v1301
        %v1303 = vpop.f32.mrb[0].mxu0
        %v1304 = vadd.f32 %v1230, %v1303
        %1305 = vdwg.mxu0
        %v1306 = vxor.u32 %v1302, 2147483648
        %v1307 = vxor.u32 %v1304, 2147483648
        %v1308 = vmul.f32 %v1306, 1.442695
        %v1309 = vpow.pop %v1308
        %v1310 = vmul.f32 %v1307, 1.442695
        %v1311 = vpow.pop %v1310
        %v1312 = vadd.f32 %v1309, 1.0
        %v1313 = vadd.f32 %v1311, 1.0
        %v1314 = vrcp.pop %v1312
        %v1315 = vmul.f32 1.0, %v1314
        %v1316 = vrcp.pop %v1313
        %v1317 = vmul.f32 1.0, %v1316
        %v1318 = vtanh.pop %v1304
        %v1319 = vmul.f32 %v1315, 0.0
        %1321 = vrot.lane.b32.xlu0 %v1318, 64
        %v1322 = vpop.permute.xlu0 %1321
        %v1324 = vmul.f32 %v1315, %v1322
        %1326 = vrot.lane.b32.xlu0 %v1324, 64
        %v1327 = vpop.permute.xlu0 %1326
        %v1329 = vadd.f32 %v1319, %v1327
        %v1330 = vtanh.pop %v1329
        %1332 = vrot.lane.b32.xlu0 %v1330, 64
        %v1333 = vpop.permute.xlu0 %1332
        %v1335 = vmul.f32 %v1317, %v1333
        %vm1336 = vcmp.gt.s32.totalorder %v1211, 0
        %v1337 = vsel %vm1336, %v1335, 0.0
        %1339 = vrot.lane.b32.xlu0 %v1329, 64
        %v1340 = vpop.permute.xlu0 %1339
        %v1342 = vsel %vm1336, %v1340, 0.0
        %s1343 = scalar_lea.vmem [#allocation2], 8
        %v1344 = vld [vmem:[%s1343] sm:$0xff]
        %v1345 = vunpack.c.l.bf16 %v1344
        %v1346 = vunpack.c.h.bf16 %v1344
        %v1348 = vsel %vm1231, %v1337, 0
        %1350 = vmatprep.subr.mxu0 %v1213
        %1351 = vmatpush1.msra.mxu0 %v1212
        %1352 = vmatprep.subr.mxu0 %v1215
        %1353 = vmatpush1.msra.mxu0 %v1214
        %1354 = vmatprep.subr.mxu0 %v1217
        %1355 = vmatpush1.msra.mxu0 %v1216
        %1356 = vmatprep.subr.mxu0 %v1219
        %1357 = vmatpush1.msra.mxu0 %v1218
        %1358 = vmatprep.subr.mxu0 %v1221
        %1359 = vmatpush1.msra.mxu0 %v1220
        %1360 = vmatprep.subr.mxu0 %v1223
        %1361 = vmatpush1.msra.mxu0 %v1222
        %1362 = vmatprep.subr.mxu0 %v1225
        %1363 = vmatpush1.msra.mxu0 %v1224
        %1364 = vmatprep.subr.mxu0 %v1227
        %1365 = vmatpush1.msra.mxu0 %v1226
        %1366 = vmatprep.subr.mxu0 0.0
        %1367 = vmatpush1.msra.mxu0 0.0
        %1368 = vmatprep.subr.mxu0 0.0
        %1369 = vmatpush1.msra.mxu0 0.0
        %1370 = vmatprep.subr.mxu0 0.0
        %1371 = vmatpush1.msra.mxu0 0.0
        %1372 = vmatprep.subr.mxu0 0.0
        %1373 = vmatpush1.msra.mxu0 0.0
        %1374 = vmatprep.subr.mxu0 0.0
        %1375 = vmatpush1.msra.mxu0 0.0
        %1376 = vmatprep.subr.mxu0 0.0
        %1377 = vmatpush1.msra.mxu0 0.0
        %1378 = vmatprep.subr.mxu0 0.0
        %1379 = vmatpush1.msra.mxu0 0.0
        %1380 = vmatprep.subr.mxu0 0.0
        %1381 = vmatpush1.msra.mxu0 0.0
        %1382 = vmatprep.subr.mxu0 0.0
        %1383 = vmatpush1.msra.mxu0 0.0
        %1384 = vmatprep.subr.mxu0 0.0
        %1385 = vmatpush1.msra.mxu0 0.0
        %1386 = vmatprep.subr.mxu0 0.0
        %1387 = vmatpush1.msra.mxu0 0.0
        %1388 = vmatprep.subr.mxu0 0.0
        %1389 = vmatpush1.msra.mxu0 0.0
        %1390 = vmatprep.subr.mxu0 0.0
        %1391 = vmatpush1.msra.mxu0 0.0
        %1392 = vmatprep.subr.mxu0 0.0
        %1393 = vmatpush1.msra.mxu0 0.0
        %1394 = vmatprep.subr.mxu0 0.0
        %1395 = vmatpush1.msra.mxu0 0.0
        %1396 = vmatprep.subr.mxu0 0.0
        %1397 = vmatpush1.msra.mxu0 0.0
        %1398 = vmatprep.subr.mxu0 0.0
        %1399 = vmatpush1.msra.mxu0 0.0
        %1400 = vmatprep.subr.mxu0 0.0
        %1401 = vmatpush1.msra.mxu0 0.0
        %1402 = vmatprep.subr.mxu0 0.0
        %1403 = vmatpush1.msra.mxu0 0.0
        %1404 = vmatprep.subr.mxu0 0.0
        %1405 = vmatpush1.msra.mxu0 0.0
        %1406 = vmatprep.subr.mxu0 0.0
        %1407 = vmatpush1.msra.mxu0 0.0
        %1408 = vmatprep.subr.mxu0 0.0
        %1409 = vmatpush1.msra.mxu0 0.0
        %1410 = vmatprep.subr.mxu0 0.0
        %1411 = vmatpush1.msra.mxu0 0.0
        %1412 = vmatprep.subr.mxu0 0.0
        %1413 = vmatpush1.msra.mxu0 0.0
        %1414 = vmatprep.mubr.f32.mxu0 0.0
        %1415 = vmatmul.mubr.f32.gmra.mrb[0].mxu0 %v1348
        %v1416 = vpop.f32.mrb[0].mxu0
        %v1417 = vadd.f32 %v1345, %v1416
        %v1418 = vpop.f32.mrb[0].mxu0
        %v1419 = vadd.f32 %v1346, %v1418
        %1420 = vdwg.mxu0
        %v1421 = vxor.u32 %v1417, 2147483648
        %v1422 = vxor.u32 %v1419, 2147483648
        %v1423 = vmul.f32 %v1421, 1.442695
        %v1424 = vpow.pop %v1423
        %v1425 = vmul.f32 %v1422, 1.442695
        %v1426 = vpow.pop %v1425
        %v1427 = vadd.f32 %v1424, 1.0
        %v1428 = vadd.f32 %v1426, 1.0
        %v1429 = vrcp.pop %v1427
        %v1430 = vmul.f32 1.0, %v1429
        %v1431 = vrcp.pop %v1428
        %v1432 = vmul.f32 1.0, %v1431
        %v1433 = vtanh.pop %v1419
        %1435 = vrot.lane.b32.xlu0 %v1342, 64
        %v1436 = vpop.permute.xlu0 %1435
        %v1438 = vmul.f32 %v1430, %v1436
        %1440 = vrot.lane.b32.xlu0 %v1433, 64
        %v1441 = vpop.permute.xlu0 %1440
        %v1443 = vmul.f32 %v1430, %v1441
        %1445 = vrot.lane.b32.xlu0 %v1443, 64
        %v1446 = vpop.permute.xlu0 %1445
        %v1448 = vadd.f32 %v1438, %v1446
        %v1449 = vtanh.pop %v1448
        %1451 = vrot.lane.b32.xlu0 %v1449, 64
        %v1452 = vpop.permute.xlu0 %1451
        %v1454 = vmul.f32 %v1432, %v1452
        %vm1455 = vcmp.gt.s32.totalorder %v1211, 1
        %v1456 = vsel %vm1455, %v1454, %v1337
        %1458 = vrot.lane.b32.xlu0 %v1448, 64
        %v1459 = vpop.permute.xlu0 %1458
        %v1461 = vsel %vm1455, %v1459, %v1342
        %s1462 = scalar_lea.vmem [#allocation2], 16
        %v1463 = vld [vmem:[%s1462] sm:$0xff]
        %v1464 = vunpack.c.l.bf16 %v1463
        %v1465 = vunpack.c.h.bf16 %v1463
        %v1467 = vsel %vm1231, %v1456, 0
        %1469 = vmatprep.subr.mxu0 %v1213
        %1470 = vmatpush1.msra.mxu0 %v1212
        %1471 = vmatprep.subr.mxu0 %v1215
        %1472 = vmatpush1.msra.mxu0 %v1214
        %1473 = vmatprep.subr.mxu0 %v1217
        %1474 = vmatpush1.msra.mxu0 %v1216
        %1475 = vmatprep.subr.mxu0 %v1219
        %1476 = vmatpush1.msra.mxu0 %v1218
        %1477 = vmatprep.subr.mxu0 %v1221
        %1478 = vmatpush1.msra.mxu0 %v1220
        %1479 = vmatprep.subr.mxu0 %v1223
        %1480 = vmatpush1.msra.mxu0 %v1222
        %1481 = vmatprep.subr.mxu0 %v1225
        %1482 = vmatpush1.msra.mxu0 %v1224
        %1483 = vmatprep.subr.mxu0 %v1227
        %1484 = vmatpush1.msra.mxu0 %v1226
        %1485 = vmatprep.subr.mxu0 0.0
        %1486 = vmatpush1.msra.mxu0 0.0
        %1487 = vmatprep.subr.mxu0 0.0
        %1488 = vmatpush1.msra.mxu0 0.0
        %1489 = vmatprep.subr.mxu0 0.0
        %1490 = vmatpush1.msra.mxu0 0.0
        %1491 = vmatprep.subr.mxu0 0.0
        %1492 = vmatpush1.msra.mxu0 0.0
        %1493 = vmatprep.subr.mxu0 0.0
        %1494 = vmatpush1.msra.mxu0 0.0
        %1495 = vmatprep.subr.mxu0 0.0
        %1496 = vmatpush1.msra.mxu0 0.0
        %1497 = vmatprep.subr.mxu0 0.0
        %1498 = vmatpush1.msra.mxu0 0.0
        %1499 = vmatprep.subr.mxu0 0.0
        %1500 = vmatpush1.msra.mxu0 0.0
        %1501 = vmatprep.subr.mxu0 0.0
        %1502 = vmatpush1.msra.mxu0 0.0
        %1503 = vmatprep.subr.mxu0 0.0
        %1504 = vmatpush1.msra.mxu0 0.0
        %1505 = vmatprep.subr.mxu0 0.0
        %1506 = vmatpush1.msra.mxu0 0.0
        %1507 = vmatprep.subr.mxu0 0.0
        %1508 = vmatpush1.msra.mxu0 0.0
        %1509 = vmatprep.subr.mxu0 0.0
        %1510 = vmatpush1.msra.mxu0 0.0
        %1511 = vmatprep.subr.mxu0 0.0
        %1512 = vmatpush1.msra.mxu0 0.0
        %1513 = vmatprep.subr.mxu0 0.0
        %1514 = vmatpush1.msra.mxu0 0.0
        %1515 = vmatprep.subr.mxu0 0.0
        %1516 = vmatpush1.msra.mxu0 0.0
        %1517 = vmatprep.subr.mxu0 0.0
        %1518 = vmatpush1.msra.mxu0 0.0
        %1519 = vmatprep.subr.mxu0 0.0
        %1520 = vmatpush1.msra.mxu0 0.0
        %1521 = vmatprep.subr.mxu0 0.0
        %1522 = vmatpush1.msra.mxu0 0.0
        %1523 = vmatprep.subr.mxu0 0.0
        %1524 = vmatpush1.msra.mxu0 0.0
        %1525 = vmatprep.subr.mxu0 0.0
        %1526 = vmatpush1.msra.mxu0 0.0
        %1527 = vmatprep.subr.mxu0 0.0
        %1528 = vmatpush1.msra.mxu0 0.0
        %1529 = vmatprep.subr.mxu0 0.0
        %1530 = vmatpush1.msra.mxu0 0.0
        %1531 = vmatprep.subr.mxu0 0.0
        %1532 = vmatpush1.msra.mxu0 0.0
        %1533 = vmatprep.mubr.f32.mxu0 0.0
        %1534 = vmatmul.mubr.f32.gmra.mrb[0].mxu0 %v1467
        %v1535 = vpop.f32.mrb[0].mxu0
        %v1536 = vadd.f32 %v1464, %v1535
        %v1537 = vpop.f32.mrb[0].mxu0
        %v1538 = vadd.f32 %v1465, %v1537
        %1539 = vdwg.mxu0
        %v1540 = vxor.u32 %v1536, 2147483648
        %v1541 = vxor.u32 %v1538, 2147483648
        %v1542 = vmul.f32 %v1540, 1.442695
        %v1543 = vpow.pop %v1542
        %v1544 = vmul.f32 %v1541, 1.442695
        %v1545 = vpow.pop %v1544
        %v1546 = vadd.f32 %v1543, 1.0
        %v1547 = vadd.f32 %v1545, 1.0
        %v1548 = vrcp.pop %v1546
        %v1549 = vmul.f32 1.0, %v1548
        %v1550 = vrcp.pop %v1547
        %v1551 = vmul.f32 1.0, %v1550
        %v1552 = vtanh.pop %v1538
        %1554 = vrot.lane.b32.xlu0 %v1461, 64
        %v1555 = vpop.permute.xlu0 %1554
        %v1557 = vmul.f32 %v1549, %v1555
        %1559 = vrot.lane.b32.xlu0 %v1552, 64
        %v1560 = vpop.permute.xlu0 %1559
        %v1562 = vmul.f32 %v1549, %v1560
        %1564 = vrot.lane.b32.xlu0 %v1562, 64
        %v1565 = vpop.permute.xlu0 %1564
        %v1567 = vadd.f32 %v1557, %v1565
        %v1568 = vtanh.pop %v1567
        %1570 = vrot.lane.b32.xlu0 %v1568, 64
        %v1571 = vpop.permute.xlu0 %1570
        %v1573 = vmul.f32 %v1551, %v1571
        %vm1574 = vcmp.gt.s32.totalorder %v1211, 2
        %v1575 = vsel %vm1574, %v1573, %v1456
        %1577 = vrot.lane.b32.xlu0 %v1567, 64
        %v1578 = vpop.permute.xlu0 %1577
        %v1580 = vsel %vm1574, %v1578, %v1461
        %s1581 = scalar_lea.vmem [#allocation2], 24
        %v1582 = vld [vmem:[%s1581] sm:$0xff]
        %v1583 = vunpack.c.l.bf16 %v1582
        %v1584 = vunpack.c.h.bf16 %v1582
        %v1586 = vsel %vm1231, %v1575, 0
        %1588 = vmatprep.subr.mxu0 %v1213
        %1589 = vmatpush1.msra.mxu0 %v1212
        %1590 = vmatprep.subr.mxu0 %v1215
        %1591 = vmatpush1.msra.mxu0 %v1214
        %1592 = vmatprep.subr.mxu0 %v1217
        %1593 = vmatpush1.msra.mxu0 %v1216
        %1594 = vmatprep.subr.mxu0 %v1219
        %1595 = vmatpush1.msra.mxu0 %v1218
        %1596 = vmatprep.subr.mxu0 %v1221
        %1597 = vmatpush1.msra.mxu0 %v1220
        %1598 = vmatprep.subr.mxu0 %v1223
        %1599 = vmatpush1.msra.mxu0 %v1222
        %1600 = vmatprep.subr.mxu0 %v1225
        %1601 = vmatpush1.msra.mxu0 %v1224
        %1602 = vmatprep.subr.mxu0 %v1227
        %1603 = vmatpush1.msra.mxu0 %v1226
        %1604 = vmatprep.subr.mxu0 0.0
        %1605 = vmatpush1.msra.mxu0 0.0
        %1606 = vmatprep.subr.mxu0 0.0
        %1607 = vmatpush1.msra.mxu0 0.0
        %1608 = vmatprep.subr.mxu0 0.0
        %1609 = vmatpush1.msra.mxu0 0.0
        %1610 = vmatprep.subr.mxu0 0.0
        %1611 = vmatpush1.msra.mxu0 0.0
        %1612 = vmatprep.subr.mxu0 0.0
        %1613 = vmatpush1.msra.mxu0 0.0
        %1614 = vmatprep.subr.mxu0 0.0
        %1615 = vmatpush1.msra.mxu0 0.0
        %1616 = vmatprep.subr.mxu0 0.0
        %1617 = vmatpush1.msra.mxu0 0.0
        %1618 = vmatprep.subr.mxu0 0.0
        %1619 = vmatpush1.msra.mxu0 0.0
        %1620 = vmatprep.subr.mxu0 0.0
        %1621 = vmatpush1.msra.mxu0 0.0
        %1622 = vmatprep.subr.mxu0 0.0
        %1623 = vmatpush1.msra.mxu0 0.0
        %1624 = vmatprep.subr.mxu0 0.0
        %1625 = vmatpush1.msra.mxu0 0.0
        %1626 = vmatprep.subr.mxu0 0.0
        %1627 = vmatpush1.msra.mxu0 0.0
        %1628 = vmatprep.subr.mxu0 0.0
        %1629 = vmatpush1.msra.mxu0 0.0
        %1630 = vmatprep.subr.mxu0 0.0
        %1631 = vmatpush1.msra.mxu0 0.0
        %1632 = vmatprep.subr.mxu0 0.0
        %1633 = vmatpush1.msra.mxu0 0.0
        %1634 = vmatprep.subr.mxu0 0.0
        %1635 = vmatpush1.msra.mxu0 0.0
        %1636 = vmatprep.subr.mxu0 0.0
        %1637 = vmatpush1.msra.mxu0 0.0
        %1638 = vmatprep.subr.mxu0 0.0
        %1639 = vmatpush1.msra.mxu0 0.0
        %1640 = vmatprep.subr.mxu0 0.0
        %1641 = vmatpush1.msra.mxu0 0.0
        %1642 = vmatprep.subr.mxu0 0.0
        %1643 = vmatpush1.msra.mxu0 0.0
        %1644 = vmatprep.subr.mxu0 0.0
        %1645 = vmatpush1.msra.mxu0 0.0
        %1646 = vmatprep.subr.mxu0 0.0
        %1647 = vmatpush1.msra.mxu0 0.0
        %1648 = vmatprep.subr.mxu0 0.0
        %1649 = vmatpush1.msra.mxu0 0.0
        %1650 = vmatprep.subr.mxu0 0.0
        %1651 = vmatpush1.msra.mxu0 0.0
        %1652 = vmatprep.mubr.f32.mxu0 0.0
        %1653 = vmatmul.mubr.f32.gmra.mrb[0].mxu0 %v1586
        %v1654 = vpop.f32.mrb[0].mxu0
        %v1655 = vadd.f32 %v1583, %v1654
        %v1656 = vpop.f32.mrb[0].mxu0
        %v1657 = vadd.f32 %v1584, %v1656
        %1658 = vdwg.mxu0
        %v1659 = vxor.u32 %v1655, 2147483648
        %v1660 = vxor.u32 %v1657, 2147483648
        %v1661 = vmul.f32 %v1659, 1.442695
        %v1662 = vpow.pop %v1661
        %v1663 = vmul.f32 %v1660, 1.442695
        %v1664 = vpow.pop %v1663
        %v1665 = vadd.f32 %v1662, 1.0
        %v1666 = vadd.f32 %v1664, 1.0
        %v1667 = vrcp.pop %v1665
        %v1668 = vmul.f32 1.0, %v1667
        %v1669 = vrcp.pop %v1666
        %v1670 = vmul.f32 1.0, %v1669
        %v1671 = vtanh.pop %v1657
        %1673 = vrot.lane.b32.xlu0 %v1580, 64
        %v1674 = vpop.permute.xlu0 %1673
        %v1676 = vmul.f32 %v1668, %v1674
        %1678 = vrot.lane.b32.xlu0 %v1671, 64
        %v1679 = vpop.permute.xlu0 %1678
        %v1681 = vmul.f32 %v1668, %v1679
        %1683 = vrot.lane.b32.xlu0 %v1681, 64
        %v1684 = vpop.permute.xlu0 %1683
        %v1686 = vadd.f32 %v1676, %v1684
        %v1687 = vtanh.pop %v1686
        %1689 = vrot.lane.b32.xlu0 %v1687, 64
        %v1690 = vpop.permute.xlu0 %1689
        %v1692 = vmul.f32 %v1670, %v1690
        %vm1693 = vcmp.gt.s32.totalorder %v1211, 3
        %v1694 = vsel %vm1693, %v1692, %v1575
        %1696 = vrot.lane.b32.xlu0 %v1686, 64
        %v1697 = vpop.permute.xlu0 %1696
        %v1699 = vsel %vm1693, %v1697, %v1580
        %s1700 = scalar_lea.vmem [#allocation2], 32
        %v1701 = vld [vmem:[%s1700] sm:$0xff]
        %v1702 = vunpack.c.l.bf16 %v1701
        %v1703 = vunpack.c.h.bf16 %v1701
        %v1705 = vsel %vm1231, %v1694, 0
        %1707 = vmatprep.subr.mxu0 %v1213
        %1708 = vmatpush1.msra.mxu0 %v1212
        %1709 = vmatprep.subr.mxu0 %v1215
        %1710 = vmatpush1.msra.mxu0 %v1214
        %1711 = vmatprep.subr.mxu0 %v1217
        %1712 = vmatpush1.msra.mxu0 %v1216
        %1713 = vmatprep.subr.mxu0 %v1219
        %1714 = vmatpush1.msra.mxu0 %v1218
        %1715 = vmatprep.subr.mxu0 %v1221
        %1716 = vmatpush1.msra.mxu0 %v1220
        %1717 = vmatprep.subr.mxu0 %v1223
        %1718 = vmatpush1.msra.mxu0 %v1222
        %1719 = vmatprep.subr.mxu0 %v1225
        %1720 = vmatpush1.msra.mxu0 %v1224
        %1721 = vmatprep.subr.mxu0 %v1227
        %1722 = vmatpush1.msra.mxu0 %v1226
        %1723 = vmatprep.subr.mxu0 0.0
        %1724 = vmatpush1.msra.mxu0 0.0
        %1725 = vmatprep.subr.mxu0 0.0
        %1726 = vmatpush1.msra.mxu0 0.0
        %1727 = vmatprep.subr.mxu0 0.0
        %1728 = vmatpush1.msra.mxu0 0.0
        %1729 = vmatprep.subr.mxu0 0.0
        %1730 = vmatpush1.msra.mxu0 0.0
        %1731 = vmatprep.subr.mxu0 0.0
        %1732 = vmatpush1.msra.mxu0 0.0
        %1733 = vmatprep.subr.mxu0 0.0
        %1734 = vmatpush1.msra.mxu0 0.0
        %1735 = vmatprep.subr.mxu0 0.0
        %1736 = vmatpush1.msra.mxu0 0.0
        %1737 = vmatprep.subr.mxu0 0.0
        %1738 = vmatpush1.msra.mxu0 0.0
        %1739 = vmatprep.subr.mxu0 0.0
        %1740 = vmatpush1.msra.mxu0 0.0
        %1741 = vmatprep.subr.mxu0 0.0
        %1742 = vmatpush1.msra.mxu0 0.0
        %1743 = vmatprep.subr.mxu0 0.0
        %1744 = vmatpush1.msra.mxu0 0.0
        %1745 = vmatprep.subr.mxu0 0.0
        %1746 = vmatpush1.msra.mxu0 0.0
        %1747 = vmatprep.subr.mxu0 0.0
        %1748 = vmatpush1.msra.mxu0 0.0
        %1749 = vmatprep.subr.mxu0 0.0
        %1750 = vmatpush1.msra.mxu0 0.0
        %1751 = vmatprep.subr.mxu0 0.0
        %1752 = vmatpush1.msra.mxu0 0.0
        %1753 = vmatprep.subr.mxu0 0.0
        %1754 = vmatpush1.msra.mxu0 0.0
        %1755 = vmatprep.subr.mxu0 0.0
        %1756 = vmatpush1.msra.mxu0 0.0
        %1757 = vmatprep.subr.mxu0 0.0
        %1758 = vmatpush1.msra.mxu0 0.0
        %1759 = vmatprep.subr.mxu0 0.0
        %1760 = vmatpush1.msra.mxu0 0.0
        %1761 = vmatprep.subr.mxu0 0.0
        %1762 = vmatpush1.msra.mxu0 0.0
        %1763 = vmatprep.subr.mxu0 0.0
        %1764 = vmatpush1.msra.mxu0 0.0
        %1765 = vmatprep.subr.mxu0 0.0
        %1766 = vmatpush1.msra.mxu0 0.0
        %1767 = vmatprep.subr.mxu0 0.0
        %1768 = vmatpush1.msra.mxu0 0.0
        %1769 = vmatprep.subr.mxu0 0.0
        %1770 = vmatpush1.msra.mxu0 0.0
        %1771 = vmatprep.mubr.f32.mxu0 0.0
        %1772 = vmatmul.mubr.f32.gmra.mrb[0].mxu0 %v1705
        %v1773 = vpop.f32.mrb[0].mxu0
        %v1774 = vadd.f32 %v1702, %v1773
        %v1775 = vpop.f32.mrb[0].mxu0
        %v1776 = vadd.f32 %v1703, %v1775
        %1777 = vdwg.mxu0
        %v1778 = vxor.u32 %v1774, 2147483648
        %v1779 = vxor.u32 %v1776, 2147483648
        %v1780 = vmul.f32 %v1778, 1.442695
        %v1781 = vpow.pop %v1780
        %v1782 = vmul.f32 %v1779, 1.442695
        %v1783 = vpow.pop %v1782
        %v1784 = vadd.f32 %v1781, 1.0
        %v1785 = vadd.f32 %v1783, 1.0
        %v1786 = vrcp.pop %v1784
        %v1787 = vmul.f32 1.0, %v1786
        %v1788 = vrcp.pop %v1785
        %v1789 = vmul.f32 1.0, %v1788
        %v1790 = vtanh.pop %v1776
        %1792 = vrot.lane.b32.xlu0 %v1699, 64
        %v1793 = vpop.permute.xlu0 %1792
        %v1795 = vmul.f32 %v1787, %v1793
        %1797 = vrot.lane.b32.xlu0 %v1790, 64
        %v1798 = vpop.permute.xlu0 %1797
        %v1800 = vmul.f32 %v1787, %v1798
        %1802 = vrot.lane.b32.xlu0 %v1800, 64
        %v1803 = vpop.permute.xlu0 %1802
        %v1805 = vadd.f32 %v1795, %v1803
        %v1806 = vtanh.pop %v1805
        %1808 = vrot.lane.b32.xlu0 %v1806, 64
        %v1809 = vpop.permute.xlu0 %1808
        %v1811 = vmul.f32 %v1789, %v1809
        %vm1812 = vcmp.gt.s32.totalorder %v1211, 4
        %v1813 = vsel %vm1812, %v1811, %v1694
        %1815 = vrot.lane.b32.xlu0 %v1805, 64
        %v1816 = vpop.permute.xlu0 %1815
        %v1818 = vsel %vm1812, %v1816, %v1699
        %s1819 = scalar_lea.vmem [#allocation2], 40
        %v1820 = vld [vmem:[%s1819] sm:$0xff]
        %v1821 = vunpack.c.l.bf16 %v1820
        %v1822 = vunpack.c.h.bf16 %v1820
        %v1824 = vsel %vm1231, %v1813, 0
        %1826 = vmatprep.subr.mxu0 %v1213
        %1827 = vmatpush1.msra.mxu0 %v1212
        %1828 = vmatprep.subr.mxu0 %v1215
        %1829 = vmatpush1.msra.mxu0 %v1214
        %1830 = vmatprep.subr.mxu0 %v1217
        %1831 = vmatpush1.msra.mxu0 %v1216
        %1832 = vmatprep.subr.mxu0 %v1219
        %1833 = vmatpush1.msra.mxu0 %v1218
        %1834 = vmatprep.subr.mxu0 %v1221
        %1835 = vmatpush1.msra.mxu0 %v1220
        %1836 = vmatprep.subr.mxu0 %v1223
        %1837 = vmatpush1.msra.mxu0 %v1222
        %1838 = vmatprep.subr.mxu0 %v1225
        %1839 = vmatpush1.msra.mxu0 %v1224
        %1840 = vmatprep.subr.mxu0 %v1227
        %1841 = vmatpush1.msra.mxu0 %v1226
        %1842 = vmatprep.subr.mxu0 0.0
        %1843 = vmatpush1.msra.mxu0 0.0
        %1844 = vmatprep.subr.mxu0 0.0
        %1845 = vmatpush1.msra.mxu0 0.0
        %1846 = vmatprep.subr.mxu0 0.0
        %1847 = vmatpush1.msra.mxu0 0.0
        %1848 = vmatprep.subr.mxu0 0.0
        %1849 = vmatpush1.msra.mxu0 0.0
        %1850 = vmatprep.subr.mxu0 0.0
        %1851 = vmatpush1.msra.mxu0 0.0
        %1852 = vmatprep.subr.mxu0 0.0
        %1853 = vmatpush1.msra.mxu0 0.0
        %1854 = vmatprep.subr.mxu0 0.0
        %1855 = vmatpush1.msra.mxu0 0.0
        %1856 = vmatprep.subr.mxu0 0.0
        %1857 = vmatpush1.msra.mxu0 0.0
        %1858 = vmatprep.subr.mxu0 0.0
        %1859 = vmatpush1.msra.mxu0 0.0
        %1860 = vmatprep.subr.mxu0 0.0
        %1861 = vmatpush1.msra.mxu0 0.0
        %1862 = vmatprep.subr.mxu0 0.0
        %1863 = vmatpush1.msra.mxu0 0.0
        %1864 = vmatprep.subr.mxu0 0.0
        %1865 = vmatpush1.msra.mxu0 0.0
        %1866 = vmatprep.subr.mxu0 0.0
        %1867 = vmatpush1.msra.mxu0 0.0
        %1868 = vmatprep.subr.mxu0 0.0
        %1869 = vmatpush1.msra.mxu0 0.0
        %1870 = vmatprep.subr.mxu0 0.0
        %1871 = vmatpush1.msra.mxu0 0.0
        %1872 = vmatprep.subr.mxu0 0.0
        %1873 = vmatpush1.msra.mxu0 0.0
        %1874 = vmatprep.subr.mxu0 0.0
        %1875 = vmatpush1.msra.mxu0 0.0
        %1876 = vmatprep.subr.mxu0 0.0
        %1877 = vmatpush1.msra.mxu0 0.0
        %1878 = vmatprep.subr.mxu0 0.0
        %1879 = vmatpush1.msra.mxu0 0.0
        %1880 = vmatprep.subr.mxu0 0.0
        %1881 = vmatpush1.msra.mxu0 0.0
        %1882 = vmatprep.subr.mxu0 0.0
        %1883 = vmatpush1.msra.mxu0 0.0
        %1884 = vmatprep.subr.mxu0 0.0
        %1885 = vmatpush1.msra.mxu0 0.0
        %1886 = vmatprep.subr.mxu0 0.0
        %1887 = vmatpush1.msra.mxu0 0.0
        %1888 = vmatprep.subr.mxu0 0.0
        %1889 = vmatpush1.msra.mxu0 0.0
        %1890 = vmatprep.mubr.f32.mxu0 0.0
        %1891 = vmatmul.mubr.f32.gmra.mrb[0].mxu0 %v1824
        %v1892 = vpop.f32.mrb[0].mxu0
        %v1893 = vadd.f32 %v1821, %v1892
        %v1894 = vpop.f32.mrb[0].mxu0
        %v1895 = vadd.f32 %v1822, %v1894
        %1896 = vdwg.mxu0
        %v1897 = vxor.u32 %v1893, 2147483648
        %v1898 = vxor.u32 %v1895, 2147483648
        %v1899 = vmul.f32 %v1897, 1.442695
        %v1900 = vpow.pop %v1899
        %v1901 = vmul.f32 %v1898, 1.442695
        %v1902 = vpow.pop %v1901
        %v1903 = vadd.f32 %v1900, 1.0
        %v1904 = vadd.f32 %v1902, 1.0
        %v1905 = vrcp.pop %v1903
        %v1906 = vmul.f32 1.0, %v1905
        %v1907 = vrcp.pop %v1904
        %v1908 = vmul.f32 1.0, %v1907
        %v1909 = vtanh.pop %v1895
        %1911 = vrot.lane.b32.xlu0 %v1818, 64
        %v1912 = vpop.permute.xlu0 %1911
        %v1914 = vmul.f32 %v1906, %v1912
        %1916 = vrot.lane.b32.xlu0 %v1909, 64
        %v1917 = vpop.permute.xlu0 %1916
        %v1919 = vmul.f32 %v1906, %v1917
        %1921 = vrot.lane.b32.xlu0 %v1919, 64
        %v1922 = vpop.permute.xlu0 %1921
        %v1924 = vadd.f32 %v1914, %v1922
        %v1925 = vtanh.pop %v1924
        %1927 = vrot.lane.b32.xlu0 %v1925, 64
        %v1928 = vpop.permute.xlu0 %1927
        %v1930 = vmul.f32 %v1908, %v1928
        %vm1931 = vcmp.gt.s32.totalorder %v1211, 5
        %v1932 = vsel %vm1931, %v1930, %v1813
        %1934 = vrot.lane.b32.xlu0 %v1924, 64
        %v1935 = vpop.permute.xlu0 %1934
        %v1937 = vsel %vm1931, %v1935, %v1818
        %v1938 = vld [vmem:[%s1197] sm:$0xff]
        %v1939 = vunpack.c.l.bf16 %v1938
        %v1940 = vunpack.c.h.bf16 %v1938
        %v1942 = vsel %vm1231, %v1932, 0
        %1944 = vmatprep.subr.mxu0 %v1213
        %1945 = vmatpush1.msra.mxu0 %v1212
        %1946 = vmatprep.subr.mxu0 %v1215
        %1947 = vmatpush1.msra.mxu0 %v1214
        %1948 = vmatprep.subr.mxu0 %v1217
        %1949 = vmatpush1.msra.mxu0 %v1216
        %1950 = vmatprep.subr.mxu0 %v1219
        %1951 = vmatpush1.msra.mxu0 %v1218
        %1952 = vmatprep.subr.mxu0 %v1221
        %1953 = vmatpush1.msra.mxu0 %v1220
        %1954 = vmatprep.subr.mxu0 %v1223
        %1955 = vmatpush1.msra.mxu0 %v1222
        %1956 = vmatprep.subr.mxu0 %v1225
        %1957 = vmatpush1.msra.mxu0 %v1224
        %1958 = vmatprep.subr.mxu0 %v1227
        %1959 = vmatpush1.msra.mxu0 %v1226
        %1960 = vmatprep.subr.mxu0 0.0
        %1961 = vmatpush1.msra.mxu0 0.0
        %1962 = vmatprep.subr.mxu0 0.0
        %1963 = vmatpush1.msra.mxu0 0.0
        %1964 = vmatprep.subr.mxu0 0.0
        %1965 = vmatpush1.msra.mxu0 0.0
        %1966 = vmatprep.subr.mxu0 0.0
        %1967 = vmatpush1.msra.mxu0 0.0
        %1968 = vmatprep.subr.mxu0 0.0
        %1969 = vmatpush1.msra.mxu0 0.0
        %1970 = vmatprep.subr.mxu0 0.0
        %1971 = vmatpush1.msra.mxu0 0.0
        %1972 = vmatprep.subr.mxu0 0.0
        %1973 = vmatpush1.msra.mxu0 0.0
        %1974 = vmatprep.subr.mxu0 0.0
        %1975 = vmatpush1.msra.mxu0 0.0
        %1976 = vmatprep.subr.mxu0 0.0
        %1977 = vmatpush1.msra.mxu0 0.0
        %1978 = vmatprep.subr.mxu0 0.0
        %1979 = vmatpush1.msra.mxu0 0.0
        %1980 = vmatprep.subr.mxu0 0.0
        %1981 = vmatpush1.msra.mxu0 0.0
        %1982 = vmatprep.subr.mxu0 0.0
        %1983 = vmatpush1.msra.mxu0 0.0
        %1984 = vmatprep.subr.mxu0 0.0
        %1985 = vmatpush1.msra.mxu0 0.0
        %1986 = vmatprep.subr.mxu0 0.0
        %1987 = vmatpush1.msra.mxu0 0.0
        %1988 = vmatprep.subr.mxu0 0.0
        %1989 = vmatpush1.msra.mxu0 0.0
        %1990 = vmatprep.subr.mxu0 0.0
        %1991 = vmatpush1.msra.mxu0 0.0
        %1992 = vmatprep.subr.mxu0 0.0
        %1993 = vmatpush1.msra.mxu0 0.0
        %1994 = vmatprep.subr.mxu0 0.0
        %1995 = vmatpush1.msra.mxu0 0.0
        %1996 = vmatprep.subr.mxu0 0.0
        %1997 = vmatpush1.msra.mxu0 0.0
        %1998 = vmatprep.subr.mxu0 0.0
        %1999 = vmatpush1.msra.mxu0 0.0
        %2000 = vmatprep.subr.mxu0 0.0
        %2001 = vmatpush1.msra.mxu0 0.0
        %2002 = vmatprep.subr.mxu0 0.0
        %2003 = vmatpush1.msra.mxu0 0.0
        %2004 = vmatprep.subr.mxu0 0.0
        %2005 = vmatpush1.msra.mxu0 0.0
        %2006 = vmatprep.subr.mxu0 0.0
        %2007 = vmatpush1.msra.mxu0 0.0
        %2008 = vmatprep.mubr.f32.mxu0 0.0
        %2009 = vmatmul.mubr.f32.gmra.mrb[0].mxu0 %v1942
        %v2010 = vpop.f32.mrb[0].mxu0
        %v2011 = vadd.f32 %v1939, %v2010
        %v2012 = vpop.f32.mrb[0].mxu0
        %v2013 = vadd.f32 %v1940, %v2012
        %2014 = vdwg.mxu0
        %v2015 = vxor.u32 %v2011, 2147483648
        %v2016 = vxor.u32 %v2013, 2147483648
        %v2017 = vmul.f32 %v2015, 1.442695
        %v2018 = vpow.pop %v2017
        %v2019 = vmul.f32 %v2016, 1.442695
        %v2020 = vpow.pop %v2019
        %v2021 = vadd.f32 %v2018, 1.0
        %v2022 = vadd.f32 %v2020, 1.0
        %v2023 = vrcp.pop %v2021
        %v2024 = vmul.f32 1.0, %v2023
        %v2025 = vrcp.pop %v2022
        %v2026 = vmul.f32 1.0, %v2025
        %v2027 = vtanh.pop %v2013
        %2029 = vrot.lane.b32.xlu0 %v1937, 64
        %v2030 = vpop.permute.xlu0 %2029
        %v2032 = vmul.f32 %v2024, %v2030
        %2034 = vrot.lane.b32.xlu0 %v2027, 64
        %v2035 = vpop.permute.xlu0 %2034
        %v2037 = vmul.f32 %v2024, %v2035
        %2039 = vrot.lane.b32.xlu0 %v2037, 64
        %v2040 = vpop.permute.xlu0 %2039
        %v2042 = vadd.f32 %v2032, %v2040
        %v2043 = vtanh.pop %v2042
        %2045 = vrot.lane.b32.xlu0 %v2043, 64
        %v2046 = vpop.permute.xlu0 %2045
        %v2048 = vmul.f32 %v2026, %v2046
        %vm2049 = vcmp.gt.s32.totalorder %v1211, 6
        %v2050 = vsel %vm2049, %v2048, %v1932
        %2052 = vrot.lane.b32.xlu0 %v2042, 64
        %v2053 = vpop.permute.xlu0 %2052
        %v2055 = vsel %vm2049, %v2053, %v1937
        %s2056 = scalar_lea.vmem [#allocation2], 56
        %v2057 = vld [vmem:[%s2056] sm:$0xff]
        %v2058 = vunpack.c.l.bf16 %v2057
        %v2059 = vunpack.c.h.bf16 %v2057
        %v2061 = vsel %vm1231, %v2050, 0
        %2063 = vmatprep.subr.mxu0 %v1213
        %2064 = vmatpush1.msra.mxu0 %v1212
        %2065 = vmatprep.subr.mxu0 %v1215
        %2066 = vmatpush1.msra.mxu0 %v1214
        %2067 = vmatprep.subr.mxu0 %v1217
        %2068 = vmatpush1.msra.mxu0 %v1216
        %2069 = vmatprep.subr.mxu0 %v1219
        %2070 = vmatpush1.msra.mxu0 %v1218
        %2071 = vmatprep.subr.mxu0 %v1221
        %2072 = vmatpush1.msra.mxu0 %v1220
        %2073 = vmatprep.subr.mxu0 %v1223
        %2074 = vmatpush1.msra.mxu0 %v1222
        %2075 = vmatprep.subr.mxu0 %v1225
        %2076 = vmatpush1.msra.mxu0 %v1224
        %2077 = vmatprep.subr.mxu0 %v1227
        %2078 = vmatpush1.msra.mxu0 %v1226
        %2079 = vmatprep.subr.mxu0 0.0
        %2080 = vmatpush1.msra.mxu0 0.0
        %2081 = vmatprep.subr.mxu0 0.0
        %2082 = vmatpush1.msra.mxu0 0.0
        %2083 = vmatprep.subr.mxu0 0.0
        %2084 = vmatpush1.msra.mxu0 0.0
        %2085 = vmatprep.subr.mxu0 0.0
        %2086 = vmatpush1.msra.mxu0 0.0
        %2087 = vmatprep.subr.mxu0 0.0
        %2088 = vmatpush1.msra.mxu0 0.0
        %2089 = vmatprep.subr.mxu0 0.0
        %2090 = vmatpush1.msra.mxu0 0.0
        %2091 = vmatprep.subr.mxu0 0.0
        %2092 = vmatpush1.msra.mxu0 0.0
        %2093 = vmatprep.subr.mxu0 0.0
        %2094 = vmatpush1.msra.mxu0 0.0
        %2095 = vmatprep.subr.mxu0 0.0
        %2096 = vmatpush1.msra.mxu0 0.0
        %2097 = vmatprep.subr.mxu0 0.0
        %2098 = vmatpush1.msra.mxu0 0.0
        %2099 = vmatprep.subr.mxu0 0.0
        %2100 = vmatpush1.msra.mxu0 0.0
        %2101 = vmatprep.subr.mxu0 0.0
        %2102 = vmatpush1.msra.mxu0 0.0
        %2103 = vmatprep.subr.mxu0 0.0
        %2104 = vmatpush1.msra.mxu0 0.0
        %2105 = vmatprep.subr.mxu0 0.0
        %2106 = vmatpush1.msra.mxu0 0.0
        %2107 = vmatprep.subr.mxu0 0.0
        %2108 = vmatpush1.msra.mxu0 0.0
        %2109 = vmatprep.subr.mxu0 0.0
        %2110 = vmatpush1.msra.mxu0 0.0
        %2111 = vmatprep.subr.mxu0 0.0
        %2112 = vmatpush1.msra.mxu0 0.0
        %2113 = vmatprep.subr.mxu0 0.0
        %2114 = vmatpush1.msra.mxu0 0.0
        %2115 = vmatprep.subr.mxu0 0.0
        %2116 = vmatpush1.msra.mxu0 0.0
        %2117 = vmatprep.subr.mxu0 0.0
        %2118 = vmatpush1.msra.mxu0 0.0
        %2119 = vmatprep.subr.mxu0 0.0
        %2120 = vmatpush1.msra.mxu0 0.0
        %2121 = vmatprep.subr.mxu0 0.0
        %2122 = vmatpush1.msra.mxu0 0.0
        %2123 = vmatprep.subr.mxu0 0.0
        %2124 = vmatpush1.msra.mxu0 0.0
        %2125 = vmatprep.subr.mxu0 0.0
        %2126 = vmatpush1.msra.mxu0 0.0
        %2127 = vmatprep.mubr.f32.mxu0 0.0
        %2128 = vmatmul.mubr.f32.gmra.mrb[0].mxu0 %v2061
        %v2129 = vpop.f32.mrb[0].mxu0
        %v2130 = vadd.f32 %v2058, %v2129
        %v2131 = vpop.f32.mrb[0].mxu0
        %v2132 = vadd.f32 %v2059, %v2131
        %2133 = vdwg.mxu0
        %v2134 = vxor.u32 %v2130, 2147483648
        %v2135 = vxor.u32 %v2132, 2147483648
        %v2136 = vmul.f32 %v2134, 1.442695
        %v2137 = vpow.pop %v2136
        %v2138 = vmul.f32 %v2135, 1.442695
        %v2139 = vpow.pop %v2138
        %v2140 = vadd.f32 %v2137, 1.0
        %v2141 = vadd.f32 %v2139, 1.0
        %v2142 = vrcp.pop %v2140
        %v2143 = vmul.f32 1.0, %v2142
        %v2144 = vrcp.pop %v2141
        %v2145 = vmul.f32 1.0, %v2144
        %v2146 = vtanh.pop %v2132
        %2148 = vrot.lane.b32.xlu0 %v2055, 64
        %v2149 = vpop.permute.xlu0 %2148
        %v2151 = vmul.f32 %v2143, %v2149
        %2153 = vrot.lane.b32.xlu0 %v2146, 64
        %v2154 = vpop.permute.xlu0 %2153
        %v2156 = vmul.f32 %v2143, %v2154
        %2158 = vrot.lane.b32.xlu0 %v2156, 64
        %v2159 = vpop.permute.xlu0 %2158
        %v2161 = vadd.f32 %v2151, %v2159
        %v2162 = vtanh.pop %v2161
        %2164 = vrot.lane.b32.xlu0 %v2162, 64
        %v2165 = vpop.permute.xlu0 %2164
        %v2167 = vmul.f32 %v2145, %v2165
        %vm2168 = vcmp.gt.s32.totalorder %v1211, 7
        %v2169 = vsel %vm2168, %v2167, %v2050
        %v2170 = vld [vmem:[%s10] sm:$0xff]
        %v2171 = vld [vmem:[%s10 + $0x8] sm:$0xff]
        %v2172 = vld [vmem:[%s10 + $0x10] sm:$0xff]
        %v2173 = vld [vmem:[%s10 + $0x18] sm:$0xff]
        %v2174 = vld [vmem:[%s10 + $0x20] sm:$0xff]
        %v2175 = vld [vmem:[%s10 + $0x28] sm:$0xff]
        %v2176 = vld [vmem:[%s10 + $0x30] sm:$0xff]
        %v2177 = vld [vmem:[%s10 + $0x38] sm:$0xff]
        %v2178 = vld [vmem:[%s11] sm:$0x1]
        %v2180 = vlaneseq
        %v2181 = vshrl.u32 %v2180, 7
        %v2182 = vsub.s32 0, %v2181
        %v2183 = vrot.slane %v2178, %v2182
        %v2186 = vsel %vm1231, %v2169, 0
        %2188 = vmatprep.subr.mxu0 0.0
        %2189 = vmatpush1.msra.mxu0 %v2170
        %2190 = vmatprep.subr.mxu0 0.0
        %2191 = vmatpush1.msra.mxu0 %v2171
        %2192 = vmatprep.subr.mxu0 0.0
        %2193 = vmatpush1.msra.mxu0 %v2172
        %2194 = vmatprep.subr.mxu0 0.0
        %2195 = vmatpush1.msra.mxu0 %v2173
        %2196 = vmatprep.subr.mxu0 0.0
        %2197 = vmatpush1.msra.mxu0 %v2174
        %2198 = vmatprep.subr.mxu0 0.0
        %2199 = vmatpush1.msra.mxu0 %v2175
        %2200 = vmatprep.subr.mxu0 0.0
        %2201 = vmatpush1.msra.mxu0 %v2176
        %2202 = vmatprep.subr.mxu0 0.0
        %2203 = vmatpush1.msra.mxu0 %v2177
        %2204 = vmatprep.subr.mxu0 0.0
        %2205 = vmatpush1.msra.mxu0 0.0
        %2206 = vmatprep.subr.mxu0 0.0
        %2207 = vmatpush1.msra.mxu0 0.0
        %2208 = vmatprep.subr.mxu0 0.0
        %2209 = vmatpush1.msra.mxu0 0.0
        %2210 = vmatprep.subr.mxu0 0.0
        %2211 = vmatpush1.msra.mxu0 0.0
        %2212 = vmatprep.subr.mxu0 0.0
        %2213 = vmatpush1.msra.mxu0 0.0
        %2214 = vmatprep.subr.mxu0 0.0
        %2215 = vmatpush1.msra.mxu0 0.0
        %2216 = vmatprep.subr.mxu0 0.0
        %2217 = vmatpush1.msra.mxu0 0.0
        %2218 = vmatprep.subr.mxu0 0.0
        %2219 = vmatpush1.msra.mxu0 0.0
        %2220 = vmatprep.subr.mxu0 0.0
        %2221 = vmatpush1.msra.mxu0 0.0
        %2222 = vmatprep.subr.mxu0 0.0
        %2223 = vmatpush1.msra.mxu0 0.0
        %2224 = vmatprep.subr.mxu0 0.0
        %2225 = vmatpush1.msra.mxu0 0.0
        %2226 = vmatprep.subr.mxu0 0.0
        %2227 = vmatpush1.msra.mxu0 0.0
        %2228 = vmatprep.subr.mxu0 0.0
        %2229 = vmatpush1.msra.mxu0 0.0
        %2230 = vmatprep.subr.mxu0 0.0
        %2231 = vmatpush1.msra.mxu0 0.0
        %2232 = vmatprep.subr.mxu0 0.0
        %2233 = vmatpush1.msra.mxu0 0.0
        %2234 = vmatprep.subr.mxu0 0.0
        %2235 = vmatpush1.msra.mxu0 0.0
        %2236 = vmatprep.subr.mxu0 0.0
        %2237 = vmatpush1.msra.mxu0 0.0
        %2238 = vmatprep.subr.mxu0 0.0
        %2239 = vmatpush1.msra.mxu0 0.0
        %2240 = vmatprep.subr.mxu0 0.0
        %2241 = vmatpush1.msra.mxu0 0.0
        %2242 = vmatprep.subr.mxu0 0.0
        %2243 = vmatpush1.msra.mxu0 0.0
        %2244 = vmatprep.subr.mxu0 0.0
        %2245 = vmatpush1.msra.mxu0 0.0
        %2246 = vmatprep.subr.mxu0 0.0
        %2247 = vmatpush1.msra.mxu0 0.0
        %2248 = vmatprep.subr.mxu0 0.0
        %2249 = vmatpush1.msra.mxu0 0.0
        %2250 = vmatprep.subr.mxu0 0.0
        %2251 = vmatpush1.msra.mxu0 0.0
        %2252 = vmatprep.mubr.f32.mxu0 0.0
        %2253 = vmatmul.mubr.f32.gmra.mrb[0].mxu0 %v2186
        %v2254 = vpop.f32.mrb[0].mxu0
        %v2255 = vadd.f32 %v2183, %v2254
        %v2256 = vpop.f32.mrb[0].mxu0
        %2257 = vdwg.mxu0
        %v2258 = vld [vmem:[%s674] sm:$0xff]
        %v2259 = vld [vmem:[#allocation13] sm:$0xff]
        %v2260 = vld [vmem:[#allocation13 + $0x8] sm:$0xff]
        %v2261 = vld [vmem:[#allocation13 + $0x10] sm:$0xff]
        %v2262 = vld [vmem:[#allocation13 + $0x18] sm:$0xff]
        %v2263 = vld [vmem:[%s13] sm:$0xff]
        %v2264 = vld [vmem:[%s13 + $0x8] sm:$0xff]
        %v2265 = vld [vmem:[%s13 + $0x10] sm:$0xff]
        %v2266 = vld [vmem:[%s13 + $0x18] sm:$0xff]
        %vm2267 = vcmask 261120
        %v2269 = vsel %vm2267, %v2255, 0
        %2271 = vmatprep.subr.mxu0 0.0
        %2272 = vmatpush1.msra.mxu0 %v2263
        %2273 = vmatprep.subr.mxu0 0.0
        %2274 = vmatpush1.msra.mxu0 %v2264
        %2275 = vmatprep.subr.mxu0 0.0
        %2276 = vmatpush1.msra.mxu0 %v2265
        %2277 = vmatprep.subr.mxu0 0.0
        %2278 = vmatpush1.msra.mxu0 %v2266
        %2279 = vmatprep.subr.mxu0 0.0
        %2280 = vmatpush1.msra.mxu0 0.0
        %2281 = vmatprep.subr.mxu0 0.0
        %2282 = vmatpush1.msra.mxu0 0.0
        %2283 = vmatprep.subr.mxu0 0.0
        %2284 = vmatpush1.msra.mxu0 0.0
        %2285 = vmatprep.subr.mxu0 0.0
        %2286 = vmatpush1.msra.mxu0 0.0
        %2287 = vmatprep.subr.mxu0 0.0
        %2288 = vmatpush1.msra.mxu0 0.0
        %2289 = vmatprep.subr.mxu0 0.0
        %2290 = vmatpush1.msra.mxu0 0.0
        %2291 = vmatprep.subr.mxu0 0.0
        %2292 = vmatpush1.msra.mxu0 0.0
        %2293 = vmatprep.subr.mxu0 0.0
        %2294 = vmatpush1.msra.mxu0 0.0
        %2295 = vmatprep.subr.mxu0 0.0
        %2296 = vmatpush1.msra.mxu0 0.0
        %2297 = vmatprep.subr.mxu0 0.0
        %2298 = vmatpush1.msra.mxu0 0.0
        %2299 = vmatprep.subr.mxu0 0.0
        %2300 = vmatpush1.msra.mxu0 0.0
        %2301 = vmatprep.subr.mxu0 0.0
        %2302 = vmatpush1.msra.mxu0 0.0
        %2303 = vmatprep.subr.mxu0 0.0
        %2304 = vmatpush1.msra.mxu0 0.0
        %2305 = vmatprep.subr.mxu0 0.0
        %2306 = vmatpush1.msra.mxu0 0.0
        %2307 = vmatprep.subr.mxu0 0.0
        %2308 = vmatpush1.msra.mxu0 0.0
        %2309 = vmatprep.subr.mxu0 0.0
        %2310 = vmatpush1.msra.mxu0 0.0
        %2311 = vmatprep.subr.mxu0 0.0
        %2312 = vmatpush1.msra.mxu0 0.0
        %2313 = vmatprep.subr.mxu0 0.0
        %2314 = vmatpush1.msra.mxu0 0.0
        %2315 = vmatprep.subr.mxu0 0.0
        %2316 = vmatpush1.msra.mxu0 0.0
        %2317 = vmatprep.subr.mxu0 0.0
        %2318 = vmatpush1.msra.mxu0 0.0
        %2319 = vmatprep.subr.mxu0 0.0
        %2320 = vmatpush1.msra.mxu0 0.0
        %2321 = vmatprep.subr.mxu0 0.0
        %2322 = vmatpush1.msra.mxu0 0.0
        %2323 = vmatprep.subr.mxu0 0.0
        %2324 = vmatpush1.msra.mxu0 0.0
        %2325 = vmatprep.subr.mxu0 0.0
        %2326 = vmatpush1.msra.mxu0 0.0
        %2327 = vmatprep.subr.mxu0 0.0
        %2328 = vmatpush1.msra.mxu0 0.0
        %2329 = vmatprep.subr.mxu0 0.0
        %2330 = vmatpush1.msra.mxu0 0.0
        %2331 = vmatprep.subr.mxu0 0.0
        %2332 = vmatpush1.msra.mxu0 0.0
        %2333 = vmatprep.subr.mxu0 0.0
        %2334 = vmatpush1.msra.mxu0 0.0
        %2335 = vmatprep.mubr.f32.mxu0 0.0
        %2336 = vmatmul.mubr.f32.gmra.mrb[0].mxu0 %v2269
        %v2337 = vpop.f32.mrb[0].mxu0
        %v2338 = vadd.f32 0.0, %v2337
        %v2339 = vpop.f32.mrb[0].mxu0
        %2340 = vdwg.mxu0
        %v2342 = vsel %vm2267, %v2258, 0
        %2344 = vmatprep.subr.mxu0 0.0
        %2345 = vmatpush1.msra.mxu0 %v2259
        %2346 = vmatprep.subr.mxu0 0.0
        %2347 = vmatpush1.msra.mxu0 %v2260
        %2348 = vmatprep.subr.mxu0 0.0
        %2349 = vmatpush1.msra.mxu0 %v2261
        %2350 = vmatprep.subr.mxu0 0.0
        %2351 = vmatpush1.msra.mxu0 %v2262
        %2352 = vmatprep.subr.mxu0 0.0
        %2353 = vmatpush1.msra.mxu0 0.0
        %2354 = vmatprep.subr.mxu0 0.0
        %2355 = vmatpush1.msra.mxu0 0.0
        %2356 = vmatprep.subr.mxu0 0.0
        %2357 = vmatpush1.msra.mxu0 0.0
        %2358 = vmatprep.subr.mxu0 0.0
        %2359 = vmatpush1.msra.mxu0 0.0
        %2360 = vmatprep.subr.mxu0 0.0
        %2361 = vmatpush1.msra.mxu0 0.0
        %2362 = vmatprep.subr.mxu0 0.0
        %2363 = vmatpush1.msra.mxu0 0.0
        %2364 = vmatprep.subr.mxu0 0.0
        %2365 = vmatpush1.msra.mxu0 0.0
        %2366 = vmatprep.subr.mxu0 0.0
        %2367 = vmatpush1.msra.mxu0 0.0
        %2368 = vmatprep.subr.mxu0 0.0
        %2369 = vmatpush1.msra.mxu0 0.0
        %2370 = vmatprep.subr.mxu0 0.0
        %2371 = vmatpush1.msra.mxu0 0.0
        %2372 = vmatprep.subr.mxu0 0.0
        %2373 = vmatpush1.msra.mxu0 0.0
        %2374 = vmatprep.subr.mxu0 0.0
        %2375 = vmatpush1.msra.mxu0 0.0
        %2376 = vmatprep.subr.mxu0 0.0
        %2377 = vmatpush1.msra.mxu0 0.0
        %2378 = vmatprep.subr.mxu0 0.0
        %2379 = vmatpush1.msra.mxu0 0.0
        %2380 = vmatprep.subr.mxu0 0.0
        %2381 = vmatpush1.msra.mxu0 0.0
        %2382 = vmatprep.subr.mxu0 0.0
        %2383 = vmatpush1.msra.mxu0 0.0
        %2384 = vmatprep.subr.mxu0 0.0
        %2385 = vmatpush1.msra.mxu0 0.0
        %2386 = vmatprep.subr.mxu0 0.0
        %2387 = vmatpush1.msra.mxu0 0.0
        %2388 = vmatprep.subr.mxu0 0.0
        %2389 = vmatpush1.msra.mxu0 0.0
        %2390 = vmatprep.subr.mxu0 0.0
        %2391 = vmatpush1.msra.mxu0 0.0
        %2392 = vmatprep.subr.mxu0 0.0
        %2393 = vmatpush1.msra.mxu0 0.0
        %2394 = vmatprep.subr.mxu0 0.0
        %2395 = vmatpush1.msra.mxu0 0.0
        %2396 = vmatprep.subr.mxu0 0.0
        %2397 = vmatpush1.msra.mxu0 0.0
        %2398 = vmatprep.subr.mxu0 0.0
        %2399 = vmatpush1.msra.mxu0 0.0
        %2400 = vmatprep.subr.mxu0 0.0
        %2401 = vmatpush1.msra.mxu0 0.0
        %2402 = vmatprep.subr.mxu0 0.0
        %2403 = vmatpush1.msra.mxu0 0.0
        %2404 = vmatprep.subr.mxu0 0.0
        %2405 = vmatpush1.msra.mxu0 0.0
        %2406 = vmatprep.subr.mxu0 0.0
        %2407 = vmatpush1.msra.mxu0 0.0
        %2408 = vmatprep.mubr.f32.mxu0 0.0
        %2409 = vmatmul.mubr.f32.gmra.mrb[0].mxu0 %v2342
        %v2410 = vpop.f32.mrb[0].mxu0
        %v2411 = vadd.f32 %v2338, %v2410
        %v2412 = vpop.f32.mrb[0].mxu0
        %2413 = vdwg.mxu0
        %v2414 = vld [vmem:[%s14] sm:$0x1]
        %v2416 = vlaneseq
        %v2417 = vshrl.u32 %v2416, 7
        %v2418 = vsub.s32 0, %v2417
        %v2419 = vrot.slane %v2414, %v2418
        %v2421 = vadd.f32 %v2411, %v2419
        %v2422 = vmax.f32 %v2421, 0.0
        %v2423 = vld [vmem:[%s15] sm:$0xff]
        %v2424 = vld [vmem:[%s15 + $0x8] sm:$0xff]
        %v2425 = vld [vmem:[%s15 + $0x10] sm:$0xff]
        %v2426 = vld [vmem:[%s15 + $0x18] sm:$0xff]
        %v2427 = vld [vmem:[%s15 + $0x20] sm:$0xff]
        %v2428 = vld [vmem:[%s15 + $0x28] sm:$0xff]
        %v2429 = vld [vmem:[%s15 + $0x30] sm:$0xff]
        %v2430 = vld [vmem:[%s15 + $0x38] sm:$0xff]
        %v2431 = vld [vmem:[%s15 + $0x40] sm:$0xff]
        %v2432 = vld [vmem:[%s15 + $0x48] sm:$0xff]
        %v2433 = vld [vmem:[%s15 + $0x50] sm:$0xff]
        %v2434 = vld [vmem:[%s15 + $0x58] sm:$0xff]
        %v2435 = vld [vmem:[%s15 + $0x60] sm:$0xff]
        %v2436 = vld [vmem:[%s15 + $0x68] sm:$0xff]
        %v2437 = vld [vmem:[%s15 + $0x70] sm:$0xff]
        %v2438 = vld [vmem:[%s15 + $0x78] sm:$0xff]
        %v2439 = vld [vmem:[%s16] sm:$0x1]
        %v2441 = vlaneseq
        %v2442 = vshrl.u32 %v2441, 7
        %v2443 = vsub.s32 0, %v2442
        %v2444 = vrot.slane %v2439, %v2443
        %2446 = vmatprep.subr.mxu0 0.0
        %2447 = vmatpush1.msra.mxu0 %v2423
        %2448 = vmatprep.subr.mxu0 0.0
        %2449 = vmatpush1.msra.mxu0 %v2424
        %2450 = vmatprep.subr.mxu0 0.0
        %2451 = vmatpush1.msra.mxu0 %v2425
        %2452 = vmatprep.subr.mxu0 0.0
        %2453 = vmatpush1.msra.mxu0 %v2426
        %2454 = vmatprep.subr.mxu0 0.0
        %2455 = vmatpush1.msra.mxu0 %v2427
        %2456 = vmatprep.subr.mxu0 0.0
        %2457 = vmatpush1.msra.mxu0 %v2428
        %2458 = vmatprep.subr.mxu0 0.0
        %2459 = vmatpush1.msra.mxu0 %v2429
        %2460 = vmatprep.subr.mxu0 0.0
        %2461 = vmatpush1.msra.mxu0 %v2430
        %2462 = vmatprep.subr.mxu0 0.0
        %2463 = vmatpush1.msra.mxu0 %v2431
        %2464 = vmatprep.subr.mxu0 0.0
        %2465 = vmatpush1.msra.mxu0 %v2432
        %2466 = vmatprep.subr.mxu0 0.0
        %2467 = vmatpush1.msra.mxu0 %v2433
        %2468 = vmatprep.subr.mxu0 0.0
        %2469 = vmatpush1.msra.mxu0 %v2434
        %2470 = vmatprep.subr.mxu0 0.0
        %2471 = vmatpush1.msra.mxu0 %v2435
        %2472 = vmatprep.subr.mxu0 0.0
        %2473 = vmatpush1.msra.mxu0 %v2436
        %2474 = vmatprep.subr.mxu0 0.0
        %2475 = vmatpush1.msra.mxu0 %v2437
        %2476 = vmatprep.subr.mxu0 0.0
        %2477 = vmatpush1.msra.mxu0 %v2438
        %2478 = vmatprep.subr.mxu0 0.0
        %2479 = vmatpush1.msra.mxu0 0.0
        %2480 = vmatprep.subr.mxu0 0.0
        %2481 = vmatpush1.msra.mxu0 0.0
        %2482 = vmatprep.subr.mxu0 0.0
        %2483 = vmatpush1.msra.mxu0 0.0
        %2484 = vmatprep.subr.mxu0 0.0
        %2485 = vmatpush1.msra.mxu0 0.0
        %2486 = vmatprep.subr.mxu0 0.0
        %2487 = vmatpush1.msra.mxu0 0.0
        %2488 = vmatprep.subr.mxu0 0.0
        %2489 = vmatpush1.msra.mxu0 0.0
        %2490 = vmatprep.subr.mxu0 0.0
        %2491 = vmatpush1.msra.mxu0 0.0
        %2492 = vmatprep.subr.mxu0 0.0
        %2493 = vmatpush1.msra.mxu0 0.0
        %2494 = vmatprep.subr.mxu0 0.0
        %2495 = vmatpush1.msra.mxu0 0.0
        %2496 = vmatprep.subr.mxu0 0.0
        %2497 = vmatpush1.msra.mxu0 0.0
        %2498 = vmatprep.subr.mxu0 0.0
        %2499 = vmatpush1.msra.mxu0 0.0
        %2500 = vmatprep.subr.mxu0 0.0
        %2501 = vmatpush1.msra.mxu0 0.0
        %2502 = vmatprep.subr.mxu0 0.0
        %2503 = vmatpush1.msra.mxu0 0.0
        %2504 = vmatprep.subr.mxu0 0.0
        %2505 = vmatpush1.msra.mxu0 0.0
        %2506 = vmatprep.subr.mxu0 0.0
        %2507 = vmatpush1.msra.mxu0 0.0
        %2508 = vmatprep.subr.mxu0 0.0
        %2509 = vmatpush1.msra.mxu0 0.0
        %2510 = vmatprep.mubr.f32.mxu0 0.0
        %2511 = vmatmul.mubr.f32.gmra.mrb[0].mxu0 %v2422
        %v2512 = vpop.f32.mrb[0].mxu0
        %v2513 = vadd.f32 %v2444, %v2512
        %v2514 = vpop.f32.mrb[0].mxu0
        %2515 = vdwg.mxu0
        %v2516 = vmax.f32 %v2513, 0.0
        %2517 = vst [vmem:[%s773] sm:$0xff] %v2516
        %s2518 = sand.u32 %s429, 1
        %s2519 = scalar_lea.sflag [#allocation5], %s2518
        %s2520 = sand.u32 %s429, 1
        %s2521 = smul.addr %s2520, 8
        %s2522 = scalar_lea.vmem [#allocation15], %s2521
        // Predicated region
        $region154: #{tpu_custom_call.1} parent=124 // pred_check
          %p2523 = pneg %p439
        $region155: #{tpu_custom_call.1} parent=124 // pred_check_branch
          %2525 = sbr.rel (%p2523) target = $region157
        $region156: #{tpu_custom_call.1} parent=124 // pred_region
          %s2527 = ssub.s32 128, 128
          %2528 = vsyncadd %s2519, %s2527
          %s2529 = smul.addr %s39, 128
          %s2530 = scalar_lea.hbm %s17, %s2529
          %s2532 = sshll.u32 %s2522, 4
          %s2533 = int_to_ptr.vmem [resolvable:$true] %s2532
          %2535 = dma.vmem_to_hbm [thread:$0]  %s2533, 128, %s2530, %s2519
        $region157: #{tpu_custom_call.1} parent=124 // pred_fallthru
          _
      $region125: #{tpu_custom_call.1} parent=5 // pred_fallthru
        _
      %p2536 = scmp.le.s32.totalorder 2, %s34
      // Predicated region
      $region158: #{tpu_custom_call.1} parent=5 // pred_check
        %p2537 = pneg %p2536
      $region159: #{tpu_custom_call.1} parent=5 // pred_check_branch
        %2539 = sbr.rel (%p2537) target = $region161
      $region160: #{tpu_custom_call.1} parent=5 // pred_region
        %s2540 = ssub.s32 %s34, 2
        // Predicated region
        $region162: #{tpu_custom_call.1} parent=160 // pred_check
          %p2541 = pneg %p445
        $region163: #{tpu_custom_call.1} parent=160 // pred_check_branch
          %2543 = sbr.rel (%p2541) target = $region165
        $region164: #{tpu_custom_call.1} parent=160 // pred_region
          %s2544 = sand.u32 %s430, 1
          %s2545 = scalar_lea.sflag [#allocation5], %s2544
          %s2546 = sand.u32 %s430, 1
          %s2547 = smul.addr %s2546, 8
          %s2548 = scalar_lea.vmem [#allocation15], %s2547
          %2549 = dma.done %s2545, 128
        $region165: #{tpu_custom_call.1} parent=160 // pred_fallthru
          _
      $region161: #{tpu_custom_call.1} parent=5 // pred_fallthru
        _
    $region6: #{tpu_custom_call.1} parent=1 // loop_footer
      %s38 = sadd.s32 1, %s34
    $region7: #{tpu_custom_call.1} parent=1 // loop_footer_branch
      %33 = sbr.rel target = $region3
    $region8: #{tpu_custom_call.1} parent=1 // loop_exit
      _
    %2550 = vsyncpa [#allocation4], 1
    %s2551 = scalar_lea.sflag [#allocation4], 1
    %2552 = vsyncpa %s2551, 1
    %2553 = vsyncpa [#allocation8], 1
    %s2554 = scalar_lea.sflag [#allocation8], 1
    %2555 = vsyncpa %s2554, 1
    %2556 = vsyncpa [#allocation11], 1
    %2557 = vsyncpa [#allocation14], 1
    %2558 = vsyncpa [#allocation5], 1
    %s2559 = scalar_lea.sflag [#allocation5], 1
    %2560 = vsyncpa %s2559, 1

</llo_original>
